<compile_context>
chip_gen: v5e
topology: v5e:2x2
jax: 0.10.0
libtpu: 0.0.40
codegen_flags: <defaults>
</compile_context>

<pallas_src>
import numpy as np

import jax
import jax.numpy as jnp
from jax import lax
from jax.experimental import pallas as pl
from jax.experimental.pallas import tpu as pltpu

EPS = 1e-8


# --------------------------------------------------------------------------
# Generation-aware VMEM sizing.
# --------------------------------------------------------------------------
def _vmem_budgets():
    """(tile budget, vmem_limit_bytes); v5e/v6e have 128 MiB, v7x 64 MiB."""
    cap = 64 * 1024 * 1024
    try:
        cap = int(pltpu.get_tpu_info().vmem_capacity_bytes)
    except Exception:
        pass
    tile_budget = int(cap * 0.55)
    vmem_limit = min(int(cap * 0.75), 100 * 1024 * 1024)
    return tile_budget, vmem_limit


# ==========================================================================
# Kernel 1: single-layer bidirectional LSTM fused with the output Linear and
# the per-row gLN partial statistics.
#   input  x : [T, M, Nin]   (time-major, M = flattened batch rows)
#   outputs  : y  [T, M, Nout] = concat(h_fwd, h_bwd) @ W_lin.T + b_lin
#              s1 [M, 1] = sum_{T,Nout} y       (for the fused gLN stats)
#              s2 [M, 1] = sum_{T,Nout} y*y
# Packed weights (gate order i, f, o, g per direction):
#   wx : [Nin, 8H] bf16  (fwd 4H | bwd 4H),   b  : [1, 8H] f32
#   wh : [2H, 8H] bf16   block-diagonal,      wl : [2H, Nout] bf16
#   bl : [1, Nout] f32
# ==========================================================================
def _bilstm_linear_kernel(x_ref, wx_ref, b_ref, wh_ref, wl_ref, bl_ref,
                          out_ref, s1_ref, s2_ref, gx_scr, h_scr):
    T, Mt, n_in = x_ref.shape
    H2, H8 = wh_ref.shape                    # 2H, 8H
    H = H2 // 2
    H3, H4 = 3 * H, 4 * H
    n_out = out_ref.shape[2]

    # ---- hoisted input projection: ONE wide bf16 matmul (both directions) --
    x2 = x_ref[...].reshape(T * Mt, n_in).astype(jnp.bfloat16)
    gx = jnp.dot(x2, wx_ref[...], preferred_element_type=jnp.float32) + b_ref[...]
    gx_scr[...] = gx.astype(jnp.bfloat16).reshape(T, Mt, H8)

    # ---- interleaved fwd/bwd recurrence: one block-diag matmul per step ----
    wh = wh_ref[...]                         # hoisted out of the loop (bf16)
    z0 = jnp.zeros((Mt, H), jnp.float32)

    def cell(g, c):                          # gate order: i | f | o | g
        act = jax.nn.sigmoid(g[:, :H3])      # i, f, o -> one contiguous sigmoid
        gg = jnp.tanh(g[:, H3:])
        i, f, o = act[:, :H], act[:, H:2 * H], act[:, 2 * H:]
        c_new = f * c + i * gg
        return o * jnp.tanh(c_new), c_new

    def step(s, carry):
        hf, hb, cf, cb = carry
        tb = T - 1 - s
        hcat = jnp.concatenate([hf, hb], axis=-1).astype(jnp.bfloat16)
        gh = jnp.dot(hcat, wh, preferred_element_type=jnp.float32)   # (Mt, 8H)
        g_f = gx_scr[s, :, :H4].astype(jnp.float32) + gh[:, :H4]
        g_b = gx_scr[tb, :, H4:].astype(jnp.float32) + gh[:, H4:]
        hf, cf = cell(g_f, cf)
        hb, cb = cell(g_b, cb)
        h_scr[s, :, :H] = hf
        h_scr[tb, :, H:] = hb
        return hf, hb, cf, cb

    lax.fori_loop(0, T, step, (z0, z0, z0, z0), unroll=min(T, 8))

    # ---- fused output Linear: ONE bf16 matmul over the whole tile ----------
    h_all = h_scr[...].reshape(T * Mt, H2).astype(jnp.bfloat16)
    y = jnp.dot(h_all, wl_ref[...], preferred_element_type=jnp.float32) + bl_ref[...]
    y3 = y.reshape(T, Mt, n_out)
    out_ref[...] = y3

    # ---- per-row partial gLN statistics (saves one HBM pass over y) --------
    s1_ref[...] = jnp.sum(jnp.sum(y3, axis=0), axis=-1, keepdims=True)
    s2_ref[...] = jnp.sum(jnp.sum(y3 * y3, axis=0), axis=-1, keepdims=True)


def _pick_tile_m(M, T, n_in, n_out, H, budget):
    """Largest M-tile (multiple of 8 dividing M) fitting the VMEM budget,
    preferring >= 256 rows so the MXU row dimension is filled."""
    # double-buffered f32 in/out tiles + bf16 gx scratch + f32 h scratch
    # + transient f32 gx value from the hoisted projection (rough estimate).
    per_row = 4 * T * (2 * n_in + 2 * n_out + 8 * H + 2 * H) + 2 * T * 8 * H
    cands = [t for t in range(8, M + 1, 8) if M % t == 0]
    if not cands:
        return M
    fit = [t for t in cands if t * per_row <= budget] or [cands[0]]
    # TODO(synk): if even the smallest M-tile overflows VMEM (very long T),
    # chunk the time axis instead of silently exceeding the budget.
    big = [t for t in fit if t >= 256]
    return min(big) if big else max(fit)


def bilstm_linear(x_tmn, p):
    """x_tmn: [T, M, Nin] -> (y [T, M, Nout], s1 [M, 1], s2 [M, 1])."""
    T, M, n_in = x_tmn.shape
    H = p["wh"].shape[0] // 2
    n_out = p["bl"].shape[1]
    budget, vmem_limit = _vmem_budgets()
    tile_m = _pick_tile_m(M, T, n_in, n_out, H, budget)
    grid = (M // tile_m,)

    return pl.pallas_call(
        _bilstm_linear_kernel,
        grid=grid,
        out_shape=(jax.ShapeDtypeStruct((T, M, n_out), jnp.float32),
                   jax.ShapeDtypeStruct((M, 1), jnp.float32),
                   jax.ShapeDtypeStruct((M, 1), jnp.float32)),
        in_specs=[
            pl.BlockSpec((T, tile_m, n_in), lambda m: (0, m, 0)),
            pl.BlockSpec(p["wx"].shape, lambda m: (0, 0)),    # resident weights
            pl.BlockSpec(p["b"].shape, lambda m: (0, 0)),
            pl.BlockSpec(p["wh"].shape, lambda m: (0, 0)),
            pl.BlockSpec(p["wl"].shape, lambda m: (0, 0)),
            pl.BlockSpec(p["bl"].shape, lambda m: (0, 0)),
        ],
        out_specs=(
            pl.BlockSpec((T, tile_m, n_out), lambda m: (0, m, 0)),
            pl.BlockSpec((tile_m, 1), lambda m: (m, 0)),
            pl.BlockSpec((tile_m, 1), lambda m: (m, 0)),
        ),
        scratch_shapes=[
            pltpu.VMEM((T, tile_m, 8 * H), jnp.bfloat16),   # gx, both dirs
            pltpu.VMEM((T, tile_m, 2 * H), jnp.float32),    # h  [fwd | bwd]
        ],
        compiler_params=pltpu.CompilerParams(
            dimension_semantics=("parallel",),
            vmem_limit_bytes=vmem_limit,
        ),
    )(x_tmn, p["wx"], p["b"], p["wh"], p["wl"], p["bl"])


# ==========================================================================
# Kernel 2: global layer norm (asteroid gLN) fused with the residual add.
# Layout: [T1, B, T2, N] flattened to a lane-dense [T1, B, T2*N] slab;
# stats come from the BiLSTM kernel's per-row partial sums; gamma/beta/
# mean/rstd folded into per-(batch, lane) scale/shift so the kernel is one
# fused multiply-add, tiled over T1 and written in place over the residual.
# ==========================================================================
def _gln_residual_kernel(res_ref, x_ref, scale_ref, shift_ref, out_ref):
    out_ref[...] = res_ref[...] + x_ref[...] * scale_ref[...] + shift_ref[...]


def _pick_gln_tile(T1, B, C, budget):
    per_step = 4 * B * C * 6          # res + x + out, double-buffered, f32
    t = max(1, min(T1, budget // max(per_step, 1)))
    while T1 % t:
        t -= 1
    return t


def gln_residual(res, xnew, s1_rows, s2_rows, gamma, beta):
    """res, xnew: [T1, B, T2, N]; gLN over (T1, T2, N) per batch, + residual.
    s1_rows/s2_rows: [B*T2, 1] per-row sums of xnew (and xnew^2) over (T1, N)
    produced by the BiLSTM kernel epilogue (no extra HBM pass over xnew)."""
    T1, B, T2, N = xnew.shape
    cnt = T1 * T2 * N
    s1 = jnp.sum(s1_rows.reshape(B, T2), axis=1)
    s2 = jnp.sum(s2_rows.reshape(B, T2), axis=1)
    mean = s1 / cnt
    var = jnp.maximum(s2 / cnt - mean * mean, 0.0)   # single-pass, clamped
    rstd = lax.rsqrt(var + EPS)

    # Fold gamma/beta/mean/rstd into per-(batch, lane) scale & shift over the
    # lane-dense flattened T2*N axis.
    scale = jnp.tile((gamma[None, :] * rstd[:, None])[:, None, :], (1, T2, 1))
    shift = jnp.tile((beta[None, :] - gamma[None, :] * (mean * rstd)[:, None])[:, None, :],
                     (1, T2, 1))
    C = T2 * N
    scale = scale.reshape(1, B, C)
    shift = shift.reshape(1, B, C)
    res2 = res.reshape(T1, B, C)      # free, contiguous reshapes
    x2 = xnew.reshape(T1, B, C)

    budget, _ = _vmem_budgets()
    tile_t = _pick_gln_tile(T1, B, C, budget // 4)
    grid = (T1 // tile_t,)

    out = pl.pallas_call(
        _gln_residual_kernel,
        grid=grid,
        out_shape=jax.ShapeDtypeStruct((T1, B, C), jnp.float32),
        in_specs=[
            pl.BlockSpec((tile_t, B, C), lambda t: (t, 0, 0)),
            pl.BlockSpec((tile_t, B, C), lambda t: (t, 0, 0)),
            pl.BlockSpec((1, B, C), lambda t: (0, 0, 0)),
            pl.BlockSpec((1, B, C), lambda t: (0, 0, 0)),
        ],
        out_specs=pl.BlockSpec((tile_t, B, C), lambda t: (t, 0, 0)),
        input_output_aliases={0: 0},   # residual updated in place (donated;
                                       # res is an internal intermediate here)
        compiler_params=pltpu.CompilerParams(
            dimension_semantics=("parallel",)),
    )(res2, x2, scale, shift)
    return out.reshape(T1, B, T2, N)


# ==========================================================================
# DPRNNBlock forward (channel-last / time-major glue, 3 HBM transposes).
# ==========================================================================
def dprnn_block(x, params):
    """x: [B, N, K, L] -> [B, N, K, L] (matches DPRNNBlock.forward)."""
    B, N, K, L = x.shape

    y = jnp.transpose(x, (2, 0, 3, 1))                  # [K, B, L, N]

    # ---- intra path: BiLSTM along the chunk (K) axis, rows = B*L ----------
    yi, s1, s2 = bilstm_linear(y.reshape(K, B * L, N), params["intra"])
    out1 = gln_residual(y, yi.reshape(K, B, L, N), s1, s2,
                        params["intra"]["gamma"], params["intra"]["beta"])

    # ---- inter path: BiLSTM along the num_chunks (L) axis, rows = B*K -----
    # TODO(synk): fold this K<->L swap into the gln/bilstm index_maps (needs
    # an in-kernel sublane transpose) to remove one HBM round trip.
    z = jnp.transpose(out1, (2, 1, 0, 3))               # [L, B, K, N]
    yj, t1, t2 = bilstm_linear(z.reshape(L, B * K, N), params["inter"])
    out2 = gln_residual(z, yj.reshape(L, B, K, N), t1, t2,
                        params["inter"]["gamma"], params["inter"]["beta"])

    return jnp.transpose(out2, (1, 3, 2, 0))            # [B, N, K, L]


# ==========================================================================
# Parameter init (PyTorch layout, gate order i,f,g,o) + packing for kernels.
# ==========================================================================
def init_params(key, in_chan, hid_size):
    N, H = in_chan, hid_size

    def one_path(k):
        ks = iter(jax.random.split(k, 12))

        def uni(shape, bound):
            return jax.random.uniform(next(ks), shape, jnp.float32, -bound, bound)

        kb = 1.0 / np.sqrt(H)
        d = {}
        for suf in ("f", "b"):
            d["w_ih_" + suf] = uni((4 * H, N), kb)     # torch weight_ih: [4H, Nin]
            d["w_hh_" + suf] = uni((4 * H, H), kb)     # torch weight_hh: [4H, H]
            d["b_ih_" + suf] = uni((4 * H,), kb)
            d["b_hh_" + suf] = uni((4 * H,), kb)
        kl = 1.0 / np.sqrt(2 * H)
        d["w_lin"] = uni((N, 2 * H), kl)               # torch Linear weight: [N, 2H]
        d["b_lin"] = uni((N,), kl)
        d["gamma"] = jnp.ones((N,), jnp.float32)       # gLN init
        d["beta"] = jnp.zeros((N,), jnp.float32)
        return d

    k_intra, k_inter = jax.random.split(key)
    return {"intra": one_path(k_intra), "inter": one_path(k_inter)}


def _reorder_gates(w):
    """Rows in torch gate order (i, f, g, o) -> kernel order (i, f, o, g)."""
    i, f, g, o = jnp.split(w, 4, axis=0)
    return jnp.concatenate([i, f, o, g], axis=0)


def pack_block_params(raw):
    H = raw["w_hh_f"].shape[1]

    def one_dir(suf):
        wx = _reorder_gates(raw["w_ih_" + suf]).T                     # [Nin, 4H]
        wh = _reorder_gates(raw["w_hh_" + suf]).T                     # [H, 4H]
        b = _reorder_gates(raw["b_ih_" + suf] + raw["b_hh_" + suf])   # [4H]
        return wx, wh, b

    wx_f, wh_f, b_f = one_dir("f")
    wx_b, wh_b, b_b = one_dir("b")

    # Both directions packed into single wide MXU operands (fwd | bwd cols).
    wx = jnp.concatenate([wx_f, wx_b], axis=1)                        # [Nin, 8H]
    b = jnp.concatenate([b_f, b_b]).reshape(1, 8 * H)                 # [1, 8H]
    # Block-diagonal recurrent weight: one matmul drives both directions.
    wh = jnp.zeros((2 * H, 8 * H), jnp.float32)
    wh = wh.at[:H, :4 * H].set(wh_f).at[H:, 4 * H:].set(wh_b)         # [2H, 8H]
    wl = raw["w_lin"].T                                               # [2H, Nout]

    return {
        "wx": wx.astype(jnp.bfloat16),     # bf16 MXU operands (native path)
        "b": b,                            # f32 (added to the f32 accumulator)
        "wh": wh.astype(jnp.bfloat16),
        "wl": wl.astype(jnp.bfloat16),
        "bl": raw["b_lin"].reshape(1, -1),
        "gamma": raw["gamma"],
        "beta": raw["beta"],
    }


def pack_params(raw):
    return {"intra": pack_block_params(raw["intra"]),
            "inter": pack_block_params(raw["inter"])}


# ==========================================================================
# Pure-JAX f32 reference (mirrors the PyTorch module; for correctness check).
# ==========================================================================
def _lstm_ref(x_btn, w_ih, w_hh, b_ih, b_hh, reverse):
    M = x_btn.shape[0]
    H = w_hh.shape[1]
    wx, wh, b = w_ih.T, w_hh.T, b_ih + b_hh
    xs = jnp.swapaxes(x_btn, 0, 1)
    if reverse:
        xs = xs[::-1]

    def step(carry, x_t):
        h, c = carry
        g = x_t @ wx + h @ wh + b
        i = jax.nn.sigmoid(g[:, :H])
        f = jax.nn.sigmoid(g[:, H:2 * H])
        gg = jnp.tanh(g[:, 2 * H:3 * H])
        o = jax.nn.sigmoid(g[:, 3 * H:])
        c = f * c + i * gg
        h = o * jnp.tanh(c)
        return (h, c), h

    _, hs = lax.scan(step, (jnp.zeros((M, H)), jnp.zeros((M, H))), xs)
    if reverse:
        hs = hs[::-1]
    return jnp.swapaxes(hs, 0, 1)


def _bilstm_linear_ref(x_btn, raw):
    hf = _lstm_ref(x_btn, raw["w_ih_f"], raw["w_hh_f"],
                   raw["b_ih_f"], raw["b_hh_f"], reverse=False)
    hb = _lstm_ref(x_btn, raw["w_ih_b"], raw["w_hh_b"],
                   raw["b_ih_b"], raw["b_hh_b"], reverse=True)
    h = jnp.concatenate([hf, hb], axis=-1)
    return h @ raw["w_lin"].T + raw["b_lin"]


def _gln_ref(x, gamma, beta):
    mean = jnp.mean(x, axis=(1, 2, 3), keepdims=True)
    var = jnp.mean((x - mean) ** 2, axis=(1, 2, 3), keepdims=True)
    normed = (x - mean) / jnp.sqrt(var + EPS)
    return gamma.reshape(1, -1, 1, 1) * normed + beta.reshape(1, -1, 1, 1)


def dprnn_block_ref(x, raw):
    B, N, K, L = x.shape
    out = x
    xi = jnp.transpose(x, (0, 3, 2, 1)).reshape(B * L, K, N)
    yi = _bilstm_linear_ref(xi, raw["intra"])
    yi = jnp.transpose(yi.reshape(B, L, K, N), (0, 3, 2, 1))
    out = out + _gln_ref(yi, raw["intra"]["gamma"], raw["intra"]["beta"])
    xj = jnp.transpose(out, (0, 2, 3, 1)).reshape(B * K, L, N)
    yj = _bilstm_linear_ref(xj, raw["inter"])
    yj = jnp.transpose(yj.reshape(B, K, L, N), (0, 3, 1, 2))
    return out + _gln_ref(yj, raw["inter"]["gamma"], raw["inter"]["beta"])


# ==========================================================================
if __name__ == "__main__":
    # NOTE: nn.LSTM.flatten_parameters() and dropout (=0, single layer) are no-ops.
    B, N, K, L = 2, 16, 8, 8        # [batch, feats, chunk_size, num_chunks]
    H = 32                          # hid_size

    key = jax.random.PRNGKey(0)
    kx, kp = jax.random.split(key)
    x = jax.random.normal(kx, (B, N, K, L), jnp.float32)
    raw_params = init_params(kp, N, H)
    packed_params = pack_params(raw_params)

    y = jax.jit(dprnn_block)(x, packed_params)
    y = jax.block_until_ready(y)

    # Correctness vs the f32 pure-JAX reference.  The kernel feeds the MXU
    # bf16 operands (f32 accumulation, f32 cell/hidden state), so allow
    # bf16-level error; gross packing/gate-order bugs would be O(1) off.
    y_ref = jax.jit(dprnn_block_ref)(x, raw_params)
    y_np, y_ref_np = np.asarray(y), np.asarray(y_ref)
    np.testing.assert_allclose(y_np, y_ref_np, rtol=8e-2, atol=8e-2)
    assert float(np.mean(np.abs(y_np - y_ref_np))) < 2e-2
    assert y.shape == (B, N, K, L) and y.dtype == jnp.float32
    print("KERNEL_OK")
</pallas_src>

<mosaic_0001>
module attributes {stable_mosaic.version = 11 : i64} {
  func.func @_bilstm_linear_kernel(%arg0: i32, %arg1: memref<8x16x16xf32, #tpu.memory_space<vmem>>, %arg2: memref<16x256xbf16, #tpu.memory_space<vmem>>, %arg3: memref<1x256xf32, #tpu.memory_space<vmem>>, %arg4: memref<64x256xbf16, #tpu.memory_space<vmem>>, %arg5: memref<64x16xbf16, #tpu.memory_space<vmem>>, %arg6: memref<1x16xf32, #tpu.memory_space<vmem>>, %arg7: memref<8x16x16xf32, #tpu.memory_space<vmem>>, %arg8: memref<16x1xf32, #tpu.memory_space<vmem>>, %arg9: memref<16x1xf32, #tpu.memory_space<vmem>>, %arg10: memref<8x16x256xbf16, #tpu.memory_space<vmem>>, %arg11: memref<8x16x64xf32, #tpu.memory_space<vmem>>) attributes {dimension_semantics = [#tpu.dimension_semantics<parallel>], iteration_bounds = array<i64: 1>, scalar_prefetch = 0 : i64, scratch_operands = 2 : i64, tpu.core_type = #tpu.core_type<tc>, window_params = [{transform_indices = @transform_0, window_bounds = array<i64: 8, 16, 16>}, {pipeline_mode = #tpu.pipeline_mode<synchronous>, transform_indices = @transform_1, window_bounds = array<i64: 16, 256>}, {pipeline_mode = #tpu.pipeline_mode<synchronous>, transform_indices = @transform_2, window_bounds = array<i64: 1, 256>}, {pipeline_mode = #tpu.pipeline_mode<synchronous>, transform_indices = @transform_3, window_bounds = array<i64: 64, 256>}, {pipeline_mode = #tpu.pipeline_mode<synchronous>, transform_indices = @transform_4, window_bounds = array<i64: 64, 16>}, {pipeline_mode = #tpu.pipeline_mode<synchronous>, transform_indices = @transform_5, window_bounds = array<i64: 1, 16>}, {transform_indices = @transform_6, window_bounds = array<i64: 8, 16, 16>}, {transform_indices = @transform_7, window_bounds = array<i64: 16, 1>}, {transform_indices = @transform_8, window_bounds = array<i64: 16, 1>}]} {
    %c0 = arith.constant 0 : index
    %c0_0 = arith.constant 0 : index
    %c0_1 = arith.constant 0 : index
    %0 = vector.load %arg1[%c0, %c0_0, %c0_1] : memref<8x16x16xf32, #tpu.memory_space<vmem>>, vector<8x16x16xf32>
    %1 = vector.shape_cast %0 : vector<8x16x16xf32> to vector<128x16xf32>
    %2 = arith.truncf %1 : vector<128x16xf32> to vector<128x16xbf16>
    %c0_2 = arith.constant 0 : index
    %c0_3 = arith.constant 0 : index
    %3 = vector.load %arg2[%c0_2, %c0_3] : memref<16x256xbf16, #tpu.memory_space<vmem>>, vector<16x256xbf16>
    %cst = arith.constant dense<0.000000e+00> : vector<128x256xf32>
    %4 = tpu.matmul %2, %3, %cst {dimension_numbers = #tpu.dot_dimension_numbers<[1], [0], [0], [1], [0, 0, 1, 1], [], []>} : vector<128x16xbf16>, vector<16x256xbf16>, vector<128x256xf32> -> vector<128x256xf32>
    %c0_4 = arith.constant 0 : index
    %c0_5 = arith.constant 0 : index
    %5 = vector.load %arg3[%c0_4, %c0_5] : memref<1x256xf32, #tpu.memory_space<vmem>>, vector<1x256xf32>
    %6 = vector.broadcast %5 : vector<1x256xf32> to vector<128x256xf32>
    %7 = arith.addf %4, %6 : vector<128x256xf32>
    %8 = arith.truncf %7 : vector<128x256xf32> to vector<128x256xbf16>
    %9 = vector.shape_cast %8 : vector<128x256xbf16> to vector<8x16x256xbf16>
    %c0_6 = arith.constant 0 : index
    %c0_7 = arith.constant 0 : index
    %c0_8 = arith.constant 0 : index
    %10 = vector.load %arg10[%c0_6, %c0_7, %c0_8] : memref<8x16x256xbf16, #tpu.memory_space<vmem>>, vector<8x16x256xbf16>
    tpu.vector_store %arg10[%c0_6, %c0_7, %c0_8], %9 {strides = array<i32>} : memref<8x16x256xbf16, #tpu.memory_space<vmem>>, vector<8x16x256xbf16>,
    %c0_9 = arith.constant 0 : index
    %c0_10 = arith.constant 0 : index
    %11 = vector.load %arg4[%c0_9, %c0_10] : memref<64x256xbf16, #tpu.memory_space<vmem>>, vector<64x256xbf16>
    %cst_11 = arith.constant 0.000000e+00 : f32
    %12 = vector.broadcast %cst_11 : f32 to vector<16x32xf32>
    %c0_i32 = arith.constant 0 : i32
    %c7_i32 = arith.constant 7 : i32
    %13 = arith.subi %c7_i32, %c0_i32 : i32
    %14 = tpu.concatenate %12, %12 in 1 : vector<16x32xf32>, vector<16x32xf32> -> vector<16x64xf32>
    %15 = arith.truncf %14 : vector<16x64xf32> to vector<16x64xbf16>
    %cst_12 = arith.constant dense<0.000000e+00> : vector<16x256xf32>
    %16 = tpu.matmul %15, %11, %cst_12 {dimension_numbers = #tpu.dot_dimension_numbers<[1], [0], [0], [1], [0, 0, 1, 1], [], []>} : vector<16x64xbf16>, vector<64x256xbf16>, vector<16x256xf32> -> vector<16x256xf32>
    %17 = arith.index_cast %c0_i32 : i32 to index
    %c0_13 = arith.constant 0 : index
    %c0_14 = arith.constant 0 : index
    %18 = vector.load %arg10[%17, %c0_13, %c0_14] : memref<8x16x256xbf16, #tpu.memory_space<vmem>>, vector<1x16x128xbf16>
    %19 = vector.shape_cast %18 : vector<1x16x128xbf16> to vector<16x128xbf16>
    %20 = arith.extf %19 : vector<16x128xbf16> to vector<16x128xf32>
    %21 = vector.extract_strided_slice %16 {offsets = [0, 0], sizes = [16, 128], strides = [1, 1]} : vector<16x256xf32> to vector<16x128xf32>
    %22 = arith.addf %20, %21 : vector<16x128xf32>
    %23 = arith.index_cast %13 : i32 to index
    %c0_15 = arith.constant 0 : index
    %c128 = arith.constant 128 : index
    %24 = vector.load %arg10[%23, %c0_15, %c128] : memref<8x16x256xbf16, #tpu.memory_space<vmem>>, vector<1x16x128xbf16>
    %25 = vector.shape_cast %24 : vector<1x16x128xbf16> to vector<16x128xbf16>
    %26 = arith.extf %25 : vector<16x128xbf16> to vector<16x128xf32>
    %27 = vector.extract_strided_slice %16 {offsets = [0, 128], sizes = [16, 128], strides = [1, 1]} : vector<16x256xf32> to vector<16x128xf32>
    %28 = arith.addf %26, %27 : vector<16x128xf32>
    %29 = vector.extract_strided_slice %22 {offsets = [0, 0], sizes = [16, 96], strides = [1, 1]} : vector<16x128xf32> to vector<16x96xf32>
    %30 = arith.negf %29 : vector<16x96xf32>
    %31 = math.exp %30 : vector<16x96xf32>
    %cst_16 = arith.constant 1.000000e+00 : f32
    %32 = vector.broadcast %cst_16 : f32 to vector<16x96xf32>
    %33 = arith.addf %32, %31 : vector<16x96xf32>
    %34 = arith.divf %32, %33 : vector<16x96xf32>
    %35 = vector.extract_strided_slice %22 {offsets = [0, 96], sizes = [16, 32], strides = [1, 1]} : vector<16x128xf32> to vector<16x32xf32>
    %36 = math.tanh %35 : vector<16x32xf32>
    %37 = vector.extract_strided_slice %34 {offsets = [0, 0], sizes = [16, 32], strides = [1, 1]} : vector<16x96xf32> to vector<16x32xf32>
    %38 = vector.extract_strided_slice %34 {offsets = [0, 32], sizes = [16, 32], strides = [1, 1]} : vector<16x96xf32> to vector<16x32xf32>
    %39 = vector.extract_strided_slice %34 {offsets = [0, 64], sizes = [16, 32], strides = [1, 1]} : vector<16x96xf32> to vector<16x32xf32>
    %40 = arith.mulf %38, %12 : vector<16x32xf32>
    %41 = arith.mulf %37, %36 : vector<16x32xf32>
    %42 = arith.addf %40, %41 : vector<16x32xf32>
    %43 = math.tanh %42 : vector<16x32xf32>
    %44 = arith.mulf %39, %43 : vector<16x32xf32>
    %45 = vector.extract_strided_slice %28 {offsets = [0, 0], sizes = [16, 96], strides = [1, 1]} : vector<16x128xf32> to vector<16x96xf32>
    %46 = arith.negf %45 : vector<16x96xf32>
    %47 = math.exp %46 : vector<16x96xf32>
    %cst_17 = arith.constant 1.000000e+00 : f32
    %48 = vector.broadcast %cst_17 : f32 to vector<16x96xf32>
    %49 = arith.addf %48, %47 : vector<16x96xf32>
    %50 = arith.divf %48, %49 : vector<16x96xf32>
    %51 = vector.extract_strided_slice %28 {offsets = [0, 96], sizes = [16, 32], strides = [1, 1]} : vector<16x128xf32> to vector<16x32xf32>
    %52 = math.tanh %51 : vector<16x32xf32>
    %53 = vector.extract_strided_slice %50 {offsets = [0, 0], sizes = [16, 32], strides = [1, 1]} : vector<16x96xf32> to vector<16x32xf32>
    %54 = vector.extract_strided_slice %50 {offsets = [0, 32], sizes = [16, 32], strides = [1, 1]} : vector<16x96xf32> to vector<16x32xf32>
    %55 = vector.extract_strided_slice %50 {offsets = [0, 64], sizes = [16, 32], strides = [1, 1]} : vector<16x96xf32> to vector<16x32xf32>
    %56 = arith.mulf %54, %12 : vector<16x32xf32>
    %57 = arith.mulf %53, %52 : vector<16x32xf32>
    %58 = arith.addf %56, %57 : vector<16x32xf32>
    %59 = math.tanh %58 : vector<16x32xf32>
    %60 = arith.mulf %55, %59 : vector<16x32xf32>
    %61 = arith.index_cast %c0_i32 : i32 to index
    %c0_18 = arith.constant 0 : index
    %c0_19 = arith.constant 0 : index
    %62 = vector.load %arg11[%61, %c0_18, %c0_19] : memref<8x16x64xf32, #tpu.memory_space<vmem>>, vector<1x16x32xf32>
    %63 = vector.shape_cast %62 : vector<1x16x32xf32> to vector<16x32xf32>
    %64 = vector.shape_cast %44 : vector<16x32xf32> to vector<1x16x32xf32>
    tpu.vector_store %arg11[%61, %c0_18, %c0_19], %64 {strides = array<i32>} : memref<8x16x64xf32, #tpu.memory_space<vmem>>, vector<1x16x32xf32>,
    %65 = arith.index_cast %13 : i32 to index
    %c0_20 = arith.constant 0 : index
    %c32 = arith.constant 32 : index
    %66 = vector.load %arg11[%65, %c0_20, %c32] : memref<8x16x64xf32, #tpu.memory_space<vmem>>, vector<1x16x32xf32>
    %67 = vector.shape_cast %66 : vector<1x16x32xf32> to vector<16x32xf32>
    %68 = vector.shape_cast %60 : vector<16x32xf32> to vector<1x16x32xf32>
    tpu.vector_store %arg11[%65, %c0_20, %c32], %68 {strides = array<i32>} : memref<8x16x64xf32, #tpu.memory_space<vmem>>, vector<1x16x32xf32>,
    %c1_i32 = arith.constant 1 : i32
    %c7_i32_21 = arith.constant 7 : i32
    %69 = arith.subi %c7_i32_21, %c1_i32 : i32
    %70 = tpu.concatenate %44, %60 in 1 : vector<16x32xf32>, vector<16x32xf32> -> vector<16x64xf32>
    %71 = arith.truncf %70 : vector<16x64xf32> to vector<16x64xbf16>
    %cst_22 = arith.constant dense<0.000000e+00> : vector<16x256xf32>
    %72 = tpu.matmul %71, %11, %cst_22 {dimension_numbers = #tpu.dot_dimension_numbers<[1], [0], [0], [1], [0, 0, 1, 1], [], []>} : vector<16x64xbf16>, vector<64x256xbf16>, vector<16x256xf32> -> vector<16x256xf32>
    %73 = arith.index_cast %c1_i32 : i32 to index
    %c0_23 = arith.constant 0 : index
    %c0_24 = arith.constant 0 : index
    %74 = vector.load %arg10[%73, %c0_23, %c0_24] : memref<8x16x256xbf16, #tpu.memory_space<vmem>>, vector<1x16x128xbf16>
    %75 = vector.shape_cast %74 : vector<1x16x128xbf16> to vector<16x128xbf16>
    %76 = arith.extf %75 : vector<16x128xbf16> to vector<16x128xf32>
    %77 = vector.extract_strided_slice %72 {offsets = [0, 0], sizes = [16, 128], strides = [1, 1]} : vector<16x256xf32> to vector<16x128xf32>
    %78 = arith.addf %76, %77 : vector<16x128xf32>
    %79 = arith.index_cast %69 : i32 to index
    %c0_25 = arith.constant 0 : index
    %c128_26 = arith.constant 128 : index
    %80 = vector.load %arg10[%79, %c0_25, %c128_26] : memref<8x16x256xbf16, #tpu.memory_space<vmem>>, vector<1x16x128xbf16>
    %81 = vector.shape_cast %80 : vector<1x16x128xbf16> to vector<16x128xbf16>
    %82 = arith.extf %81 : vector<16x128xbf16> to vector<16x128xf32>
    %83 = vector.extract_strided_slice %72 {offsets = [0, 128], sizes = [16, 128], strides = [1, 1]} : vector<16x256xf32> to vector<16x128xf32>
    %84 = arith.addf %82, %83 : vector<16x128xf32>
    %85 = vector.extract_strided_slice %78 {offsets = [0, 0], sizes = [16, 96], strides = [1, 1]} : vector<16x128xf32> to vector<16x96xf32>
    %86 = arith.negf %85 : vector<16x96xf32>
    %87 = math.exp %86 : vector<16x96xf32>
    %cst_27 = arith.constant 1.000000e+00 : f32
    %88 = vector.broadcast %cst_27 : f32 to vector<16x96xf32>
    %89 = arith.addf %88, %87 : vector<16x96xf32>
    %90 = arith.divf %88, %89 : vector<16x96xf32>
    %91 = vector.extract_strided_slice %78 {offsets = [0, 96], sizes = [16, 32], strides = [1, 1]} : vector<16x128xf32> to vector<16x32xf32>
    %92 = math.tanh %91 : vector<16x32xf32>
    %93 = vector.extract_strided_slice %90 {offsets = [0, 0], sizes = [16, 32], strides = [1, 1]} : vector<16x96xf32> to vector<16x32xf32>
    %94 = vector.extract_strided_slice %90 {offsets = [0, 32], sizes = [16, 32], strides = [1, 1]} : vector<16x96xf32> to vector<16x32xf32>
    %95 = vector.extract_strided_slice %90 {offsets = [0, 64], sizes = [16, 32], strides = [1, 1]} : vector<16x96xf32> to vector<16x32xf32>
    %96 = arith.mulf %94, %42 : vector<16x32xf32>
    %97 = arith.mulf %93, %92 : vector<16x32xf32>
    %98 = arith.addf %96, %97 : vector<16x32xf32>
    %99 = math.tanh %98 : vector<16x32xf32>
    %100 = arith.mulf %95, %99 : vector<16x32xf32>
    %101 = vector.extract_strided_slice %84 {offsets = [0, 0], sizes = [16, 96], strides = [1, 1]} : vector<16x128xf32> to vector<16x96xf32>
    %102 = arith.negf %101 : vector<16x96xf32>
    %103 = math.exp %102 : vector<16x96xf32>
    %cst_28 = arith.constant 1.000000e+00 : f32
    %104 = vector.broadcast %cst_28 : f32 to vector<16x96xf32>
    %105 = arith.addf %104, %103 : vector<16x96xf32>
    %106 = arith.divf %104, %105 : vector<16x96xf32>
    %107 = vector.extract_strided_slice %84 {offsets = [0, 96], sizes = [16, 32], strides = [1, 1]} : vector<16x128xf32> to vector<16x32xf32>
    %108 = math.tanh %107 : vector<16x32xf32>
    %109 = vector.extract_strided_slice %106 {offsets = [0, 0], sizes = [16, 32], strides = [1, 1]} : vector<16x96xf32> to vector<16x32xf32>
    %110 = vector.extract_strided_slice %106 {offsets = [0, 32], sizes = [16, 32], strides = [1, 1]} : vector<16x96xf32> to vector<16x32xf32>
    %111 = vector.extract_strided_slice %106 {offsets = [0, 64], sizes = [16, 32], strides = [1, 1]} : vector<16x96xf32> to vector<16x32xf32>
    %112 = arith.mulf %110, %58 : vector<16x32xf32>
    %113 = arith.mulf %109, %108 : vector<16x32xf32>
    %114 = arith.addf %112, %113 : vector<16x32xf32>
    %115 = math.tanh %114 : vector<16x32xf32>
    %116 = arith.mulf %111, %115 : vector<16x32xf32>
    %117 = arith.index_cast %c1_i32 : i32 to index
    %c0_29 = arith.constant 0 : index
    %c0_30 = arith.constant 0 : index
    %118 = vector.load %arg11[%117, %c0_29, %c0_30] : memref<8x16x64xf32, #tpu.memory_space<vmem>>, vector<1x16x32xf32>
    %119 = vector.shape_cast %118 : vector<1x16x32xf32> to vector<16x32xf32>
    %120 = vector.shape_cast %100 : vector<16x32xf32> to vector<1x16x32xf32>
    tpu.vector_store %arg11[%117, %c0_29, %c0_30], %120 {strides = array<i32>} : memref<8x16x64xf32, #tpu.memory_space<vmem>>, vector<1x16x32xf32>,
    %121 = arith.index_cast %69 : i32 to index
    %c0_31 = arith.constant 0 : index
    %c32_32 = arith.constant 32 : index
    %122 = vector.load %arg11[%121, %c0_31, %c32_32] : memref<8x16x64xf32, #tpu.memory_space<vmem>>, vector<1x16x32xf32>
    %123 = vector.shape_cast %122 : vector<1x16x32xf32> to vector<16x32xf32>
    %124 = vector.shape_cast %116 : vector<16x32xf32> to vector<1x16x32xf32>
    tpu.vector_store %arg11[%121, %c0_31, %c32_32], %124 {strides = array<i32>} : memref<8x16x64xf32, #tpu.memory_space<vmem>>, vector<1x16x32xf32>,
    %c2_i32 = arith.constant 2 : i32
    %c7_i32_33 = arith.constant 7 : i32
    %125 = arith.subi %c7_i32_33, %c2_i32 : i32
    %126 = tpu.concatenate %100, %116 in 1 : vector<16x32xf32>, vector<16x32xf32> -> vector<16x64xf32>
    %127 = arith.truncf %126 : vector<16x64xf32> to vector<16x64xbf16>
    %cst_34 = arith.constant dense<0.000000e+00> : vector<16x256xf32>
    %128 = tpu.matmul %127, %11, %cst_34 {dimension_numbers = #tpu.dot_dimension_numbers<[1], [0], [0], [1], [0, 0, 1, 1], [], []>} : vector<16x64xbf16>, vector<64x256xbf16>, vector<16x256xf32> -> vector<16x256xf32>
    %129 = arith.index_cast %c2_i32 : i32 to index
    %c0_35 = arith.constant 0 : index
    %c0_36 = arith.constant 0 : index
    %130 = vector.load %arg10[%129, %c0_35, %c0_36] : memref<8x16x256xbf16, #tpu.memory_space<vmem>>, vector<1x16x128xbf16>
    %131 = vector.shape_cast %130 : vector<1x16x128xbf16> to vector<16x128xbf16>
    %132 = arith.extf %131 : vector<16x128xbf16> to vector<16x128xf32>
    %133 = vector.extract_strided_slice %128 {offsets = [0, 0], sizes = [16, 128], strides = [1, 1]} : vector<16x256xf32> to vector<16x128xf32>
    %134 = arith.addf %132, %133 : vector<16x128xf32>
    %135 = arith.index_cast %125 : i32 to index
    %c0_37 = arith.constant 0 : index
    %c128_38 = arith.constant 128 : index
    %136 = vector.load %arg10[%135, %c0_37, %c128_38] : memref<8x16x256xbf16, #tpu.memory_space<vmem>>, vector<1x16x128xbf16>
    %137 = vector.shape_cast %136 : vector<1x16x128xbf16> to vector<16x128xbf16>
    %138 = arith.extf %137 : vector<16x128xbf16> to vector<16x128xf32>
    %139 = vector.extract_strided_slice %128 {offsets = [0, 128], sizes = [16, 128], strides = [1, 1]} : vector<16x256xf32> to vector<16x128xf32>
    %140 = arith.addf %138, %139 : vector<16x128xf32>
    %141 = vector.extract_strided_slice %134 {offsets = [0, 0], sizes = [16, 96], strides = [1, 1]} : vector<16x128xf32> to vector<16x96xf32>
    %142 = arith.negf %141 : vector<16x96xf32>
    %143 = math.exp %142 : vector<16x96xf32>
    %cst_39 = arith.constant 1.000000e+00 : f32
    %144 = vector.broadcast %cst_39 : f32 to vector<16x96xf32>
    %145 = arith.addf %144, %143 : vector<16x96xf32>
    %146 = arith.divf %144, %145 : vector<16x96xf32>
    %147 = vector.extract_strided_slice %134 {offsets = [0, 96], sizes = [16, 32], strides = [1, 1]} : vector<16x128xf32> to vector<16x32xf32>
    %148 = math.tanh %147 : vector<16x32xf32>
    %149 = vector.extract_strided_slice %146 {offsets = [0, 0], sizes = [16, 32], strides = [1, 1]} : vector<16x96xf32> to vector<16x32xf32>
    %150 = vector.extract_strided_slice %146 {offsets = [0, 32], sizes = [16, 32], strides = [1, 1]} : vector<16x96xf32> to vector<16x32xf32>
    %151 = vector.extract_strided_slice %146 {offsets = [0, 64], sizes = [16, 32], strides = [1, 1]} : vector<16x96xf32> to vector<16x32xf32>
    %152 = arith.mulf %150, %98 : vector<16x32xf32>
    %153 = arith.mulf %149, %148 : vector<16x32xf32>
    %154 = arith.addf %152, %153 : vector<16x32xf32>
    %155 = math.tanh %154 : vector<16x32xf32>
    %156 = arith.mulf %151, %155 : vector<16x32xf32>
    %157 = vector.extract_strided_slice %140 {offsets = [0, 0], sizes = [16, 96], strides = [1, 1]} : vector<16x128xf32> to vector<16x96xf32>
    %158 = arith.negf %157 : vector<16x96xf32>
    %159 = math.exp %158 : vector<16x96xf32>
    %cst_40 = arith.constant 1.000000e+00 : f32
    %160 = vector.broadcast %cst_40 : f32 to vector<16x96xf32>
    %161 = arith.addf %160, %159 : vector<16x96xf32>
    %162 = arith.divf %160, %161 : vector<16x96xf32>
    %163 = vector.extract_strided_slice %140 {offsets = [0, 96], sizes = [16, 32], strides = [1, 1]} : vector<16x128xf32> to vector<16x32xf32>
    %164 = math.tanh %163 : vector<16x32xf32>
    %165 = vector.extract_strided_slice %162 {offsets = [0, 0], sizes = [16, 32], strides = [1, 1]} : vector<16x96xf32> to vector<16x32xf32>
    %166 = vector.extract_strided_slice %162 {offsets = [0, 32], sizes = [16, 32], strides = [1, 1]} : vector<16x96xf32> to vector<16x32xf32>
    %167 = vector.extract_strided_slice %162 {offsets = [0, 64], sizes = [16, 32], strides = [1, 1]} : vector<16x96xf32> to vector<16x32xf32>
    %168 = arith.mulf %166, %114 : vector<16x32xf32>
    %169 = arith.mulf %165, %164 : vector<16x32xf32>
    %170 = arith.addf %168, %169 : vector<16x32xf32>
    %171 = math.tanh %170 : vector<16x32xf32>
    %172 = arith.mulf %167, %171 : vector<16x32xf32>
    %173 = arith.index_cast %c2_i32 : i32 to index
    %c0_41 = arith.constant 0 : index
    %c0_42 = arith.constant 0 : index
    %174 = vector.load %arg11[%173, %c0_41, %c0_42] : memref<8x16x64xf32, #tpu.memory_space<vmem>>, vector<1x16x32xf32>
    %175 = vector.shape_cast %174 : vector<1x16x32xf32> to vector<16x32xf32>
    %176 = vector.shape_cast %156 : vector<16x32xf32> to vector<1x16x32xf32>
    tpu.vector_store %arg11[%173, %c0_41, %c0_42], %176 {strides = array<i32>} : memref<8x16x64xf32, #tpu.memory_space<vmem>>, vector<1x16x32xf32>,
    %177 = arith.index_cast %125 : i32 to index
    %c0_43 = arith.constant 0 : index
    %c32_44 = arith.constant 32 : index
    %178 = vector.load %arg11[%177, %c0_43, %c32_44] : memref<8x16x64xf32, #tpu.memory_space<vmem>>, vector<1x16x32xf32>
    %179 = vector.shape_cast %178 : vector<1x16x32xf32> to vector<16x32xf32>
    %180 = vector.shape_cast %172 : vector<16x32xf32> to vector<1x16x32xf32>
    tpu.vector_store %arg11[%177, %c0_43, %c32_44], %180 {strides = array<i32>} : memref<8x16x64xf32, #tpu.memory_space<vmem>>, vector<1x16x32xf32>,
    %c3_i32 = arith.constant 3 : i32
    %c7_i32_45 = arith.constant 7 : i32
    %181 = arith.subi %c7_i32_45, %c3_i32 : i32
    %182 = tpu.concatenate %156, %172 in 1 : vector<16x32xf32>, vector<16x32xf32> -> vector<16x64xf32>
    %183 = arith.truncf %182 : vector<16x64xf32> to vector<16x64xbf16>
    %cst_46 = arith.constant dense<0.000000e+00> : vector<16x256xf32>
    %184 = tpu.matmul %183, %11, %cst_46 {dimension_numbers = #tpu.dot_dimension_numbers<[1], [0], [0], [1], [0, 0, 1, 1], [], []>} : vector<16x64xbf16>, vector<64x256xbf16>, vector<16x256xf32> -> vector<16x256xf32>
    %185 = arith.index_cast %c3_i32 : i32 to index
    %c0_47 = arith.constant 0 : index
    %c0_48 = arith.constant 0 : index
    %186 = vector.load %arg10[%185, %c0_47, %c0_48] : memref<8x16x256xbf16, #tpu.memory_space<vmem>>, vector<1x16x128xbf16>
    %187 = vector.shape_cast %186 : vector<1x16x128xbf16> to vector<16x128xbf16>
    %188 = arith.extf %187 : vector<16x128xbf16> to vector<16x128xf32>
    %189 = vector.extract_strided_slice %184 {offsets = [0, 0], sizes = [16, 128], strides = [1, 1]} : vector<16x256xf32> to vector<16x128xf32>
    %190 = arith.addf %188, %189 : vector<16x128xf32>
    %191 = arith.index_cast %181 : i32 to index
    %c0_49 = arith.constant 0 : index
    %c128_50 = arith.constant 128 : index
    %192 = vector.load %arg10[%191, %c0_49, %c128_50] : memref<8x16x256xbf16, #tpu.memory_space<vmem>>, vector<1x16x128xbf16>
    %193 = vector.shape_cast %192 : vector<1x16x128xbf16> to vector<16x128xbf16>
    %194 = arith.extf %193 : vector<16x128xbf16> to vector<16x128xf32>
    %195 = vector.extract_strided_slice %184 {offsets = [0, 128], sizes = [16, 128], strides = [1, 1]} : vector<16x256xf32> to vector<16x128xf32>
    %196 = arith.addf %194, %195 : vector<16x128xf32>
    %197 = vector.extract_strided_slice %190 {offsets = [0, 0], sizes = [16, 96], strides = [1, 1]} : vector<16x128xf32> to vector<16x96xf32>
    %198 = arith.negf %197 : vector<16x96xf32>
    %199 = math.exp %198 : vector<16x96xf32>
    %cst_51 = arith.constant 1.000000e+00 : f32
    %200 = vector.broadcast %cst_51 : f32 to vector<16x96xf32>
    %201 = arith.addf %200, %199 : vector<16x96xf32>
    %202 = arith.divf %200, %201 : vector<16x96xf32>
    %203 = vector.extract_strided_slice %190 {offsets = [0, 96], sizes = [16, 32], strides = [1, 1]} : vector<16x128xf32> to vector<16x32xf32>
    %204 = math.tanh %203 : vector<16x32xf32>
    %205 = vector.extract_strided_slice %202 {offsets = [0, 0], sizes = [16, 32], strides = [1, 1]} : vector<16x96xf32> to vector<16x32xf32>
    %206 = vector.extract_strided_slice %202 {offsets = [0, 32], sizes = [16, 32], strides = [1, 1]} : vector<16x96xf32> to vector<16x32xf32>
    %207 = vector.extract_strided_slice %202 {offsets = [0, 64], sizes = [16, 32], strides = [1, 1]} : vector<16x96xf32> to vector<16x32xf32>
    %208 = arith.mulf %206, %154 : vector<16x32xf32>
    %209 = arith.mulf %205, %204 : vector<16x32xf32>
    %210 = arith.addf %208, %209 : vector<16x32xf32>
    %211 = math.tanh %210 : vector<16x32xf32>
    %212 = arith.mulf %207, %211 : vector<16x32xf32>
    %213 = vector.extract_strided_slice %196 {offsets = [0, 0], sizes = [16, 96], strides = [1, 1]} : vector<16x128xf32> to vector<16x96xf32>
    %214 = arith.negf %213 : vector<16x96xf32>
    %215 = math.exp %214 : vector<16x96xf32>
    %cst_52 = arith.constant 1.000000e+00 : f32
    %216 = vector.broadcast %cst_52 : f32 to vector<16x96xf32>
    %217 = arith.addf %216, %215 : vector<16x96xf32>
    %218 = arith.divf %216, %217 : vector<16x96xf32>
    %219 = vector.extract_strided_slice %196 {offsets = [0, 96], sizes = [16, 32], strides = [1, 1]} : vector<16x128xf32> to vector<16x32xf32>
    %220 = math.tanh %219 : vector<16x32xf32>
    %221 = vector.extract_strided_slice %218 {offsets = [0, 0], sizes = [16, 32], strides = [1, 1]} : vector<16x96xf32> to vector<16x32xf32>
    %222 = vector.extract_strided_slice %218 {offsets = [0, 32], sizes = [16, 32], strides = [1, 1]} : vector<16x96xf32> to vector<16x32xf32>
    %223 = vector.extract_strided_slice %218 {offsets = [0, 64], sizes = [16, 32], strides = [1, 1]} : vector<16x96xf32> to vector<16x32xf32>
    %224 = arith.mulf %222, %170 : vector<16x32xf32>
    %225 = arith.mulf %221, %220 : vector<16x32xf32>
    %226 = arith.addf %224, %225 : vector<16x32xf32>
    %227 = math.tanh %226 : vector<16x32xf32>
    %228 = arith.mulf %223, %227 : vector<16x32xf32>
    %229 = arith.index_cast %c3_i32 : i32 to index
    %c0_53 = arith.constant 0 : index
    %c0_54 = arith.constant 0 : index
    %230 = vector.load %arg11[%229, %c0_53, %c0_54] : memref<8x16x64xf32, #tpu.memory_space<vmem>>, vector<1x16x32xf32>
    %231 = vector.shape_cast %230 : vector<1x16x32xf32> to vector<16x32xf32>
    %232 = vector.shape_cast %212 : vector<16x32xf32> to vector<1x16x32xf32>
    tpu.vector_store %arg11[%229, %c0_53, %c0_54], %232 {strides = array<i32>} : memref<8x16x64xf32, #tpu.memory_space<vmem>>, vector<1x16x32xf32>,
    %233 = arith.index_cast %181 : i32 to index
    %c0_55 = arith.constant 0 : index
    %c32_56 = arith.constant 32 : index
    %234 = vector.load %arg11[%233, %c0_55, %c32_56] : memref<8x16x64xf32, #tpu.memory_space<vmem>>, vector<1x16x32xf32>
    %235 = vector.shape_cast %234 : vector<1x16x32xf32> to vector<16x32xf32>
    %236 = vector.shape_cast %228 : vector<16x32xf32> to vector<1x16x32xf32>
    tpu.vector_store %arg11[%233, %c0_55, %c32_56], %236 {strides = array<i32>} : memref<8x16x64xf32, #tpu.memory_space<vmem>>, vector<1x16x32xf32>,
    %c4_i32 = arith.constant 4 : i32
    %c7_i32_57 = arith.constant 7 : i32
    %237 = arith.subi %c7_i32_57, %c4_i32 : i32
    %238 = tpu.concatenate %212, %228 in 1 : vector<16x32xf32>, vector<16x32xf32> -> vector<16x64xf32>
    %239 = arith.truncf %238 : vector<16x64xf32> to vector<16x64xbf16>
    %cst_58 = arith.constant dense<0.000000e+00> : vector<16x256xf32>
    %240 = tpu.matmul %239, %11, %cst_58 {dimension_numbers = #tpu.dot_dimension_numbers<[1], [0], [0], [1], [0, 0, 1, 1], [], []>} : vector<16x64xbf16>, vector<64x256xbf16>, vector<16x256xf32> -> vector<16x256xf32>
    %241 = arith.index_cast %c4_i32 : i32 to index
    %c0_59 = arith.constant 0 : index
    %c0_60 = arith.constant 0 : index
    %242 = vector.load %arg10[%241, %c0_59, %c0_60] : memref<8x16x256xbf16, #tpu.memory_space<vmem>>, vector<1x16x128xbf16>
    %243 = vector.shape_cast %242 : vector<1x16x128xbf16> to vector<16x128xbf16>
    %244 = arith.extf %243 : vector<16x128xbf16> to vector<16x128xf32>
    %245 = vector.extract_strided_slice %240 {offsets = [0, 0], sizes = [16, 128], strides = [1, 1]} : vector<16x256xf32> to vector<16x128xf32>
    %246 = arith.addf %244, %245 : vector<16x128xf32>
    %247 = arith.index_cast %237 : i32 to index
    %c0_61 = arith.constant 0 : index
    %c128_62 = arith.constant 128 : index
    %248 = vector.load %arg10[%247, %c0_61, %c128_62] : memref<8x16x256xbf16, #tpu.memory_space<vmem>>, vector<1x16x128xbf16>
    %249 = vector.shape_cast %248 : vector<1x16x128xbf16> to vector<16x128xbf16>
    %250 = arith.extf %249 : vector<16x128xbf16> to vector<16x128xf32>
    %251 = vector.extract_strided_slice %240 {offsets = [0, 128], sizes = [16, 128], strides = [1, 1]} : vector<16x256xf32> to vector<16x128xf32>
    %252 = arith.addf %250, %251 : vector<16x128xf32>
    %253 = vector.extract_strided_slice %246 {offsets = [0, 0], sizes = [16, 96], strides = [1, 1]} : vector<16x128xf32> to vector<16x96xf32>
    %254 = arith.negf %253 : vector<16x96xf32>
    %255 = math.exp %254 : vector<16x96xf32>
    %cst_63 = arith.constant 1.000000e+00 : f32
    %256 = vector.broadcast %cst_63 : f32 to vector<16x96xf32>
    %257 = arith.addf %256, %255 : vector<16x96xf32>
    %258 = arith.divf %256, %257 : vector<16x96xf32>
    %259 = vector.extract_strided_slice %246 {offsets = [0, 96], sizes = [16, 32], strides = [1, 1]} : vector<16x128xf32> to vector<16x32xf32>
    %260 = math.tanh %259 : vector<16x32xf32>
    %261 = vector.extract_strided_slice %258 {offsets = [0, 0], sizes = [16, 32], strides = [1, 1]} : vector<16x96xf32> to vector<16x32xf32>
    %262 = vector.extract_strided_slice %258 {offsets = [0, 32], sizes = [16, 32], strides = [1, 1]} : vector<16x96xf32> to vector<16x32xf32>
    %263 = vector.extract_strided_slice %258 {offsets = [0, 64], sizes = [16, 32], strides = [1, 1]} : vector<16x96xf32> to vector<16x32xf32>
    %264 = arith.mulf %262, %210 : vector<16x32xf32>
    %265 = arith.mulf %261, %260 : vector<16x32xf32>
    %266 = arith.addf %264, %265 : vector<16x32xf32>
    %267 = math.tanh %266 : vector<16x32xf32>
    %268 = arith.mulf %263, %267 : vector<16x32xf32>
    %269 = vector.extract_strided_slice %252 {offsets = [0, 0], sizes = [16, 96], strides = [1, 1]} : vector<16x128xf32> to vector<16x96xf32>
    %270 = arith.negf %269 : vector<16x96xf32>
    %271 = math.exp %270 : vector<16x96xf32>
    %cst_64 = arith.constant 1.000000e+00 : f32
    %272 = vector.broadcast %cst_64 : f32 to vector<16x96xf32>
    %273 = arith.addf %272, %271 : vector<16x96xf32>
    %274 = arith.divf %272, %273 : vector<16x96xf32>
    %275 = vector.extract_strided_slice %252 {offsets = [0, 96], sizes = [16, 32], strides = [1, 1]} : vector<16x128xf32> to vector<16x32xf32>
    %276 = math.tanh %275 : vector<16x32xf32>
    %277 = vector.extract_strided_slice %274 {offsets = [0, 0], sizes = [16, 32], strides = [1, 1]} : vector<16x96xf32> to vector<16x32xf32>
    %278 = vector.extract_strided_slice %274 {offsets = [0, 32], sizes = [16, 32], strides = [1, 1]} : vector<16x96xf32> to vector<16x32xf32>
    %279 = vector.extract_strided_slice %274 {offsets = [0, 64], sizes = [16, 32], strides = [1, 1]} : vector<16x96xf32> to vector<16x32xf32>
    %280 = arith.mulf %278, %226 : vector<16x32xf32>
    %281 = arith.mulf %277, %276 : vector<16x32xf32>
    %282 = arith.addf %280, %281 : vector<16x32xf32>
    %283 = math.tanh %282 : vector<16x32xf32>
    %284 = arith.mulf %279, %283 : vector<16x32xf32>
    %285 = arith.index_cast %c4_i32 : i32 to index
    %c0_65 = arith.constant 0 : index
    %c0_66 = arith.constant 0 : index
    %286 = vector.load %arg11[%285, %c0_65, %c0_66] : memref<8x16x64xf32, #tpu.memory_space<vmem>>, vector<1x16x32xf32>
    %287 = vector.shape_cast %286 : vector<1x16x32xf32> to vector<16x32xf32>
    %288 = vector.shape_cast %268 : vector<16x32xf32> to vector<1x16x32xf32>
    tpu.vector_store %arg11[%285, %c0_65, %c0_66], %288 {strides = array<i32>} : memref<8x16x64xf32, #tpu.memory_space<vmem>>, vector<1x16x32xf32>,
    %289 = arith.index_cast %237 : i32 to index
    %c0_67 = arith.constant 0 : index
    %c32_68 = arith.constant 32 : index
    %290 = vector.load %arg11[%289, %c0_67, %c32_68] : memref<8x16x64xf32, #tpu.memory_space<vmem>>, vector<1x16x32xf32>
    %291 = vector.shape_cast %290 : vector<1x16x32xf32> to vector<16x32xf32>
    %292 = vector.shape_cast %284 : vector<16x32xf32> to vector<1x16x32xf32>
    tpu.vector_store %arg11[%289, %c0_67, %c32_68], %292 {strides = array<i32>} : memref<8x16x64xf32, #tpu.memory_space<vmem>>, vector<1x16x32xf32>,
    %c5_i32 = arith.constant 5 : i32
    %c7_i32_69 = arith.constant 7 : i32
    %293 = arith.subi %c7_i32_69, %c5_i32 : i32
    %294 = tpu.concatenate %268, %284 in 1 : vector<16x32xf32>, vector<16x32xf32> -> vector<16x64xf32>
    %295 = arith.truncf %294 : vector<16x64xf32> to vector<16x64xbf16>
    %cst_70 = arith.constant dense<0.000000e+00> : vector<16x256xf32>
    %296 = tpu.matmul %295, %11, %cst_70 {dimension_numbers = #tpu.dot_dimension_numbers<[1], [0], [0], [1], [0, 0, 1, 1], [], []>} : vector<16x64xbf16>, vector<64x256xbf16>, vector<16x256xf32> -> vector<16x256xf32>
    %297 = arith.index_cast %c5_i32 : i32 to index
    %c0_71 = arith.constant 0 : index
    %c0_72 = arith.constant 0 : index
    %298 = vector.load %arg10[%297, %c0_71, %c0_72] : memref<8x16x256xbf16, #tpu.memory_space<vmem>>, vector<1x16x128xbf16>
    %299 = vector.shape_cast %298 : vector<1x16x128xbf16> to vector<16x128xbf16>
    %300 = arith.extf %299 : vector<16x128xbf16> to vector<16x128xf32>
    %301 = vector.extract_strided_slice %296 {offsets = [0, 0], sizes = [16, 128], strides = [1, 1]} : vector<16x256xf32> to vector<16x128xf32>
    %302 = arith.addf %300, %301 : vector<16x128xf32>
    %303 = arith.index_cast %293 : i32 to index
    %c0_73 = arith.constant 0 : index
    %c128_74 = arith.constant 128 : index
    %304 = vector.load %arg10[%303, %c0_73, %c128_74] : memref<8x16x256xbf16, #tpu.memory_space<vmem>>, vector<1x16x128xbf16>
    %305 = vector.shape_cast %304 : vector<1x16x128xbf16> to vector<16x128xbf16>
    %306 = arith.extf %305 : vector<16x128xbf16> to vector<16x128xf32>
    %307 = vector.extract_strided_slice %296 {offsets = [0, 128], sizes = [16, 128], strides = [1, 1]} : vector<16x256xf32> to vector<16x128xf32>
    %308 = arith.addf %306, %307 : vector<16x128xf32>
    %309 = vector.extract_strided_slice %302 {offsets = [0, 0], sizes = [16, 96], strides = [1, 1]} : vector<16x128xf32> to vector<16x96xf32>
    %310 = arith.negf %309 : vector<16x96xf32>
    %311 = math.exp %310 : vector<16x96xf32>
    %cst_75 = arith.constant 1.000000e+00 : f32
    %312 = vector.broadcast %cst_75 : f32 to vector<16x96xf32>
    %313 = arith.addf %312, %311 : vector<16x96xf32>
    %314 = arith.divf %312, %313 : vector<16x96xf32>
    %315 = vector.extract_strided_slice %302 {offsets = [0, 96], sizes = [16, 32], strides = [1, 1]} : vector<16x128xf32> to vector<16x32xf32>
    %316 = math.tanh %315 : vector<16x32xf32>
    %317 = vector.extract_strided_slice %314 {offsets = [0, 0], sizes = [16, 32], strides = [1, 1]} : vector<16x96xf32> to vector<16x32xf32>
    %318 = vector.extract_strided_slice %314 {offsets = [0, 32], sizes = [16, 32], strides = [1, 1]} : vector<16x96xf32> to vector<16x32xf32>
    %319 = vector.extract_strided_slice %314 {offsets = [0, 64], sizes = [16, 32], strides = [1, 1]} : vector<16x96xf32> to vector<16x32xf32>
    %320 = arith.mulf %318, %266 : vector<16x32xf32>
    %321 = arith.mulf %317, %316 : vector<16x32xf32>
    %322 = arith.addf %320, %321 : vector<16x32xf32>
    %323 = math.tanh %322 : vector<16x32xf32>
    %324 = arith.mulf %319, %323 : vector<16x32xf32>
    %325 = vector.extract_strided_slice %308 {offsets = [0, 0], sizes = [16, 96], strides = [1, 1]} : vector<16x128xf32> to vector<16x96xf32>
    %326 = arith.negf %325 : vector<16x96xf32>
    %327 = math.exp %326 : vector<16x96xf32>
    %cst_76 = arith.constant 1.000000e+00 : f32
    %328 = vector.broadcast %cst_76 : f32 to vector<16x96xf32>
    %329 = arith.addf %328, %327 : vector<16x96xf32>
    %330 = arith.divf %328, %329 : vector<16x96xf32>
    %331 = vector.extract_strided_slice %308 {offsets = [0, 96], sizes = [16, 32], strides = [1, 1]} : vector<16x128xf32> to vector<16x32xf32>
    %332 = math.tanh %331 : vector<16x32xf32>
    %333 = vector.extract_strided_slice %330 {offsets = [0, 0], sizes = [16, 32], strides = [1, 1]} : vector<16x96xf32> to vector<16x32xf32>
    %334 = vector.extract_strided_slice %330 {offsets = [0, 32], sizes = [16, 32], strides = [1, 1]} : vector<16x96xf32> to vector<16x32xf32>
    %335 = vector.extract_strided_slice %330 {offsets = [0, 64], sizes = [16, 32], strides = [1, 1]} : vector<16x96xf32> to vector<16x32xf32>
    %336 = arith.mulf %334, %282 : vector<16x32xf32>
    %337 = arith.mulf %333, %332 : vector<16x32xf32>
    %338 = arith.addf %336, %337 : vector<16x32xf32>
    %339 = math.tanh %338 : vector<16x32xf32>
    %340 = arith.mulf %335, %339 : vector<16x32xf32>
    %341 = arith.index_cast %c5_i32 : i32 to index
    %c0_77 = arith.constant 0 : index
    %c0_78 = arith.constant 0 : index
    %342 = vector.load %arg11[%341, %c0_77, %c0_78] : memref<8x16x64xf32, #tpu.memory_space<vmem>>, vector<1x16x32xf32>
    %343 = vector.shape_cast %342 : vector<1x16x32xf32> to vector<16x32xf32>
    %344 = vector.shape_cast %324 : vector<16x32xf32> to vector<1x16x32xf32>
    tpu.vector_store %arg11[%341, %c0_77, %c0_78], %344 {strides = array<i32>} : memref<8x16x64xf32, #tpu.memory_space<vmem>>, vector<1x16x32xf32>,
    %345 = arith.index_cast %293 : i32 to index
    %c0_79 = arith.constant 0 : index
    %c32_80 = arith.constant 32 : index
    %346 = vector.load %arg11[%345, %c0_79, %c32_80] : memref<8x16x64xf32, #tpu.memory_space<vmem>>, vector<1x16x32xf32>
    %347 = vector.shape_cast %346 : vector<1x16x32xf32> to vector<16x32xf32>
    %348 = vector.shape_cast %340 : vector<16x32xf32> to vector<1x16x32xf32>
    tpu.vector_store %arg11[%345, %c0_79, %c32_80], %348 {strides = array<i32>} : memref<8x16x64xf32, #tpu.memory_space<vmem>>, vector<1x16x32xf32>,
    %c6_i32 = arith.constant 6 : i32
    %c7_i32_81 = arith.constant 7 : i32
    %349 = arith.subi %c7_i32_81, %c6_i32 : i32
    %350 = tpu.concatenate %324, %340 in 1 : vector<16x32xf32>, vector<16x32xf32> -> vector<16x64xf32>
    %351 = arith.truncf %350 : vector<16x64xf32> to vector<16x64xbf16>
    %cst_82 = arith.constant dense<0.000000e+00> : vector<16x256xf32>
    %352 = tpu.matmul %351, %11, %cst_82 {dimension_numbers = #tpu.dot_dimension_numbers<[1], [0], [0], [1], [0, 0, 1, 1], [], []>} : vector<16x64xbf16>, vector<64x256xbf16>, vector<16x256xf32> -> vector<16x256xf32>
    %353 = arith.index_cast %c6_i32 : i32 to index
    %c0_83 = arith.constant 0 : index
    %c0_84 = arith.constant 0 : index
    %354 = vector.load %arg10[%353, %c0_83, %c0_84] : memref<8x16x256xbf16, #tpu.memory_space<vmem>>, vector<1x16x128xbf16>
    %355 = vector.shape_cast %354 : vector<1x16x128xbf16> to vector<16x128xbf16>
    %356 = arith.extf %355 : vector<16x128xbf16> to vector<16x128xf32>
    %357 = vector.extract_strided_slice %352 {offsets = [0, 0], sizes = [16, 128], strides = [1, 1]} : vector<16x256xf32> to vector<16x128xf32>
    %358 = arith.addf %356, %357 : vector<16x128xf32>
    %359 = arith.index_cast %349 : i32 to index
    %c0_85 = arith.constant 0 : index
    %c128_86 = arith.constant 128 : index
    %360 = vector.load %arg10[%359, %c0_85, %c128_86] : memref<8x16x256xbf16, #tpu.memory_space<vmem>>, vector<1x16x128xbf16>
    %361 = vector.shape_cast %360 : vector<1x16x128xbf16> to vector<16x128xbf16>
    %362 = arith.extf %361 : vector<16x128xbf16> to vector<16x128xf32>
    %363 = vector.extract_strided_slice %352 {offsets = [0, 128], sizes = [16, 128], strides = [1, 1]} : vector<16x256xf32> to vector<16x128xf32>
    %364 = arith.addf %362, %363 : vector<16x128xf32>
    %365 = vector.extract_strided_slice %358 {offsets = [0, 0], sizes = [16, 96], strides = [1, 1]} : vector<16x128xf32> to vector<16x96xf32>
    %366 = arith.negf %365 : vector<16x96xf32>
    %367 = math.exp %366 : vector<16x96xf32>
    %cst_87 = arith.constant 1.000000e+00 : f32
    %368 = vector.broadcast %cst_87 : f32 to vector<16x96xf32>
    %369 = arith.addf %368, %367 : vector<16x96xf32>
    %370 = arith.divf %368, %369 : vector<16x96xf32>
    %371 = vector.extract_strided_slice %358 {offsets = [0, 96], sizes = [16, 32], strides = [1, 1]} : vector<16x128xf32> to vector<16x32xf32>
    %372 = math.tanh %371 : vector<16x32xf32>
    %373 = vector.extract_strided_slice %370 {offsets = [0, 0], sizes = [16, 32], strides = [1, 1]} : vector<16x96xf32> to vector<16x32xf32>
    %374 = vector.extract_strided_slice %370 {offsets = [0, 32], sizes = [16, 32], strides = [1, 1]} : vector<16x96xf32> to vector<16x32xf32>
    %375 = vector.extract_strided_slice %370 {offsets = [0, 64], sizes = [16, 32], strides = [1, 1]} : vector<16x96xf32> to vector<16x32xf32>
    %376 = arith.mulf %374, %322 : vector<16x32xf32>
    %377 = arith.mulf %373, %372 : vector<16x32xf32>
    %378 = arith.addf %376, %377 : vector<16x32xf32>
    %379 = math.tanh %378 : vector<16x32xf32>
    %380 = arith.mulf %375, %379 : vector<16x32xf32>
    %381 = vector.extract_strided_slice %364 {offsets = [0, 0], sizes = [16, 96], strides = [1, 1]} : vector<16x128xf32> to vector<16x96xf32>
    %382 = arith.negf %381 : vector<16x96xf32>
    %383 = math.exp %382 : vector<16x96xf32>
    %cst_88 = arith.constant 1.000000e+00 : f32
    %384 = vector.broadcast %cst_88 : f32 to vector<16x96xf32>
    %385 = arith.addf %384, %383 : vector<16x96xf32>
    %386 = arith.divf %384, %385 : vector<16x96xf32>
    %387 = vector.extract_strided_slice %364 {offsets = [0, 96], sizes = [16, 32], strides = [1, 1]} : vector<16x128xf32> to vector<16x32xf32>
    %388 = math.tanh %387 : vector<16x32xf32>
    %389 = vector.extract_strided_slice %386 {offsets = [0, 0], sizes = [16, 32], strides = [1, 1]} : vector<16x96xf32> to vector<16x32xf32>
    %390 = vector.extract_strided_slice %386 {offsets = [0, 32], sizes = [16, 32], strides = [1, 1]} : vector<16x96xf32> to vector<16x32xf32>
    %391 = vector.extract_strided_slice %386 {offsets = [0, 64], sizes = [16, 32], strides = [1, 1]} : vector<16x96xf32> to vector<16x32xf32>
    %392 = arith.mulf %390, %338 : vector<16x32xf32>
    %393 = arith.mulf %389, %388 : vector<16x32xf32>
    %394 = arith.addf %392, %393 : vector<16x32xf32>
    %395 = math.tanh %394 : vector<16x32xf32>
    %396 = arith.mulf %391, %395 : vector<16x32xf32>
    %397 = arith.index_cast %c6_i32 : i32 to index
    %c0_89 = arith.constant 0 : index
    %c0_90 = arith.constant 0 : index
    %398 = vector.load %arg11[%397, %c0_89, %c0_90] : memref<8x16x64xf32, #tpu.memory_space<vmem>>, vector<1x16x32xf32>
    %399 = vector.shape_cast %398 : vector<1x16x32xf32> to vector<16x32xf32>
    %400 = vector.shape_cast %380 : vector<16x32xf32> to vector<1x16x32xf32>
    tpu.vector_store %arg11[%397, %c0_89, %c0_90], %400 {strides = array<i32>} : memref<8x16x64xf32, #tpu.memory_space<vmem>>, vector<1x16x32xf32>,
    %401 = arith.index_cast %349 : i32 to index
    %c0_91 = arith.constant 0 : index
    %c32_92 = arith.constant 32 : index
    %402 = vector.load %arg11[%401, %c0_91, %c32_92] : memref<8x16x64xf32, #tpu.memory_space<vmem>>, vector<1x16x32xf32>
    %403 = vector.shape_cast %402 : vector<1x16x32xf32> to vector<16x32xf32>
    %404 = vector.shape_cast %396 : vector<16x32xf32> to vector<1x16x32xf32>
    tpu.vector_store %arg11[%401, %c0_91, %c32_92], %404 {strides = array<i32>} : memref<8x16x64xf32, #tpu.memory_space<vmem>>, vector<1x16x32xf32>,
    %c7_i32_93 = arith.constant 7 : i32
    %c7_i32_94 = arith.constant 7 : i32
    %405 = arith.subi %c7_i32_94, %c7_i32_93 : i32
    %406 = tpu.concatenate %380, %396 in 1 : vector<16x32xf32>, vector<16x32xf32> -> vector<16x64xf32>
    %407 = arith.truncf %406 : vector<16x64xf32> to vector<16x64xbf16>
    %cst_95 = arith.constant dense<0.000000e+00> : vector<16x256xf32>
    %408 = tpu.matmul %407, %11, %cst_95 {dimension_numbers = #tpu.dot_dimension_numbers<[1], [0], [0], [1], [0, 0, 1, 1], [], []>} : vector<16x64xbf16>, vector<64x256xbf16>, vector<16x256xf32> -> vector<16x256xf32>
    %409 = arith.index_cast %c7_i32_93 : i32 to index
    %c0_96 = arith.constant 0 : index
    %c0_97 = arith.constant 0 : index
    %410 = vector.load %arg10[%409, %c0_96, %c0_97] : memref<8x16x256xbf16, #tpu.memory_space<vmem>>, vector<1x16x128xbf16>
    %411 = vector.shape_cast %410 : vector<1x16x128xbf16> to vector<16x128xbf16>
    %412 = arith.extf %411 : vector<16x128xbf16> to vector<16x128xf32>
    %413 = vector.extract_strided_slice %408 {offsets = [0, 0], sizes = [16, 128], strides = [1, 1]} : vector<16x256xf32> to vector<16x128xf32>
    %414 = arith.addf %412, %413 : vector<16x128xf32>
    %415 = arith.index_cast %405 : i32 to index
    %c0_98 = arith.constant 0 : index
    %c128_99 = arith.constant 128 : index
    %416 = vector.load %arg10[%415, %c0_98, %c128_99] : memref<8x16x256xbf16, #tpu.memory_space<vmem>>, vector<1x16x128xbf16>
    %417 = vector.shape_cast %416 : vector<1x16x128xbf16> to vector<16x128xbf16>
    %418 = arith.extf %417 : vector<16x128xbf16> to vector<16x128xf32>
    %419 = vector.extract_strided_slice %408 {offsets = [0, 128], sizes = [16, 128], strides = [1, 1]} : vector<16x256xf32> to vector<16x128xf32>
    %420 = arith.addf %418, %419 : vector<16x128xf32>
    %421 = vector.extract_strided_slice %414 {offsets = [0, 0], sizes = [16, 96], strides = [1, 1]} : vector<16x128xf32> to vector<16x96xf32>
    %422 = arith.negf %421 : vector<16x96xf32>
    %423 = math.exp %422 : vector<16x96xf32>
    %cst_100 = arith.constant 1.000000e+00 : f32
    %424 = vector.broadcast %cst_100 : f32 to vector<16x96xf32>
    %425 = arith.addf %424, %423 : vector<16x96xf32>
    %426 = arith.divf %424, %425 : vector<16x96xf32>
    %427 = vector.extract_strided_slice %414 {offsets = [0, 96], sizes = [16, 32], strides = [1, 1]} : vector<16x128xf32> to vector<16x32xf32>
    %428 = math.tanh %427 : vector<16x32xf32>
    %429 = vector.extract_strided_slice %426 {offsets = [0, 0], sizes = [16, 32], strides = [1, 1]} : vector<16x96xf32> to vector<16x32xf32>
    %430 = vector.extract_strided_slice %426 {offsets = [0, 32], sizes = [16, 32], strides = [1, 1]} : vector<16x96xf32> to vector<16x32xf32>
    %431 = vector.extract_strided_slice %426 {offsets = [0, 64], sizes = [16, 32], strides = [1, 1]} : vector<16x96xf32> to vector<16x32xf32>
    %432 = arith.mulf %430, %378 : vector<16x32xf32>
    %433 = arith.mulf %429, %428 : vector<16x32xf32>
    %434 = arith.addf %432, %433 : vector<16x32xf32>
    %435 = math.tanh %434 : vector<16x32xf32>
    %436 = arith.mulf %431, %435 : vector<16x32xf32>
    %437 = vector.extract_strided_slice %420 {offsets = [0, 0], sizes = [16, 96], strides = [1, 1]} : vector<16x128xf32> to vector<16x96xf32>
    %438 = arith.negf %437 : vector<16x96xf32>
    %439 = math.exp %438 : vector<16x96xf32>
    %cst_101 = arith.constant 1.000000e+00 : f32
    %440 = vector.broadcast %cst_101 : f32 to vector<16x96xf32>
    %441 = arith.addf %440, %439 : vector<16x96xf32>
    %442 = arith.divf %440, %441 : vector<16x96xf32>
    %443 = vector.extract_strided_slice %420 {offsets = [0, 96], sizes = [16, 32], strides = [1, 1]} : vector<16x128xf32> to vector<16x32xf32>
    %444 = math.tanh %443 : vector<16x32xf32>
    %445 = vector.extract_strided_slice %442 {offsets = [0, 0], sizes = [16, 32], strides = [1, 1]} : vector<16x96xf32> to vector<16x32xf32>
    %446 = vector.extract_strided_slice %442 {offsets = [0, 32], sizes = [16, 32], strides = [1, 1]} : vector<16x96xf32> to vector<16x32xf32>
    %447 = vector.extract_strided_slice %442 {offsets = [0, 64], sizes = [16, 32], strides = [1, 1]} : vector<16x96xf32> to vector<16x32xf32>
    %448 = arith.mulf %446, %394 : vector<16x32xf32>
    %449 = arith.mulf %445, %444 : vector<16x32xf32>
    %450 = arith.addf %448, %449 : vector<16x32xf32>
    %451 = math.tanh %450 : vector<16x32xf32>
    %452 = arith.mulf %447, %451 : vector<16x32xf32>
    %453 = arith.index_cast %c7_i32_93 : i32 to index
    %c0_102 = arith.constant 0 : index
    %c0_103 = arith.constant 0 : index
    %454 = vector.load %arg11[%453, %c0_102, %c0_103] : memref<8x16x64xf32, #tpu.memory_space<vmem>>, vector<1x16x32xf32>
    %455 = vector.shape_cast %454 : vector<1x16x32xf32> to vector<16x32xf32>
    %456 = vector.shape_cast %436 : vector<16x32xf32> to vector<1x16x32xf32>
    tpu.vector_store %arg11[%453, %c0_102, %c0_103], %456 {strides = array<i32>} : memref<8x16x64xf32, #tpu.memory_space<vmem>>, vector<1x16x32xf32>,
    %457 = arith.index_cast %405 : i32 to index
    %c0_104 = arith.constant 0 : index
    %c32_105 = arith.constant 32 : index
    %458 = vector.load %arg11[%457, %c0_104, %c32_105] : memref<8x16x64xf32, #tpu.memory_space<vmem>>, vector<1x16x32xf32>
    %459 = vector.shape_cast %458 : vector<1x16x32xf32> to vector<16x32xf32>
    %460 = vector.shape_cast %452 : vector<16x32xf32> to vector<1x16x32xf32>
    tpu.vector_store %arg11[%457, %c0_104, %c32_105], %460 {strides = array<i32>} : memref<8x16x64xf32, #tpu.memory_space<vmem>>, vector<1x16x32xf32>,
    %c8_i32 = arith.constant 8 : i32
    %c0_106 = arith.constant 0 : index
    %c0_107 = arith.constant 0 : index
    %c0_108 = arith.constant 0 : index
    %461 = vector.load %arg11[%c0_106, %c0_107, %c0_108] : memref<8x16x64xf32, #tpu.memory_space<vmem>>, vector<8x16x64xf32>
    %462 = vector.shape_cast %461 : vector<8x16x64xf32> to vector<128x64xf32>
    %463 = arith.truncf %462 : vector<128x64xf32> to vector<128x64xbf16>
    %c0_109 = arith.constant 0 : index
    %c0_110 = arith.constant 0 : index
    %464 = vector.load %arg5[%c0_109, %c0_110] : memref<64x16xbf16, #tpu.memory_space<vmem>>, vector<64x16xbf16>
    %cst_111 = arith.constant dense<0.000000e+00> : vector<128x16xf32>
    %465 = tpu.matmul %463, %464, %cst_111 {dimension_numbers = #tpu.dot_dimension_numbers<[1], [0], [0], [1], [0, 0, 1, 1], [], []>} : vector<128x64xbf16>, vector<64x16xbf16>, vector<128x16xf32> -> vector<128x16xf32>
    %c0_112 = arith.constant 0 : index
    %c0_113 = arith.constant 0 : index
    %466 = vector.load %arg6[%c0_112, %c0_113] : memref<1x16xf32, #tpu.memory_space<vmem>>, vector<1x16xf32>
    %467 = vector.broadcast %466 : vector<1x16xf32> to vector<128x16xf32>
    %468 = arith.addf %465, %467 : vector<128x16xf32>
    %469 = vector.shape_cast %468 : vector<128x16xf32> to vector<8x16x16xf32>
    %c0_114 = arith.constant 0 : index
    %c0_115 = arith.constant 0 : index
    %c0_116 = arith.constant 0 : index
    %470 = vector.load %arg7[%c0_114, %c0_115, %c0_116] : memref<8x16x16xf32, #tpu.memory_space<vmem>>, vector<8x16x16xf32>
    tpu.vector_store %arg7[%c0_114, %c0_115, %c0_116], %469 {strides = array<i32>} : memref<8x16x16xf32, #tpu.memory_space<vmem>>, vector<8x16x16xf32>,
    %cst_117 = arith.constant dense<0.000000e+00> : vector<16x16xf32>
    %471 = vector.multi_reduction <add>, %469, %cst_117 [0] : vector<8x16x16xf32> to vector<16x16xf32>
    %cst_118 = arith.constant dense<0.000000e+00> : vector<16xf32>
    %472 = vector.multi_reduction <add>, %471, %cst_118 [1] : vector<16x16xf32> to vector<16xf32>
    %473 = vector.shape_cast %472 : vector<16xf32> to vector<16x1xf32>
    %c0_119 = arith.constant 0 : index
    %c0_120 = arith.constant 0 : index
    %474 = vector.load %arg8[%c0_119, %c0_120] : memref<16x1xf32, #tpu.memory_space<vmem>>, vector<16x1xf32>
    tpu.vector_store %arg8[%c0_119, %c0_120], %473 {strides = array<i32>} : memref<16x1xf32, #tpu.memory_space<vmem>>, vector<16x1xf32>,
    %475 = arith.mulf %469, %469 : vector<8x16x16xf32>
    %cst_121 = arith.constant dense<0.000000e+00> : vector<16x16xf32>
    %476 = vector.multi_reduction <add>, %475, %cst_121 [0] : vector<8x16x16xf32> to vector<16x16xf32>
    %cst_122 = arith.constant dense<0.000000e+00> : vector<16xf32>
    %477 = vector.multi_reduction <add>, %476, %cst_122 [1] : vector<16x16xf32> to vector<16xf32>
    %478 = vector.shape_cast %477 : vector<16xf32> to vector<16x1xf32>
    %c0_123 = arith.constant 0 : index
    %c0_124 = arith.constant 0 : index
    %479 = vector.load %arg9[%c0_123, %c0_124] : memref<16x1xf32, #tpu.memory_space<vmem>>, vector<16x1xf32>
    tpu.vector_store %arg9[%c0_123, %c0_124], %478 {strides = array<i32>} : memref<16x1xf32, #tpu.memory_space<vmem>>, vector<16x1xf32>,
    return
  }
  func.func @transform_0(%arg0: i32) -> (i32, i32, i32) {
    %c0_i32 = arith.constant 0 : i32
    %c0_i32_0 = arith.constant 0 : i32
    %c0_i32_1 = arith.constant 0 : i32
    return %c0_i32, %arg0, %c0_i32_0 : i32, i32, i32
  }
  func.func @transform_1(%arg0: i32) -> (i32, i32) {
    %c0_i32 = arith.constant 0 : i32
    %c0_i32_0 = arith.constant 0 : i32
    %c0_i32_1 = arith.constant 0 : i32
    return %c0_i32, %c0_i32_0 : i32, i32
  }
  func.func @transform_2(%arg0: i32) -> (i32, i32) {
    %c0_i32 = arith.constant 0 : i32
    %c0_i32_0 = arith.constant 0 : i32
    %c0_i32_1 = arith.constant 0 : i32
    return %c0_i32, %c0_i32_0 : i32, i32
  }
  func.func @transform_3(%arg0: i32) -> (i32, i32) {
    %c0_i32 = arith.constant 0 : i32
    %c0_i32_0 = arith.constant 0 : i32
    %c0_i32_1 = arith.constant 0 : i32
    return %c0_i32, %c0_i32_0 : i32, i32
  }
  func.func @transform_4(%arg0: i32) -> (i32, i32) {
    %c0_i32 = arith.constant 0 : i32
    %c0_i32_0 = arith.constant 0 : i32
    %c0_i32_1 = arith.constant 0 : i32
    return %c0_i32, %c0_i32_0 : i32, i32
  }
  func.func @transform_5(%arg0: i32) -> (i32, i32) {
    %c0_i32 = arith.constant 0 : i32
    %c0_i32_0 = arith.constant 0 : i32
    %c0_i32_1 = arith.constant 0 : i32
    return %c0_i32, %c0_i32_0 : i32, i32
  }
  func.func @transform_6(%arg0: i32) -> (i32, i32, i32) {
    %c0_i32 = arith.constant 0 : i32
    %c0_i32_0 = arith.constant 0 : i32
    %c0_i32_1 = arith.constant 0 : i32
    return %c0_i32, %arg0, %c0_i32_0 : i32, i32, i32
  }
  func.func @transform_7(%arg0: i32) -> (i32, i32) {
    %c0_i32 = arith.constant 0 : i32
    %c0_i32_0 = arith.constant 0 : i32
    return %arg0, %c0_i32 : i32, i32
  }
  func.func @transform_8(%arg0: i32) -> (i32, i32) {
    %c0_i32 = arith.constant 0 : i32
    %c0_i32_0 = arith.constant 0 : i32
    return %arg0, %c0_i32 : i32, i32
  }
}

module attributes {stable_mosaic.version = 11 : i64} {
  func.func @_gln_residual_kernel(%arg0: i32, %arg1: memref<8x2x128xf32, #tpu.memory_space<vmem>>, %arg2: memref<8x2x128xf32, #tpu.memory_space<vmem>>, %arg3: memref<1x2x128xf32, #tpu.memory_space<vmem>>, %arg4: memref<1x2x128xf32, #tpu.memory_space<vmem>>, %arg5: memref<8x2x128xf32, #tpu.memory_space<vmem>>) attributes {dimension_semantics = [#tpu.dimension_semantics<parallel>], iteration_bounds = array<i64: 1>, scalar_prefetch = 0 : i64, scratch_operands = 0 : i64, tpu.core_type = #tpu.core_type<tc>, window_params = [{transform_indices = @transform_0, window_bounds = array<i64: 8, 2, 128>}, {transform_indices = @transform_1, window_bounds = array<i64: 8, 2, 128>}, {pipeline_mode = #tpu.pipeline_mode<synchronous>, transform_indices = @transform_2, window_bounds = array<i64: 1, 2, 128>}, {pipeline_mode = #tpu.pipeline_mode<synchronous>, transform_indices = @transform_3, window_bounds = array<i64: 1, 2, 128>}, {transform_indices = @transform_4, window_bounds = array<i64: 8, 2, 128>}]} {
    %c0 = arith.constant 0 : index
    %c0_0 = arith.constant 0 : index
    %c0_1 = arith.constant 0 : index
    %0 = vector.load %arg1[%c0, %c0_0, %c0_1] : memref<8x2x128xf32, #tpu.memory_space<vmem>>, vector<8x2x128xf32>
    %c0_2 = arith.constant 0 : index
    %c0_3 = arith.constant 0 : index
    %c0_4 = arith.constant 0 : index
    %1 = vector.load %arg2[%c0_2, %c0_3, %c0_4] : memref<8x2x128xf32, #tpu.memory_space<vmem>>, vector<8x2x128xf32>
    %c0_5 = arith.constant 0 : index
    %c0_6 = arith.constant 0 : index
    %c0_7 = arith.constant 0 : index
    %2 = vector.load %arg3[%c0_5, %c0_6, %c0_7] : memref<1x2x128xf32, #tpu.memory_space<vmem>>, vector<1x2x128xf32>
    %3 = vector.broadcast %2 : vector<1x2x128xf32> to vector<8x2x128xf32>
    %4 = arith.mulf %1, %3 : vector<8x2x128xf32>
    %5 = arith.addf %0, %4 : vector<8x2x128xf32>
    %c0_8 = arith.constant 0 : index
    %c0_9 = arith.constant 0 : index
    %c0_10 = arith.constant 0 : index
    %6 = vector.load %arg4[%c0_8, %c0_9, %c0_10] : memref<1x2x128xf32, #tpu.memory_space<vmem>>, vector<1x2x128xf32>
    %7 = vector.broadcast %6 : vector<1x2x128xf32> to vector<8x2x128xf32>
    %8 = arith.addf %5, %7 : vector<8x2x128xf32>
    %c0_11 = arith.constant 0 : index
    %c0_12 = arith.constant 0 : index
    %c0_13 = arith.constant 0 : index
    %9 = vector.load %arg5[%c0_11, %c0_12, %c0_13] : memref<8x2x128xf32, #tpu.memory_space<vmem>>, vector<8x2x128xf32>
    tpu.vector_store %arg5[%c0_11, %c0_12, %c0_13], %8 {strides = array<i32>} : memref<8x2x128xf32, #tpu.memory_space<vmem>>, vector<8x2x128xf32>,
    return
  }
  func.func @transform_0(%arg0: i32) -> (i32, i32, i32) {
    %c0_i32 = arith.constant 0 : i32
    %c0_i32_0 = arith.constant 0 : i32
    %c0_i32_1 = arith.constant 0 : i32
    return %arg0, %c0_i32, %c0_i32_0 : i32, i32, i32
  }
  func.func @transform_1(%arg0: i32) -> (i32, i32, i32) {
    %c0_i32 = arith.constant 0 : i32
    %c0_i32_0 = arith.constant 0 : i32
    %c0_i32_1 = arith.constant 0 : i32
    return %arg0, %c0_i32, %c0_i32_0 : i32, i32, i32
  }
  func.func @transform_2(%arg0: i32) -> (i32, i32, i32) {
    %c0_i32 = arith.constant 0 : i32
    %c0_i32_0 = arith.constant 0 : i32
    %c0_i32_1 = arith.constant 0 : i32
    %c0_i32_2 = arith.constant 0 : i32
    return %c0_i32, %c0_i32_0, %c0_i32_1 : i32, i32, i32
  }
  func.func @transform_3(%arg0: i32) -> (i32, i32, i32) {
    %c0_i32 = arith.constant 0 : i32
    %c0_i32_0 = arith.constant 0 : i32
    %c0_i32_1 = arith.constant 0 : i32
    %c0_i32_2 = arith.constant 0 : i32
    return %c0_i32, %c0_i32_0, %c0_i32_1 : i32, i32, i32
  }
  func.func @transform_4(%arg0: i32) -> (i32, i32, i32) {
    %c0_i32 = arith.constant 0 : i32
    %c0_i32_0 = arith.constant 0 : i32
    %c0_i32_1 = arith.constant 0 : i32
    return %arg0, %c0_i32, %c0_i32_0 : i32, i32, i32
  }
}

</mosaic_0001>

<llo_original>
// kernel: dprnn_block.5
$region0: #{dprnn_block.5}
  #allocation0 [shape = 'u32[]', space=smem, size = 0x4, offset = 0x4, fixed_abs, tag = 'smem constant byte address 0x4 - core index']
  #allocation1 [shape = 'u32[72,128]{1,0:T(1,128)}', space=vmem, size = 0x9000, scoped, tag = 'internal scratch']
  %s0 = inlined_call_operand.vmem [shape: f32[8,2,128], index: 0, kind: input, shape index: {}, may-alias: {0,4}]
  %s1 = inlined_call_operand.vmem [shape: f32[8,2,128], index: 1, kind: input, shape index: {}]
  %s2 = inlined_call_operand.vmem [shape: f32[1,2,128], index: 2, kind: input, shape index: {}]
  %s3 = inlined_call_operand.vmem [shape: f32[1,2,128], index: 3, kind: input, shape index: {}]
  %s4 = inlined_call_operand.vmem [shape: f32[8,2,128], index: 4, kind: output, shape index: {}, may-alias: {0,4}]
  %s5 = sld [smem:[#allocation0]]
  $region26: #{dprnn_block.5} parent=0
    _
  %s7 = ssub.s32 1, %s5
  %s8 = scalar_select 0, %s7, %s5
  // Predicated region
  $region2: #{dprnn_block.5} parent=0 // pred_check
    _
  $region3: #{dprnn_block.5} parent=0 // pred_check_branch
    %10 = sbr.rel (0) target = $region5
  $region4: #{dprnn_block.5} parent=0 // pred_region
    _
  $region5: #{dprnn_block.5} parent=0 // pred_fallthru
    _
  // Predicated region
  $region6: #{dprnn_block.5} parent=0 // pred_check
    _
  $region7: #{dprnn_block.5} parent=0 // pred_check_branch
    %12 = sbr.rel (0) target = $region9
  $region8: #{dprnn_block.5} parent=0 // pred_region
    _
  $region9: #{dprnn_block.5} parent=0 // pred_fallthru
    _
  // Predicated region
  $region10: #{dprnn_block.5} parent=0 // pred_check
    _
  $region11: #{dprnn_block.5} parent=0 // pred_check_branch
    %14 = sbr.rel (0) target = $region13
  $region12: #{dprnn_block.5} parent=0 // pred_region
    _
  $region13: #{dprnn_block.5} parent=0 // pred_fallthru
    _
  // Predicated region
  $region14: #{dprnn_block.5} parent=0 // pred_check
    _
  $region15: #{dprnn_block.5} parent=0 // pred_check_branch
    %16 = sbr.rel (0) target = $region17
  $region16: #{dprnn_block.5} parent=0 // pred_region
    _
  $region17: #{dprnn_block.5} parent=0 // pred_fallthru
    _
  %v17 = vld [vmem:[%s0] sm:$0x3]
  %v18 = vld [vmem:[%s0 + $0x2] sm:$0x3]
  %v19 = vld [vmem:[%s0 + $0x4] sm:$0x3]
  %v20 = vld [vmem:[%s0 + $0x6] sm:$0x3]
  %v21 = vld [vmem:[%s0 + $0x8] sm:$0x3]
  %v22 = vld [vmem:[%s0 + $0xa] sm:$0x3]
  %v23 = vld [vmem:[%s0 + $0xc] sm:$0x3]
  %v24 = vld [vmem:[%s0 + $0xe] sm:$0x3]
  %v25 = vld [vmem:[%s1] sm:$0x3]
  %v26 = vld [vmem:[%s1 + $0x2] sm:$0x3]
  %v27 = vld [vmem:[%s1 + $0x4] sm:$0x3]
  %v28 = vld [vmem:[%s1 + $0x6] sm:$0x3]
  %v29 = vld [vmem:[%s1 + $0x8] sm:$0x3]
  %v30 = vld [vmem:[%s1 + $0xa] sm:$0x3]
  %v31 = vld [vmem:[%s1 + $0xc] sm:$0x3]
  %v32 = vld [vmem:[%s1 + $0xe] sm:$0x3]
  %v33 = vld [vmem:[%s2] sm:$0x3]
  %v34 = vmul.f32 %v25, %v33
  %v35 = vmul.f32 %v26, %v33
  %v36 = vmul.f32 %v27, %v33
  %v37 = vmul.f32 %v28, %v33
  %v38 = vmul.f32 %v29, %v33
  %v39 = vmul.f32 %v30, %v33
  %v40 = vmul.f32 %v31, %v33
  %v41 = vmul.f32 %v32, %v33
  %v42 = vadd.f32 %v17, %v34
  %v43 = vadd.f32 %v18, %v35
  %v44 = vadd.f32 %v19, %v36
  %v45 = vadd.f32 %v20, %v37
  %v46 = vadd.f32 %v21, %v38
  %v47 = vadd.f32 %v22, %v39
  %v48 = vadd.f32 %v23, %v40
  %v49 = vadd.f32 %v24, %v41
  %v50 = vld [vmem:[%s3] sm:$0x3]
  %v51 = vadd.f32 %v42, %v50
  %v52 = vadd.f32 %v43, %v50
  %v53 = vadd.f32 %v44, %v50
  %v54 = vadd.f32 %v45, %v50
  %v55 = vadd.f32 %v46, %v50
  %v56 = vadd.f32 %v47, %v50
  %v57 = vadd.f32 %v48, %v50
  %v58 = vadd.f32 %v49, %v50
  %59 = vst [vmem:[%s4] sm:$0x3] %v51
  %60 = vst [vmem:[%s4 + $0x2] sm:$0x3] %v52
  %61 = vst [vmem:[%s4 + $0x4] sm:$0x3] %v53
  %62 = vst [vmem:[%s4 + $0x6] sm:$0x3] %v54
  %63 = vst [vmem:[%s4 + $0x8] sm:$0x3] %v55
  %64 = vst [vmem:[%s4 + $0xa] sm:$0x3] %v56
  %65 = vst [vmem:[%s4 + $0xc] sm:$0x3] %v57
  %66 = vst [vmem:[%s4 + $0xe] sm:$0x3] %v58
  // Predicated region
  $region18: #{dprnn_block.5} parent=0 // pred_check
    _
  $region19: #{dprnn_block.5} parent=0 // pred_check_branch
    %68 = sbr.rel (0) target = $region21
  $region20: #{dprnn_block.5} parent=0 // pred_region
    _
  $region21: #{dprnn_block.5} parent=0 // pred_fallthru
    _
  // Predicated region
  $region22: #{dprnn_block.5} parent=0 // pred_check
    _
  $region23: #{dprnn_block.5} parent=0 // pred_check_branch
    %70 = sbr.rel (0) target = $region25
  $region24: #{dprnn_block.5} parent=0 // pred_region
    _
  $region25: #{dprnn_block.5} parent=0 // pred_fallthru
    _

// kernel: dprnn_block.4
$region0: #{dprnn_block.4}
  #allocation0 [shape = 'u32[]', space=smem, size = 0x4, offset = 0x4, fixed_abs, tag = 'smem constant byte address 0x4 - core index']
  #allocation1 [shape = 'u32[72,128]{1,0:T(1,128)}', space=vmem, size = 0x9000, scoped, tag = 'internal scratch']
  #allocation2 [shape = 'bf16[8,16,256]{2,1,0:T(8,128)(2,1)}', space=vmem, size = 0x10000, scoped, tag = 'scratch operand']
  #allocation3 [shape = 'f32[8,16,64]{2,1,0:T(8,128)}', space=vmem, size = 0x10000, scoped, tag = 'scratch operand']
  %s0 = inlined_call_operand.vmem [shape: f32[8,16,16], index: 0, kind: input, shape index: {}]
  %s1 = inlined_call_operand.vmem [shape: bf16[16,256], index: 1, kind: input, shape index: {}]
  %s2 = inlined_call_operand.vmem [shape: f32[1,256], index: 2, kind: input, shape index: {}]
  %s3 = inlined_call_operand.vmem [shape: bf16[64,256], index: 3, kind: input, shape index: {}]
  %s4 = inlined_call_operand.vmem [shape: bf16[64,16], index: 4, kind: input, shape index: {}]
  %s5 = inlined_call_operand.vmem [shape: f32[1,16], index: 5, kind: input, shape index: {}]
  %s6 = inlined_call_operand.vmem [shape: f32[8,16,16], index: 6, kind: output, shape index: {0}]
  %s7 = inlined_call_operand.vmem [shape: f32[16,1], index: 7, kind: output, shape index: {1}]
  %s8 = inlined_call_operand.vmem [shape: f32[16,1], index: 8, kind: output, shape index: {2}]
  %9 = xla_tuple %s6, %s7, %s8
  %s10 = sld [smem:[#allocation0]]
  $region50: #{dprnn_block.4} parent=0
    _
  %s12 = ssub.s32 1, %s10
  %s13 = scalar_select 0, %s12, %s10
  // Predicated region
  $region2: #{dprnn_block.4} parent=0 // pred_check
    _
  $region3: #{dprnn_block.4} parent=0 // pred_check_branch
    %15 = sbr.rel (0) target = $region5
  $region4: #{dprnn_block.4} parent=0 // pred_region
    _
  $region5: #{dprnn_block.4} parent=0 // pred_fallthru
    _
  // Predicated region
  $region6: #{dprnn_block.4} parent=0 // pred_check
    _
  $region7: #{dprnn_block.4} parent=0 // pred_check_branch
    %17 = sbr.rel (0) target = $region9
  $region8: #{dprnn_block.4} parent=0 // pred_region
    _
  $region9: #{dprnn_block.4} parent=0 // pred_fallthru
    _
  // Predicated region
  $region10: #{dprnn_block.4} parent=0 // pred_check
    _
  $region11: #{dprnn_block.4} parent=0 // pred_check_branch
    %19 = sbr.rel (0) target = $region13
  $region12: #{dprnn_block.4} parent=0 // pred_region
    _
  $region13: #{dprnn_block.4} parent=0 // pred_fallthru
    _
  // Predicated region
  $region14: #{dprnn_block.4} parent=0 // pred_check
    _
  $region15: #{dprnn_block.4} parent=0 // pred_check_branch
    %21 = sbr.rel (0) target = $region17
  $region16: #{dprnn_block.4} parent=0 // pred_region
    _
  $region17: #{dprnn_block.4} parent=0 // pred_fallthru
    _
  // Predicated region
  $region18: #{dprnn_block.4} parent=0 // pred_check
    _
  $region19: #{dprnn_block.4} parent=0 // pred_check_branch
    %23 = sbr.rel (0) target = $region21
  $region20: #{dprnn_block.4} parent=0 // pred_region
    _
  $region21: #{dprnn_block.4} parent=0 // pred_fallthru
    _
  // Predicated region
  $region22: #{dprnn_block.4} parent=0 // pred_check
    _
  $region23: #{dprnn_block.4} parent=0 // pred_check_branch
    %25 = sbr.rel (0) target = $region25
  $region24: #{dprnn_block.4} parent=0 // pred_region
    _
  $region25: #{dprnn_block.4} parent=0 // pred_fallthru
    _
  %v27 = vld [vmem:[%s0] sm:$0xff]
  %v28 = vld [vmem:[%s0 + $0x8] sm:$0xff]
  %v29 = vld [vmem:[%s0 + $0x10] sm:$0xff]
  %v30 = vld [vmem:[%s0 + $0x18] sm:$0xff]
  %v31 = vld [vmem:[%s0 + $0x20] sm:$0xff]
  %v32 = vld [vmem:[%s0 + $0x28] sm:$0xff]
  %v33 = vld [vmem:[%s0 + $0x30] sm:$0xff]
  %v34 = vld [vmem:[%s0 + $0x38] sm:$0xff]
  %v35 = vld [vmem:[%s0 + $0x40] sm:$0xff]
  %v36 = vld [vmem:[%s0 + $0x48] sm:$0xff]
  %v37 = vld [vmem:[%s0 + $0x50] sm:$0xff]
  %v38 = vld [vmem:[%s0 + $0x58] sm:$0xff]
  %v39 = vld [vmem:[%s0 + $0x60] sm:$0xff]
  %v40 = vld [vmem:[%s0 + $0x68] sm:$0xff]
  %v41 = vld [vmem:[%s0 + $0x70] sm:$0xff]
  %v42 = vld [vmem:[%s0 + $0x78] sm:$0xff]
  %v43 = vpack.c.bf16 %v28, %v27
  %v44 = vpack.c.bf16 %v30, %v29
  %v45 = vpack.c.bf16 %v32, %v31
  %v46 = vpack.c.bf16 %v34, %v33
  %v47 = vpack.c.bf16 %v36, %v35
  %v48 = vpack.c.bf16 %v38, %v37
  %v49 = vpack.c.bf16 %v40, %v39
  %v50 = vpack.c.bf16 %v42, %v41
  %v51 = vld [vmem:[%s1] sm:$0xff]
  %v52 = vld [vmem:[%s1 + $0x8] sm:$0xff]
  %v53 = vld [vmem:[%s2] sm:$0x3]
  %v55 = vperm.slane %v53, 0
  %v56 = vperm.slane %v53, 1
  %v61 = vunpack.c.l.b16 %v51
  %v62 = vunpack.c.h.b16 %v51
  %v63 = vunpack.c.l.b16 %v52
  %v64 = vunpack.c.h.b16 %v52
  %v65 = vpack.c.b16 %v63, %v61
  %v66 = vpack.c.b16 %v64, %v62
  %vm69 = vcmask 130048
  %v71 = vsel %vm69, %v43, 0
  %v74 = vsel %vm69, %v44, 0
  %v77 = vsel %vm69, %v45, 0
  %v80 = vsel %vm69, %v46, 0
  %v83 = vsel %vm69, %v47, 0
  %v86 = vsel %vm69, %v48, 0
  %v89 = vsel %vm69, %v49, 0
  %v92 = vsel %vm69, %v50, 0
  %94 = vmatpush.bf16.msra.mxu0 0
  %95 = vmatpush.bf16.msra.mxu0 0
  %96 = vmatpush.bf16.msra.mxu0 0
  %97 = vmatpush.bf16.msra.mxu0 0
  %98 = vmatpush.bf16.msra.mxu0 0
  %99 = vmatpush.bf16.msra.mxu0 0
  %100 = vmatpush.bf16.msra.mxu0 0
  %101 = vmatpush.bf16.msra.mxu0 %v65
  %102 = vmatmul.bf16.gmra.mxu0 %v71
  %v103 = vpop.f32.mrf.mxu0
  %v104 = vadd.f32 %v55, %v103
  %v105 = vpop.f32.mrf.mxu0
  %v106 = vadd.f32 %v55, %v105
  %107 = vmatmul.bf16.gmra.mxu0 %v74
  %v108 = vpop.f32.mrf.mxu0
  %v109 = vadd.f32 %v55, %v108
  %v110 = vpop.f32.mrf.mxu0
  %v111 = vadd.f32 %v55, %v110
  %112 = vmatmul.bf16.gmra.mxu0 %v77
  %v113 = vpop.f32.mrf.mxu0
  %v114 = vadd.f32 %v55, %v113
  %v115 = vpop.f32.mrf.mxu0
  %v116 = vadd.f32 %v55, %v115
  %117 = vmatmul.bf16.gmra.mxu0 %v80
  %v118 = vpop.f32.mrf.mxu0
  %v119 = vadd.f32 %v55, %v118
  %v120 = vpop.f32.mrf.mxu0
  %v121 = vadd.f32 %v55, %v120
  %122 = vmatmul.bf16.gmra.mxu0 %v83
  %v123 = vpop.f32.mrf.mxu0
  %v124 = vadd.f32 %v55, %v123
  %v125 = vpop.f32.mrf.mxu0
  %v126 = vadd.f32 %v55, %v125
  %127 = vmatmul.bf16.gmra.mxu0 %v86
  %v128 = vpop.f32.mrf.mxu0
  %v129 = vadd.f32 %v55, %v128
  %v130 = vpop.f32.mrf.mxu0
  %v131 = vadd.f32 %v55, %v130
  %132 = vmatmul.bf16.gmra.mxu0 %v89
  %v133 = vpop.f32.mrf.mxu0
  %v134 = vadd.f32 %v55, %v133
  %v135 = vpop.f32.mrf.mxu0
  %v136 = vadd.f32 %v55, %v135
  %137 = vmatmul.bf16.gmra.mxu0 %v92
  %v138 = vpop.f32.mrf.mxu0
  %v139 = vadd.f32 %v55, %v138
  %v140 = vpop.f32.mrf.mxu0
  %v141 = vadd.f32 %v55, %v140
  %142 = vdwg.mxu0
  %143 = vmatpush.bf16.msra.mxu0 0
  %144 = vmatpush.bf16.msra.mxu0 0
  %145 = vmatpush.bf16.msra.mxu0 0
  %146 = vmatpush.bf16.msra.mxu0 0
  %147 = vmatpush.bf16.msra.mxu0 0
  %148 = vmatpush.bf16.msra.mxu0 0
  %149 = vmatpush.bf16.msra.mxu0 0
  %150 = vmatpush.bf16.msra.mxu0 %v66
  %151 = vmatmul.bf16.gmra.mxu0 %v71
  %v152 = vpop.f32.mrf.mxu0
  %v153 = vadd.f32 %v56, %v152
  %v154 = vpop.f32.mrf.mxu0
  %v155 = vadd.f32 %v56, %v154
  %156 = vmatmul.bf16.gmra.mxu0 %v74
  %v157 = vpop.f32.mrf.mxu0
  %v158 = vadd.f32 %v56, %v157
  %v159 = vpop.f32.mrf.mxu0
  %v160 = vadd.f32 %v56, %v159
  %161 = vmatmul.bf16.gmra.mxu0 %v77
  %v162 = vpop.f32.mrf.mxu0
  %v163 = vadd.f32 %v56, %v162
  %v164 = vpop.f32.mrf.mxu0
  %v165 = vadd.f32 %v56, %v164
  %166 = vmatmul.bf16.gmra.mxu0 %v80
  %v167 = vpop.f32.mrf.mxu0
  %v168 = vadd.f32 %v56, %v167
  %v169 = vpop.f32.mrf.mxu0
  %v170 = vadd.f32 %v56, %v169
  %171 = vmatmul.bf16.gmra.mxu0 %v83
  %v172 = vpop.f32.mrf.mxu0
  %v173 = vadd.f32 %v56, %v172
  %v174 = vpop.f32.mrf.mxu0
  %v175 = vadd.f32 %v56, %v174
  %176 = vmatmul.bf16.gmra.mxu0 %v86
  %v177 = vpop.f32.mrf.mxu0
  %v178 = vadd.f32 %v56, %v177
  %v179 = vpop.f32.mrf.mxu0
  %v180 = vadd.f32 %v56, %v179
  %181 = vmatmul.bf16.gmra.mxu0 %v89
  %v182 = vpop.f32.mrf.mxu0
  %v183 = vadd.f32 %v56, %v182
  %v184 = vpop.f32.mrf.mxu0
  %v185 = vadd.f32 %v56, %v184
  %186 = vmatmul.bf16.gmra.mxu0 %v92
  %v187 = vpop.f32.mrf.mxu0
  %v188 = vadd.f32 %v56, %v187
  %v189 = vpop.f32.mrf.mxu0
  %v190 = vadd.f32 %v56, %v189
  %191 = vdwg.mxu0
  %v192 = vpack.c.bf16 %v153, %v104
  %v193 = vpack.c.bf16 %v155, %v106
  %v194 = vpack.c.bf16 %v158, %v109
  %v195 = vpack.c.bf16 %v160, %v111
  %v196 = vpack.c.bf16 %v163, %v114
  %v197 = vpack.c.bf16 %v165, %v116
  %v198 = vpack.c.bf16 %v168, %v119
  %v199 = vpack.c.bf16 %v170, %v121
  %v200 = vpack.c.bf16 %v173, %v124
  %v201 = vpack.c.bf16 %v175, %v126
  %v202 = vpack.c.bf16 %v178, %v129
  %v203 = vpack.c.bf16 %v180, %v131
  %v204 = vpack.c.bf16 %v183, %v134
  %v205 = vpack.c.bf16 %v185, %v136
  %v206 = vpack.c.bf16 %v188, %v139
  %v207 = vpack.c.bf16 %v190, %v141
  %208 = vst [vmem:[#allocation2] sm:$0xff] %v192
  %209 = vst [vmem:[#allocation2 + $0x8] sm:$0xff] %v193
  %210 = vst [vmem:[#allocation2 + $0x10] sm:$0xff] %v194
  %211 = vst [vmem:[#allocation2 + $0x18] sm:$0xff] %v195
  %212 = vst [vmem:[#allocation2 + $0x20] sm:$0xff] %v196
  %213 = vst [vmem:[#allocation2 + $0x28] sm:$0xff] %v197
  %214 = vst [vmem:[#allocation2 + $0x30] sm:$0xff] %v198
  %215 = vst [vmem:[#allocation2 + $0x38] sm:$0xff] %v199
  %216 = vst [vmem:[#allocation2 + $0x40] sm:$0xff] %v200
  %217 = vst [vmem:[#allocation2 + $0x48] sm:$0xff] %v201
  %218 = vst [vmem:[#allocation2 + $0x50] sm:$0xff] %v202
  %219 = vst [vmem:[#allocation2 + $0x58] sm:$0xff] %v203
  %220 = vst [vmem:[#allocation2 + $0x60] sm:$0xff] %v204
  %221 = vst [vmem:[#allocation2 + $0x68] sm:$0xff] %v205
  %222 = vst [vmem:[#allocation2 + $0x70] sm:$0xff] %v206
  %223 = vst [vmem:[#allocation2 + $0x78] sm:$0xff] %v207
  %v224 = vld [vmem:[%s3] sm:$0xff]
  %v225 = vld [vmem:[%s3 + $0x8] sm:$0xff]
  %v226 = vld [vmem:[%s3 + $0x10] sm:$0xff]
  %v227 = vld [vmem:[%s3 + $0x18] sm:$0xff]
  %v228 = vld [vmem:[%s3 + $0x20] sm:$0xff]
  %v229 = vld [vmem:[%s3 + $0x28] sm:$0xff]
  %v230 = vld [vmem:[%s3 + $0x30] sm:$0xff]
  %v231 = vld [vmem:[%s3 + $0x38] sm:$0xff]
  %v232 = vpack.c.bf16 0.0, 0.0
  %v241 = vunpack.c.l.b16 %v224
  %v242 = vunpack.c.h.b16 %v224
  %v243 = vunpack.c.l.b16 %v225
  %v244 = vunpack.c.h.b16 %v225
  %v245 = vunpack.c.l.b16 %v226
  %v246 = vunpack.c.h.b16 %v226
  %v247 = vunpack.c.l.b16 %v227
  %v248 = vunpack.c.h.b16 %v227
  %v249 = vunpack.c.l.b16 %v228
  %v250 = vunpack.c.h.b16 %v228
  %v251 = vunpack.c.l.b16 %v229
  %v252 = vunpack.c.h.b16 %v229
  %v253 = vunpack.c.l.b16 %v230
  %v254 = vunpack.c.h.b16 %v230
  %v255 = vunpack.c.l.b16 %v231
  %v256 = vunpack.c.h.b16 %v231
  %v257 = vpack.c.b16 %v243, %v241
  %v258 = vpack.c.b16 %v244, %v242
  %v259 = vpack.c.b16 %v247, %v245
  %v260 = vpack.c.b16 %v248, %v246
  %v261 = vpack.c.b16 %v251, %v249
  %v262 = vpack.c.b16 %v252, %v250
  %v263 = vpack.c.b16 %v255, %v253
  %v264 = vpack.c.b16 %v256, %v254
  %vm273 = vcmask 523264
  %v275 = vsel %vm273, %v232, 0
  %277 = vmatpush.bf16.msra.mxu0 0
  %278 = vmatpush.bf16.msra.mxu0 0
  %279 = vmatpush.bf16.msra.mxu0 0
  %280 = vmatpush.bf16.msra.mxu0 0
  %281 = vmatpush.bf16.msra.mxu0 %v263
  %282 = vmatpush.bf16.msra.mxu0 %v261
  %283 = vmatpush.bf16.msra.mxu0 %v259
  %284 = vmatpush.bf16.msra.mxu0 %v257
  %285 = vmatmul.bf16.gmra.mxu0 %v275
  %v286 = vpop.f32.mrf.mxu0
  %v287 = vadd.f32 0.0, %v286
  %v288 = vpop.f32.mrf.mxu0
  %v289 = vadd.f32 0.0, %v288
  %290 = vdwg.mxu0
  %291 = vmatpush.bf16.msra.mxu0 0
  %292 = vmatpush.bf16.msra.mxu0 0
  %293 = vmatpush.bf16.msra.mxu0 0
  %294 = vmatpush.bf16.msra.mxu0 0
  %295 = vmatpush.bf16.msra.mxu0 %v264
  %296 = vmatpush.bf16.msra.mxu0 %v262
  %297 = vmatpush.bf16.msra.mxu0 %v260
  %298 = vmatpush.bf16.msra.mxu0 %v258
  %299 = vmatmul.bf16.gmra.mxu0 %v275
  %v300 = vpop.f32.mrf.mxu0
  %v301 = vadd.f32 0.0, %v300
  %v302 = vpop.f32.mrf.mxu0
  %v303 = vadd.f32 0.0, %v302
  %304 = vdwg.mxu0
  %v305 = vld [vmem:[#allocation2] sm:$0xf]
  %v306 = vld [vmem:[#allocation2 + $0x8] sm:$0xf]
  %v307 = vunpack.c.l.bf16 %v305
  %v308 = vunpack.c.l.bf16 %v306
  %v309 = vadd.f32 %v307, %v287
  %v310 = vadd.f32 %v308, %v289
  %s311 = scalar_lea.vmem [#allocation2], 112
  %v312 = vld [vmem:[%s311 + $0x4] sm:$0xf]
  %v313 = vld [vmem:[%s311 + $0xc] sm:$0xf]
  %v314 = vunpack.c.l.bf16 %v312
  %v315 = vunpack.c.l.bf16 %v313
  %v316 = vadd.f32 %v314, %v301
  %v317 = vadd.f32 %v315, %v303
  %v318 = vxor.u32 %v309, 2147483648
  %v319 = vxor.u32 %v310, 2147483648
  %v320 = vmul.f32 %v318, 1.442695
  %v321 = vpow.pop %v320
  %v322 = vmul.f32 %v319, 1.442695
  %v323 = vpow.pop %v322
  %v324 = vadd.f32 %v321, 1.0
  %v325 = vadd.f32 %v323, 1.0
  %v326 = vrcp.pop %v324
  %v327 = vmul.f32 %v324, %v326
  %v328 = vsub.f32 1.0, %v327
  %v329 = vmul.f32 %v326, %v328
  %v330 = vadd.f32 %v326, %v329
  %vm331 = vweird.f32 %v324
  %vm332 = vweird.f32 %v326
  %vm333 = vmor %vm331, %vm332
  %v334 = vsel %vm333, %v326, %v330
  %v335 = vand.u32 2147483647, %v324
  %vm336 = vcmp.eq.f32.partialorder %v335, 8.507059e+37
  %v337 = vand.u32 %v324, 2147483648
  %v338 = vor.u32 1.1754944e-38, %v337
  %v339 = vsel %vm336, %v338, %v334
  %v340 = vmul.f32 1.0, %v339
  %v341 = vrcp.pop %v325
  %v342 = vmul.f32 %v325, %v341
  %v343 = vsub.f32 1.0, %v342
  %v344 = vmul.f32 %v341, %v343
  %v345 = vadd.f32 %v341, %v344
  %vm346 = vweird.f32 %v325
  %vm347 = vweird.f32 %v341
  %vm348 = vmor %vm346, %vm347
  %v349 = vsel %vm348, %v341, %v345
  %v350 = vand.u32 2147483647, %v325
  %vm351 = vcmp.eq.f32.partialorder %v350, 8.507059e+37
  %v352 = vand.u32 %v325, 2147483648
  %v353 = vor.u32 1.1754944e-38, %v352
  %v354 = vsel %vm351, %v353, %v349
  %v355 = vmul.f32 1.0, %v354
  %v356 = vtanh.pop %v309
  %v357 = vtanh.pop %v310
  %v358 = vmul.f32 %v340, 0.0
  %v359 = vmul.f32 %v355, 0.0
  %362 = vrot.lane.b32.xlu0 %v356, 32
  %v363 = vpop.permute.xlu0 %362
  %364 = vrot.lane.b32.xlu0 %v357, 32
  %v365 = vpop.permute.xlu0 %364
  %v368 = vmul.f32 %v340, %v363
  %v369 = vmul.f32 %v355, %v365
  %372 = vrot.lane.b32.xlu0 %v368, 32
  %v373 = vpop.permute.xlu0 %372
  %374 = vrot.lane.b32.xlu0 %v369, 32
  %v375 = vpop.permute.xlu0 %374
  %v378 = vadd.f32 %v358, %v373
  %v379 = vadd.f32 %v359, %v375
  %v380 = vtanh.pop %v378
  %v381 = vtanh.pop %v379
  %384 = vrot.lane.b32.xlu0 %v380, 32
  %v385 = vpop.permute.xlu0 %384
  %386 = vrot.lane.b32.xlu0 %v381, 32
  %v387 = vpop.permute.xlu0 %386
  %v390 = vmul.f32 %v340, %v385
  %v391 = vmul.f32 %v355, %v387
  %v392 = vxor.u32 %v316, 2147483648
  %v393 = vxor.u32 %v317, 2147483648
  %v394 = vmul.f32 %v392, 1.442695
  %v395 = vpow.pop %v394
  %v396 = vmul.f32 %v393, 1.442695
  %v397 = vpow.pop %v396
  %v398 = vadd.f32 %v395, 1.0
  %v399 = vadd.f32 %v397, 1.0
  %v400 = vrcp.pop %v398
  %v401 = vmul.f32 %v398, %v400
  %v402 = vsub.f32 1.0, %v401
  %v403 = vmul.f32 %v400, %v402
  %v404 = vadd.f32 %v400, %v403
  %vm405 = vweird.f32 %v398
  %vm406 = vweird.f32 %v400
  %vm407 = vmor %vm405, %vm406
  %v408 = vsel %vm407, %v400, %v404
  %v409 = vand.u32 2147483647, %v398
  %vm410 = vcmp.eq.f32.partialorder %v409, 8.507059e+37
  %v411 = vand.u32 %v398, 2147483648
  %v412 = vor.u32 1.1754944e-38, %v411
  %v413 = vsel %vm410, %v412, %v408
  %v414 = vmul.f32 1.0, %v413
  %v415 = vrcp.pop %v399
  %v416 = vmul.f32 %v399, %v415
  %v417 = vsub.f32 1.0, %v416
  %v418 = vmul.f32 %v415, %v417
  %v419 = vadd.f32 %v415, %v418
  %vm420 = vweird.f32 %v399
  %vm421 = vweird.f32 %v415
  %vm422 = vmor %vm420, %vm421
  %v423 = vsel %vm422, %v415, %v419
  %v424 = vand.u32 2147483647, %v399
  %vm425 = vcmp.eq.f32.partialorder %v424, 8.507059e+37
  %v426 = vand.u32 %v399, 2147483648
  %v427 = vor.u32 1.1754944e-38, %v426
  %v428 = vsel %vm425, %v427, %v423
  %v429 = vmul.f32 1.0, %v428
  %v430 = vtanh.pop %v316
  %v431 = vtanh.pop %v317
  %v432 = vmul.f32 %v414, 0.0
  %v433 = vmul.f32 %v429, 0.0
  %436 = vrot.lane.b32.xlu0 %v430, 32
  %v437 = vpop.permute.xlu0 %436
  %438 = vrot.lane.b32.xlu0 %v431, 32
  %v439 = vpop.permute.xlu0 %438
  %v442 = vmul.f32 %v414, %v437
  %v443 = vmul.f32 %v429, %v439
  %446 = vrot.lane.b32.xlu0 %v442, 32
  %v447 = vpop.permute.xlu0 %446
  %448 = vrot.lane.b32.xlu0 %v443, 32
  %v449 = vpop.permute.xlu0 %448
  %v452 = vadd.f32 %v432, %v447
  %v453 = vadd.f32 %v433, %v449
  %v454 = vtanh.pop %v452
  %v455 = vtanh.pop %v453
  %458 = vrot.lane.b32.xlu0 %v454, 32
  %v459 = vpop.permute.xlu0 %458
  %460 = vrot.lane.b32.xlu0 %v455, 32
  %v461 = vpop.permute.xlu0 %460
  %v464 = vmul.f32 %v414, %v459
  %v465 = vmul.f32 %v429, %v461
  %468 = vrot.lane.b32.xlu0 %v390, 64
  %v469 = vpop.permute.xlu0 %468
  %470 = vrot.lane.b32.xlu0 %v391, 64
  %v471 = vpop.permute.xlu0 %470
  %vm474 = vcmask 261120
  %475 = vst.msk [vmem:[#allocation3] sm:$0xff] %vm474, %v469
  %476 = vst.msk [vmem:[#allocation3 + $0x8] sm:$0xff] %vm474, %v471
  %479 = vrot.lane.b32.xlu0 %v464, 96
  %v480 = vpop.permute.xlu0 %479
  %481 = vrot.lane.b32.xlu0 %v465, 96
  %v482 = vpop.permute.xlu0 %481
  %s485 = scalar_lea.vmem [#allocation3], 112
  %vm486 = vcmask 523520
  %487 = vst.msk [vmem:[%s485] sm:$0xff] %vm486, %v480
  %488 = vst.msk [vmem:[%s485 + $0x8] sm:$0xff] %vm486, %v482
  %v489 = vsel %vm474, %v469, %v480
  %v490 = vsel %vm474, %v471, %v482
  %v491 = vpack.c.bf16 %v490, %v489
  %v493 = vsel %vm273, %v491, 0
  %495 = vmatpush.bf16.msra.mxu0 0
  %496 = vmatpush.bf16.msra.mxu0 0
  %497 = vmatpush.bf16.msra.mxu0 0
  %498 = vmatpush.bf16.msra.mxu0 0
  %499 = vmatpush.bf16.msra.mxu0 %v263
  %500 = vmatpush.bf16.msra.mxu0 %v261
  %501 = vmatpush.bf16.msra.mxu0 %v259
  %502 = vmatpush.bf16.msra.mxu0 %v257
  %503 = vmatmul.bf16.gmra.mxu0 %v493
  %v504 = vpop.f32.mrf.mxu0
  %v505 = vadd.f32 0.0, %v504
  %v506 = vpop.f32.mrf.mxu0
  %v507 = vadd.f32 0.0, %v506
  %508 = vdwg.mxu0
  %509 = vmatpush.bf16.msra.mxu0 0
  %510 = vmatpush.bf16.msra.mxu0 0
  %511 = vmatpush.bf16.msra.mxu0 0
  %512 = vmatpush.bf16.msra.mxu0 0
  %513 = vmatpush.bf16.msra.mxu0 %v264
  %514 = vmatpush.bf16.msra.mxu0 %v262
  %515 = vmatpush.bf16.msra.mxu0 %v260
  %516 = vmatpush.bf16.msra.mxu0 %v258
  %517 = vmatmul.bf16.gmra.mxu0 %v493
  %v518 = vpop.f32.mrf.mxu0
  %v519 = vadd.f32 0.0, %v518
  %v520 = vpop.f32.mrf.mxu0
  %v521 = vadd.f32 0.0, %v520
  %522 = vdwg.mxu0
  %s523 = scalar_lea.vmem [#allocation2], 16
  %v524 = vld [vmem:[%s523] sm:$0xf]
  %v525 = vld [vmem:[%s523 + $0x8] sm:$0xf]
  %v526 = vunpack.c.l.bf16 %v524
  %v527 = vunpack.c.l.bf16 %v525
  %v528 = vadd.f32 %v526, %v505
  %v529 = vadd.f32 %v527, %v507
  %s530 = scalar_lea.vmem [#allocation2], 96
  %v531 = vld [vmem:[%s530 + $0x4] sm:$0xf]
  %v532 = vld [vmem:[%s530 + $0xc] sm:$0xf]
  %v533 = vunpack.c.l.bf16 %v531
  %v534 = vunpack.c.l.bf16 %v532
  %v535 = vadd.f32 %v533, %v519
  %v536 = vadd.f32 %v534, %v521
  %v537 = vxor.u32 %v528, 2147483648
  %v538 = vxor.u32 %v529, 2147483648
  %v539 = vmul.f32 %v537, 1.442695
  %v540 = vpow.pop %v539
  %v541 = vmul.f32 %v538, 1.442695
  %v542 = vpow.pop %v541
  %v543 = vadd.f32 %v540, 1.0
  %v544 = vadd.f32 %v542, 1.0
  %v545 = vrcp.pop %v543
  %v546 = vmul.f32 %v543, %v545
  %v547 = vsub.f32 1.0, %v546
  %v548 = vmul.f32 %v545, %v547
  %v549 = vadd.f32 %v545, %v548
  %vm550 = vweird.f32 %v543
  %vm551 = vweird.f32 %v545
  %vm552 = vmor %vm550, %vm551
  %v553 = vsel %vm552, %v545, %v549
  %v554 = vand.u32 2147483647, %v543
  %vm555 = vcmp.eq.f32.partialorder %v554, 8.507059e+37
  %v556 = vand.u32 %v543, 2147483648
  %v557 = vor.u32 1.1754944e-38, %v556
  %v558 = vsel %vm555, %v557, %v553
  %v559 = vmul.f32 1.0, %v558
  %v560 = vrcp.pop %v544
  %v561 = vmul.f32 %v544, %v560
  %v562 = vsub.f32 1.0, %v561
  %v563 = vmul.f32 %v560, %v562
  %v564 = vadd.f32 %v560, %v563
  %vm565 = vweird.f32 %v544
  %vm566 = vweird.f32 %v560
  %vm567 = vmor %vm565, %vm566
  %v568 = vsel %vm567, %v560, %v564
  %v569 = vand.u32 2147483647, %v544
  %vm570 = vcmp.eq.f32.partialorder %v569, 8.507059e+37
  %v571 = vand.u32 %v544, 2147483648
  %v572 = vor.u32 1.1754944e-38, %v571
  %v573 = vsel %vm570, %v572, %v568
  %v574 = vmul.f32 1.0, %v573
  %v575 = vtanh.pop %v528
  %v576 = vtanh.pop %v529
  %v577 = vmul.f32 %v559, %v378
  %v578 = vmul.f32 %v574, %v379
  %581 = vrot.lane.b32.xlu0 %v575, 32
  %v582 = vpop.permute.xlu0 %581
  %583 = vrot.lane.b32.xlu0 %v576, 32
  %v584 = vpop.permute.xlu0 %583
  %v587 = vmul.f32 %v559, %v582
  %v588 = vmul.f32 %v574, %v584
  %591 = vrot.lane.b32.xlu0 %v587, 32
  %v592 = vpop.permute.xlu0 %591
  %593 = vrot.lane.b32.xlu0 %v588, 32
  %v594 = vpop.permute.xlu0 %593
  %v597 = vadd.f32 %v577, %v592
  %v598 = vadd.f32 %v578, %v594
  %v599 = vtanh.pop %v597
  %v600 = vtanh.pop %v598
  %603 = vrot.lane.b32.xlu0 %v599, 32
  %v604 = vpop.permute.xlu0 %603
  %605 = vrot.lane.b32.xlu0 %v600, 32
  %v606 = vpop.permute.xlu0 %605
  %v609 = vmul.f32 %v559, %v604
  %v610 = vmul.f32 %v574, %v606
  %v611 = vxor.u32 %v535, 2147483648
  %v612 = vxor.u32 %v536, 2147483648
  %v613 = vmul.f32 %v611, 1.442695
  %v614 = vpow.pop %v613
  %v615 = vmul.f32 %v612, 1.442695
  %v616 = vpow.pop %v615
  %v617 = vadd.f32 %v614, 1.0
  %v618 = vadd.f32 %v616, 1.0
  %v619 = vrcp.pop %v617
  %v620 = vmul.f32 %v617, %v619
  %v621 = vsub.f32 1.0, %v620
  %v622 = vmul.f32 %v619, %v621
  %v623 = vadd.f32 %v619, %v622
  %vm624 = vweird.f32 %v617
  %vm625 = vweird.f32 %v619
  %vm626 = vmor %vm624, %vm625
  %v627 = vsel %vm626, %v619, %v623
  %v628 = vand.u32 2147483647, %v617
  %vm629 = vcmp.eq.f32.partialorder %v628, 8.507059e+37
  %v630 = vand.u32 %v617, 2147483648
  %v631 = vor.u32 1.1754944e-38, %v630
  %v632 = vsel %vm629, %v631, %v627
  %v633 = vmul.f32 1.0, %v632
  %v634 = vrcp.pop %v618
  %v635 = vmul.f32 %v618, %v634
  %v636 = vsub.f32 1.0, %v635
  %v637 = vmul.f32 %v634, %v636
  %v638 = vadd.f32 %v634, %v637
  %vm639 = vweird.f32 %v618
  %vm640 = vweird.f32 %v634
  %vm641 = vmor %vm639, %vm640
  %v642 = vsel %vm641, %v634, %v638
  %v643 = vand.u32 2147483647, %v618
  %vm644 = vcmp.eq.f32.partialorder %v643, 8.507059e+37
  %v645 = vand.u32 %v618, 2147483648
  %v646 = vor.u32 1.1754944e-38, %v645
  %v647 = vsel %vm644, %v646, %v642
  %v648 = vmul.f32 1.0, %v647
  %v649 = vtanh.pop %v535
  %v650 = vtanh.pop %v536
  %v651 = vmul.f32 %v633, %v452
  %v652 = vmul.f32 %v648, %v453
  %655 = vrot.lane.b32.xlu0 %v649, 32
  %v656 = vpop.permute.xlu0 %655
  %657 = vrot.lane.b32.xlu0 %v650, 32
  %v658 = vpop.permute.xlu0 %657
  %v661 = vmul.f32 %v633, %v656
  %v662 = vmul.f32 %v648, %v658
  %665 = vrot.lane.b32.xlu0 %v661, 32
  %v666 = vpop.permute.xlu0 %665
  %667 = vrot.lane.b32.xlu0 %v662, 32
  %v668 = vpop.permute.xlu0 %667
  %v671 = vadd.f32 %v651, %v666
  %v672 = vadd.f32 %v652, %v668
  %v673 = vtanh.pop %v671
  %v674 = vtanh.pop %v672
  %677 = vrot.lane.b32.xlu0 %v673, 32
  %v678 = vpop.permute.xlu0 %677
  %679 = vrot.lane.b32.xlu0 %v674, 32
  %v680 = vpop.permute.xlu0 %679
  %v683 = vmul.f32 %v633, %v678
  %v684 = vmul.f32 %v648, %v680
  %687 = vrot.lane.b32.xlu0 %v609, 64
  %v688 = vpop.permute.xlu0 %687
  %689 = vrot.lane.b32.xlu0 %v610, 64
  %v690 = vpop.permute.xlu0 %689
  %s693 = scalar_lea.vmem [#allocation3], 16
  %694 = vst.msk [vmem:[%s693] sm:$0xff] %vm474, %v688
  %695 = vst.msk [vmem:[%s693 + $0x8] sm:$0xff] %vm474, %v690
  %698 = vrot.lane.b32.xlu0 %v683, 96
  %v699 = vpop.permute.xlu0 %698
  %700 = vrot.lane.b32.xlu0 %v684, 96
  %v701 = vpop.permute.xlu0 %700
  %s704 = scalar_lea.vmem [#allocation3], 96
  %705 = vst.msk [vmem:[%s704] sm:$0xff] %vm486, %v699
  %706 = vst.msk [vmem:[%s704 + $0x8] sm:$0xff] %vm486, %v701
  %v707 = vsel %vm474, %v688, %v699
  %v708 = vsel %vm474, %v690, %v701
  %v709 = vpack.c.bf16 %v708, %v707
  %v711 = vsel %vm273, %v709, 0
  %713 = vmatpush.bf16.msra.mxu0 0
  %714 = vmatpush.bf16.msra.mxu0 0
  %715 = vmatpush.bf16.msra.mxu0 0
  %716 = vmatpush.bf16.msra.mxu0 0
  %717 = vmatpush.bf16.msra.mxu0 %v263
  %718 = vmatpush.bf16.msra.mxu0 %v261
  %719 = vmatpush.bf16.msra.mxu0 %v259
  %720 = vmatpush.bf16.msra.mxu0 %v257
  %721 = vmatmul.bf16.gmra.mxu0 %v711
  %v722 = vpop.f32.mrf.mxu0
  %v723 = vadd.f32 0.0, %v722
  %v724 = vpop.f32.mrf.mxu0
  %v725 = vadd.f32 0.0, %v724
  %726 = vdwg.mxu0
  %727 = vmatpush.bf16.msra.mxu0 0
  %728 = vmatpush.bf16.msra.mxu0 0
  %729 = vmatpush.bf16.msra.mxu0 0
  %730 = vmatpush.bf16.msra.mxu0 0
  %731 = vmatpush.bf16.msra.mxu0 %v264
  %732 = vmatpush.bf16.msra.mxu0 %v262
  %733 = vmatpush.bf16.msra.mxu0 %v260
  %734 = vmatpush.bf16.msra.mxu0 %v258
  %735 = vmatmul.bf16.gmra.mxu0 %v711
  %v736 = vpop.f32.mrf.mxu0
  %v737 = vadd.f32 0.0, %v736
  %v738 = vpop.f32.mrf.mxu0
  %v739 = vadd.f32 0.0, %v738
  %740 = vdwg.mxu0
  %s741 = scalar_lea.vmem [#allocation2], 32
  %v742 = vld [vmem:[%s741] sm:$0xf]
  %v743 = vld [vmem:[%s741 + $0x8] sm:$0xf]
  %v744 = vunpack.c.l.bf16 %v742
  %v745 = vunpack.c.l.bf16 %v743
  %v746 = vadd.f32 %v744, %v723
  %v747 = vadd.f32 %v745, %v725
  %s748 = scalar_lea.vmem [#allocation2], 80
  %v749 = vld [vmem:[%s748 + $0x4] sm:$0xf]
  %v750 = vld [vmem:[%s748 + $0xc] sm:$0xf]
  %v751 = vunpack.c.l.bf16 %v749
  %v752 = vunpack.c.l.bf16 %v750
  %v753 = vadd.f32 %v751, %v737
  %v754 = vadd.f32 %v752, %v739
  %v755 = vxor.u32 %v746, 2147483648
  %v756 = vxor.u32 %v747, 2147483648
  %v757 = vmul.f32 %v755, 1.442695
  %v758 = vpow.pop %v757
  %v759 = vmul.f32 %v756, 1.442695
  %v760 = vpow.pop %v759
  %v761 = vadd.f32 %v758, 1.0
  %v762 = vadd.f32 %v760, 1.0
  %v763 = vrcp.pop %v761
  %v764 = vmul.f32 %v761, %v763
  %v765 = vsub.f32 1.0, %v764
  %v766 = vmul.f32 %v763, %v765
  %v767 = vadd.f32 %v763, %v766
  %vm768 = vweird.f32 %v761
  %vm769 = vweird.f32 %v763
  %vm770 = vmor %vm768, %vm769
  %v771 = vsel %vm770, %v763, %v767
  %v772 = vand.u32 2147483647, %v761
  %vm773 = vcmp.eq.f32.partialorder %v772, 8.507059e+37
  %v774 = vand.u32 %v761, 2147483648
  %v775 = vor.u32 1.1754944e-38, %v774
  %v776 = vsel %vm773, %v775, %v771
  %v777 = vmul.f32 1.0, %v776
  %v778 = vrcp.pop %v762
  %v779 = vmul.f32 %v762, %v778
  %v780 = vsub.f32 1.0, %v779
  %v781 = vmul.f32 %v778, %v780
  %v782 = vadd.f32 %v778, %v781
  %vm783 = vweird.f32 %v762
  %vm784 = vweird.f32 %v778
  %vm785 = vmor %vm783, %vm784
  %v786 = vsel %vm785, %v778, %v782
  %v787 = vand.u32 2147483647, %v762
  %vm788 = vcmp.eq.f32.partialorder %v787, 8.507059e+37
  %v789 = vand.u32 %v762, 2147483648
  %v790 = vor.u32 1.1754944e-38, %v789
  %v791 = vsel %vm788, %v790, %v786
  %v792 = vmul.f32 1.0, %v791
  %v793 = vtanh.pop %v746
  %v794 = vtanh.pop %v747
  %v795 = vmul.f32 %v777, %v597
  %v796 = vmul.f32 %v792, %v598
  %799 = vrot.lane.b32.xlu0 %v793, 32
  %v800 = vpop.permute.xlu0 %799
  %801 = vrot.lane.b32.xlu0 %v794, 32
  %v802 = vpop.permute.xlu0 %801
  %v805 = vmul.f32 %v777, %v800
  %v806 = vmul.f32 %v792, %v802
  %809 = vrot.lane.b32.xlu0 %v805, 32
  %v810 = vpop.permute.xlu0 %809
  %811 = vrot.lane.b32.xlu0 %v806, 32
  %v812 = vpop.permute.xlu0 %811
  %v815 = vadd.f32 %v795, %v810
  %v816 = vadd.f32 %v796, %v812
  %v817 = vtanh.pop %v815
  %v818 = vtanh.pop %v816
  %821 = vrot.lane.b32.xlu0 %v817, 32
  %v822 = vpop.permute.xlu0 %821
  %823 = vrot.lane.b32.xlu0 %v818, 32
  %v824 = vpop.permute.xlu0 %823
  %v827 = vmul.f32 %v777, %v822
  %v828 = vmul.f32 %v792, %v824
  %v829 = vxor.u32 %v753, 2147483648
  %v830 = vxor.u32 %v754, 2147483648
  %v831 = vmul.f32 %v829, 1.442695
  %v832 = vpow.pop %v831
  %v833 = vmul.f32 %v830, 1.442695
  %v834 = vpow.pop %v833
  %v835 = vadd.f32 %v832, 1.0
  %v836 = vadd.f32 %v834, 1.0
  %v837 = vrcp.pop %v835
  %v838 = vmul.f32 %v835, %v837
  %v839 = vsub.f32 1.0, %v838
  %v840 = vmul.f32 %v837, %v839
  %v841 = vadd.f32 %v837, %v840
  %vm842 = vweird.f32 %v835
  %vm843 = vweird.f32 %v837
  %vm844 = vmor %vm842, %vm843
  %v845 = vsel %vm844, %v837, %v841
  %v846 = vand.u32 2147483647, %v835
  %vm847 = vcmp.eq.f32.partialorder %v846, 8.507059e+37
  %v848 = vand.u32 %v835, 2147483648
  %v849 = vor.u32 1.1754944e-38, %v848
  %v850 = vsel %vm847, %v849, %v845
  %v851 = vmul.f32 1.0, %v850
  %v852 = vrcp.pop %v836
  %v853 = vmul.f32 %v836, %v852
  %v854 = vsub.f32 1.0, %v853
  %v855 = vmul.f32 %v852, %v854
  %v856 = vadd.f32 %v852, %v855
  %vm857 = vweird.f32 %v836
  %vm858 = vweird.f32 %v852
  %vm859 = vmor %vm857, %vm858
  %v860 = vsel %vm859, %v852, %v856
  %v861 = vand.u32 2147483647, %v836
  %vm862 = vcmp.eq.f32.partialorder %v861, 8.507059e+37
  %v863 = vand.u32 %v836, 2147483648
  %v864 = vor.u32 1.1754944e-38, %v863
  %v865 = vsel %vm862, %v864, %v860
  %v866 = vmul.f32 1.0, %v865
  %v867 = vtanh.pop %v753
  %v868 = vtanh.pop %v754
  %v869 = vmul.f32 %v851, %v671
  %v870 = vmul.f32 %v866, %v672
  %873 = vrot.lane.b32.xlu0 %v867, 32
  %v874 = vpop.permute.xlu0 %873
  %875 = vrot.lane.b32.xlu0 %v868, 32
  %v876 = vpop.permute.xlu0 %875
  %v879 = vmul.f32 %v851, %v874
  %v880 = vmul.f32 %v866, %v876
  %883 = vrot.lane.b32.xlu0 %v879, 32
  %v884 = vpop.permute.xlu0 %883
  %885 = vrot.lane.b32.xlu0 %v880, 32
  %v886 = vpop.permute.xlu0 %885
  %v889 = vadd.f32 %v869, %v884
  %v890 = vadd.f32 %v870, %v886
  %v891 = vtanh.pop %v889
  %v892 = vtanh.pop %v890
  %895 = vrot.lane.b32.xlu0 %v891, 32
  %v896 = vpop.permute.xlu0 %895
  %897 = vrot.lane.b32.xlu0 %v892, 32
  %v898 = vpop.permute.xlu0 %897
  %v901 = vmul.f32 %v851, %v896
  %v902 = vmul.f32 %v866, %v898
  %905 = vrot.lane.b32.xlu0 %v827, 64
  %v906 = vpop.permute.xlu0 %905
  %907 = vrot.lane.b32.xlu0 %v828, 64
  %v908 = vpop.permute.xlu0 %907
  %s911 = scalar_lea.vmem [#allocation3], 32
  %912 = vst.msk [vmem:[%s911] sm:$0xff] %vm474, %v906
  %913 = vst.msk [vmem:[%s911 + $0x8] sm:$0xff] %vm474, %v908
  %916 = vrot.lane.b32.xlu0 %v901, 96
  %v917 = vpop.permute.xlu0 %916
  %918 = vrot.lane.b32.xlu0 %v902, 96
  %v919 = vpop.permute.xlu0 %918
  %s922 = scalar_lea.vmem [#allocation3], 80
  %923 = vst.msk [vmem:[%s922] sm:$0xff] %vm486, %v917
  %924 = vst.msk [vmem:[%s922 + $0x8] sm:$0xff] %vm486, %v919
  %v925 = vsel %vm474, %v906, %v917
  %v926 = vsel %vm474, %v908, %v919
  %v927 = vpack.c.bf16 %v926, %v925
  %v929 = vsel %vm273, %v927, 0
  %931 = vmatpush.bf16.msra.mxu0 0
  %932 = vmatpush.bf16.msra.mxu0 0
  %933 = vmatpush.bf16.msra.mxu0 0
  %934 = vmatpush.bf16.msra.mxu0 0
  %935 = vmatpush.bf16.msra.mxu0 %v263
  %936 = vmatpush.bf16.msra.mxu0 %v261
  %937 = vmatpush.bf16.msra.mxu0 %v259
  %938 = vmatpush.bf16.msra.mxu0 %v257
  %939 = vmatmul.bf16.gmra.mxu0 %v929
  %v940 = vpop.f32.mrf.mxu0
  %v941 = vadd.f32 0.0, %v940
  %v942 = vpop.f32.mrf.mxu0
  %v943 = vadd.f32 0.0, %v942
  %944 = vdwg.mxu0
  %945 = vmatpush.bf16.msra.mxu0 0
  %946 = vmatpush.bf16.msra.mxu0 0
  %947 = vmatpush.bf16.msra.mxu0 0
  %948 = vmatpush.bf16.msra.mxu0 0
  %949 = vmatpush.bf16.msra.mxu0 %v264
  %950 = vmatpush.bf16.msra.mxu0 %v262
  %951 = vmatpush.bf16.msra.mxu0 %v260
  %952 = vmatpush.bf16.msra.mxu0 %v258
  %953 = vmatmul.bf16.gmra.mxu0 %v929
  %v954 = vpop.f32.mrf.mxu0
  %v955 = vadd.f32 0.0, %v954
  %v956 = vpop.f32.mrf.mxu0
  %v957 = vadd.f32 0.0, %v956
  %958 = vdwg.mxu0
  %s959 = scalar_lea.vmem [#allocation2], 48
  %v960 = vld [vmem:[%s959] sm:$0xf]
  %v961 = vld [vmem:[%s959 + $0x8] sm:$0xf]
  %v962 = vunpack.c.l.bf16 %v960
  %v963 = vunpack.c.l.bf16 %v961
  %v964 = vadd.f32 %v962, %v941
  %v965 = vadd.f32 %v963, %v943
  %s966 = scalar_lea.vmem [#allocation2], 64
  %v967 = vld [vmem:[%s966 + $0x4] sm:$0xf]
  %v968 = vld [vmem:[%s966 + $0xc] sm:$0xf]
  %v969 = vunpack.c.l.bf16 %v967
  %v970 = vunpack.c.l.bf16 %v968
  %v971 = vadd.f32 %v969, %v955
  %v972 = vadd.f32 %v970, %v957
  %v973 = vxor.u32 %v964, 2147483648
  %v974 = vxor.u32 %v965, 2147483648
  %v975 = vmul.f32 %v973, 1.442695
  %v976 = vpow.pop %v975
  %v977 = vmul.f32 %v974, 1.442695
  %v978 = vpow.pop %v977
  %v979 = vadd.f32 %v976, 1.0
  %v980 = vadd.f32 %v978, 1.0
  %v981 = vrcp.pop %v979
  %v982 = vmul.f32 %v979, %v981
  %v983 = vsub.f32 1.0, %v982
  %v984 = vmul.f32 %v981, %v983
  %v985 = vadd.f32 %v981, %v984
  %vm986 = vweird.f32 %v979
  %vm987 = vweird.f32 %v981
  %vm988 = vmor %vm986, %vm987
  %v989 = vsel %vm988, %v981, %v985
  %v990 = vand.u32 2147483647, %v979
  %vm991 = vcmp.eq.f32.partialorder %v990, 8.507059e+37
  %v992 = vand.u32 %v979, 2147483648
  %v993 = vor.u32 1.1754944e-38, %v992
  %v994 = vsel %vm991, %v993, %v989
  %v995 = vmul.f32 1.0, %v994
  %v996 = vrcp.pop %v980
  %v997 = vmul.f32 %v980, %v996
  %v998 = vsub.f32 1.0, %v997
  %v999 = vmul.f32 %v996, %v998
  %v1000 = vadd.f32 %v996, %v999
  %vm1001 = vweird.f32 %v980
  %vm1002 = vweird.f32 %v996
  %vm1003 = vmor %vm1001, %vm1002
  %v1004 = vsel %vm1003, %v996, %v1000
  %v1005 = vand.u32 2147483647, %v980
  %vm1006 = vcmp.eq.f32.partialorder %v1005, 8.507059e+37
  %v1007 = vand.u32 %v980, 2147483648
  %v1008 = vor.u32 1.1754944e-38, %v1007
  %v1009 = vsel %vm1006, %v1008, %v1004
  %v1010 = vmul.f32 1.0, %v1009
  %v1011 = vtanh.pop %v964
  %v1012 = vtanh.pop %v965
  %v1013 = vmul.f32 %v995, %v815
  %v1014 = vmul.f32 %v1010, %v816
  %1017 = vrot.lane.b32.xlu0 %v1011, 32
  %v1018 = vpop.permute.xlu0 %1017
  %1019 = vrot.lane.b32.xlu0 %v1012, 32
  %v1020 = vpop.permute.xlu0 %1019
  %v1023 = vmul.f32 %v995, %v1018
  %v1024 = vmul.f32 %v1010, %v1020
  %1027 = vrot.lane.b32.xlu0 %v1023, 32
  %v1028 = vpop.permute.xlu0 %1027
  %1029 = vrot.lane.b32.xlu0 %v1024, 32
  %v1030 = vpop.permute.xlu0 %1029
  %v1033 = vadd.f32 %v1013, %v1028
  %v1034 = vadd.f32 %v1014, %v1030
  %v1035 = vtanh.pop %v1033
  %v1036 = vtanh.pop %v1034
  %1039 = vrot.lane.b32.xlu0 %v1035, 32
  %v1040 = vpop.permute.xlu0 %1039
  %1041 = vrot.lane.b32.xlu0 %v1036, 32
  %v1042 = vpop.permute.xlu0 %1041
  %v1045 = vmul.f32 %v995, %v1040
  %v1046 = vmul.f32 %v1010, %v1042
  %v1047 = vxor.u32 %v971, 2147483648
  %v1048 = vxor.u32 %v972, 2147483648
  %v1049 = vmul.f32 %v1047, 1.442695
  %v1050 = vpow.pop %v1049
  %v1051 = vmul.f32 %v1048, 1.442695
  %v1052 = vpow.pop %v1051
  %v1053 = vadd.f32 %v1050, 1.0
  %v1054 = vadd.f32 %v1052, 1.0
  %v1055 = vrcp.pop %v1053
  %v1056 = vmul.f32 %v1053, %v1055
  %v1057 = vsub.f32 1.0, %v1056
  %v1058 = vmul.f32 %v1055, %v1057
  %v1059 = vadd.f32 %v1055, %v1058
  %vm1060 = vweird.f32 %v1053
  %vm1061 = vweird.f32 %v1055
  %vm1062 = vmor %vm1060, %vm1061
  %v1063 = vsel %vm1062, %v1055, %v1059
  %v1064 = vand.u32 2147483647, %v1053
  %vm1065 = vcmp.eq.f32.partialorder %v1064, 8.507059e+37
  %v1066 = vand.u32 %v1053, 2147483648
  %v1067 = vor.u32 1.1754944e-38, %v1066
  %v1068 = vsel %vm1065, %v1067, %v1063
  %v1069 = vmul.f32 1.0, %v1068
  %v1070 = vrcp.pop %v1054
  %v1071 = vmul.f32 %v1054, %v1070
  %v1072 = vsub.f32 1.0, %v1071
  %v1073 = vmul.f32 %v1070, %v1072
  %v1074 = vadd.f32 %v1070, %v1073
  %vm1075 = vweird.f32 %v1054
  %vm1076 = vweird.f32 %v1070
  %vm1077 = vmor %vm1075, %vm1076
  %v1078 = vsel %vm1077, %v1070, %v1074
  %v1079 = vand.u32 2147483647, %v1054
  %vm1080 = vcmp.eq.f32.partialorder %v1079, 8.507059e+37
  %v1081 = vand.u32 %v1054, 2147483648
  %v1082 = vor.u32 1.1754944e-38, %v1081
  %v1083 = vsel %vm1080, %v1082, %v1078
  %v1084 = vmul.f32 1.0, %v1083
  %v1085 = vtanh.pop %v971
  %v1086 = vtanh.pop %v972
  %v1087 = vmul.f32 %v1069, %v889
  %v1088 = vmul.f32 %v1084, %v890
  %1091 = vrot.lane.b32.xlu0 %v1085, 32
  %v1092 = vpop.permute.xlu0 %1091
  %1093 = vrot.lane.b32.xlu0 %v1086, 32
  %v1094 = vpop.permute.xlu0 %1093
  %v1097 = vmul.f32 %v1069, %v1092
  %v1098 = vmul.f32 %v1084, %v1094
  %1101 = vrot.lane.b32.xlu0 %v1097, 32
  %v1102 = vpop.permute.xlu0 %1101
  %1103 = vrot.lane.b32.xlu0 %v1098, 32
  %v1104 = vpop.permute.xlu0 %1103
  %v1107 = vadd.f32 %v1087, %v1102
  %v1108 = vadd.f32 %v1088, %v1104
  %v1109 = vtanh.pop %v1107
  %v1110 = vtanh.pop %v1108
  %1113 = vrot.lane.b32.xlu0 %v1109, 32
  %v1114 = vpop.permute.xlu0 %1113
  %1115 = vrot.lane.b32.xlu0 %v1110, 32
  %v1116 = vpop.permute.xlu0 %1115
  %v1119 = vmul.f32 %v1069, %v1114
  %v1120 = vmul.f32 %v1084, %v1116
  %1123 = vrot.lane.b32.xlu0 %v1045, 64
  %v1124 = vpop.permute.xlu0 %1123
  %1125 = vrot.lane.b32.xlu0 %v1046, 64
  %v1126 = vpop.permute.xlu0 %1125
  %s1129 = scalar_lea.vmem [#allocation3], 48
  %1130 = vst.msk [vmem:[%s1129] sm:$0xff] %vm474, %v1124
  %1131 = vst.msk [vmem:[%s1129 + $0x8] sm:$0xff] %vm474, %v1126
  %1134 = vrot.lane.b32.xlu0 %v1119, 96
  %v1135 = vpop.permute.xlu0 %1134
  %1136 = vrot.lane.b32.xlu0 %v1120, 96
  %v1137 = vpop.permute.xlu0 %1136
  %s1140 = scalar_lea.vmem [#allocation3], 64
  %1141 = vst.msk [vmem:[%s1140] sm:$0xff] %vm486, %v1135
  %1142 = vst.msk [vmem:[%s1140 + $0x8] sm:$0xff] %vm486, %v1137
  %v1143 = vsel %vm474, %v1124, %v1135
  %v1144 = vsel %vm474, %v1126, %v1137
  %v1145 = vpack.c.bf16 %v1144, %v1143
  %v1147 = vsel %vm273, %v1145, 0
  %1149 = vmatpush.bf16.msra.mxu0 0
  %1150 = vmatpush.bf16.msra.mxu0 0
  %1151 = vmatpush.bf16.msra.mxu0 0
  %1152 = vmatpush.bf16.msra.mxu0 0
  %1153 = vmatpush.bf16.msra.mxu0 %v263
  %1154 = vmatpush.bf16.msra.mxu0 %v261
  %1155 = vmatpush.bf16.msra.mxu0 %v259
  %1156 = vmatpush.bf16.msra.mxu0 %v257
  %1157 = vmatmul.bf16.gmra.mxu0 %v1147
  %v1158 = vpop.f32.mrf.mxu0
  %v1159 = vadd.f32 0.0, %v1158
  %v1160 = vpop.f32.mrf.mxu0
  %v1161 = vadd.f32 0.0, %v1160
  %1162 = vdwg.mxu0
  %1163 = vmatpush.bf16.msra.mxu0 0
  %1164 = vmatpush.bf16.msra.mxu0 0
  %1165 = vmatpush.bf16.msra.mxu0 0
  %1166 = vmatpush.bf16.msra.mxu0 0
  %1167 = vmatpush.bf16.msra.mxu0 %v264
  %1168 = vmatpush.bf16.msra.mxu0 %v262
  %1169 = vmatpush.bf16.msra.mxu0 %v260
  %1170 = vmatpush.bf16.msra.mxu0 %v258
  %1171 = vmatmul.bf16.gmra.mxu0 %v1147
  %v1172 = vpop.f32.mrf.mxu0
  %v1173 = vadd.f32 0.0, %v1172
  %v1174 = vpop.f32.mrf.mxu0
  %v1175 = vadd.f32 0.0, %v1174
  %1176 = vdwg.mxu0
  %v1177 = vld [vmem:[%s966] sm:$0xf]
  %v1178 = vld [vmem:[%s966 + $0x8] sm:$0xf]
  %v1179 = vunpack.c.l.bf16 %v1177
  %v1180 = vunpack.c.l.bf16 %v1178
  %v1181 = vadd.f32 %v1179, %v1159
  %v1182 = vadd.f32 %v1180, %v1161
  %v1183 = vld [vmem:[%s959 + $0x4] sm:$0xf]
  %v1184 = vld [vmem:[%s959 + $0xc] sm:$0xf]
  %v1185 = vunpack.c.l.bf16 %v1183
  %v1186 = vunpack.c.l.bf16 %v1184
  %v1187 = vadd.f32 %v1185, %v1173
  %v1188 = vadd.f32 %v1186, %v1175
  %v1189 = vxor.u32 %v1181, 2147483648
  %v1190 = vxor.u32 %v1182, 2147483648
  %v1191 = vmul.f32 %v1189, 1.442695
  %v1192 = vpow.pop %v1191
  %v1193 = vmul.f32 %v1190, 1.442695
  %v1194 = vpow.pop %v1193
  %v1195 = vadd.f32 %v1192, 1.0
  %v1196 = vadd.f32 %v1194, 1.0
  %v1197 = vrcp.pop %v1195
  %v1198 = vmul.f32 %v1195, %v1197
  %v1199 = vsub.f32 1.0, %v1198
  %v1200 = vmul.f32 %v1197, %v1199
  %v1201 = vadd.f32 %v1197, %v1200
  %vm1202 = vweird.f32 %v1195
  %vm1203 = vweird.f32 %v1197
  %vm1204 = vmor %vm1202, %vm1203
  %v1205 = vsel %vm1204, %v1197, %v1201
  %v1206 = vand.u32 2147483647, %v1195
  %vm1207 = vcmp.eq.f32.partialorder %v1206, 8.507059e+37
  %v1208 = vand.u32 %v1195, 2147483648
  %v1209 = vor.u32 1.1754944e-38, %v1208
  %v1210 = vsel %vm1207, %v1209, %v1205
  %v1211 = vmul.f32 1.0, %v1210
  %v1212 = vrcp.pop %v1196
  %v1213 = vmul.f32 %v1196, %v1212
  %v1214 = vsub.f32 1.0, %v1213
  %v1215 = vmul.f32 %v1212, %v1214
  %v1216 = vadd.f32 %v1212, %v1215
  %vm1217 = vweird.f32 %v1196
  %vm1218 = vweird.f32 %v1212
  %vm1219 = vmor %vm1217, %vm1218
  %v1220 = vsel %vm1219, %v1212, %v1216
  %v1221 = vand.u32 2147483647, %v1196
  %vm1222 = vcmp.eq.f32.partialorder %v1221, 8.507059e+37
  %v1223 = vand.u32 %v1196, 2147483648
  %v1224 = vor.u32 1.1754944e-38, %v1223
  %v1225 = vsel %vm1222, %v1224, %v1220
  %v1226 = vmul.f32 1.0, %v1225
  %v1227 = vtanh.pop %v1181
  %v1228 = vtanh.pop %v1182
  %v1229 = vmul.f32 %v1211, %v1033
  %v1230 = vmul.f32 %v1226, %v1034
  %1233 = vrot.lane.b32.xlu0 %v1227, 32
  %v1234 = vpop.permute.xlu0 %1233
  %1235 = vrot.lane.b32.xlu0 %v1228, 32
  %v1236 = vpop.permute.xlu0 %1235
  %v1239 = vmul.f32 %v1211, %v1234
  %v1240 = vmul.f32 %v1226, %v1236
  %1243 = vrot.lane.b32.xlu0 %v1239, 32
  %v1244 = vpop.permute.xlu0 %1243
  %1245 = vrot.lane.b32.xlu0 %v1240, 32
  %v1246 = vpop.permute.xlu0 %1245
  %v1249 = vadd.f32 %v1229, %v1244
  %v1250 = vadd.f32 %v1230, %v1246
  %v1251 = vtanh.pop %v1249
  %v1252 = vtanh.pop %v1250
  %1255 = vrot.lane.b32.xlu0 %v1251, 32
  %v1256 = vpop.permute.xlu0 %1255
  %1257 = vrot.lane.b32.xlu0 %v1252, 32
  %v1258 = vpop.permute.xlu0 %1257
  %v1261 = vmul.f32 %v1211, %v1256
  %v1262 = vmul.f32 %v1226, %v1258
  %v1263 = vxor.u32 %v1187, 2147483648
  %v1264 = vxor.u32 %v1188, 2147483648
  %v1265 = vmul.f32 %v1263, 1.442695
  %v1266 = vpow.pop %v1265
  %v1267 = vmul.f32 %v1264, 1.442695
  %v1268 = vpow.pop %v1267
  %v1269 = vadd.f32 %v1266, 1.0
  %v1270 = vadd.f32 %v1268, 1.0
  %v1271 = vrcp.pop %v1269
  %v1272 = vmul.f32 %v1269, %v1271
  %v1273 = vsub.f32 1.0, %v1272
  %v1274 = vmul.f32 %v1271, %v1273
  %v1275 = vadd.f32 %v1271, %v1274
  %vm1276 = vweird.f32 %v1269
  %vm1277 = vweird.f32 %v1271
  %vm1278 = vmor %vm1276, %vm1277
  %v1279 = vsel %vm1278, %v1271, %v1275
  %v1280 = vand.u32 2147483647, %v1269
  %vm1281 = vcmp.eq.f32.partialorder %v1280, 8.507059e+37
  %v1282 = vand.u32 %v1269, 2147483648
  %v1283 = vor.u32 1.1754944e-38, %v1282
  %v1284 = vsel %vm1281, %v1283, %v1279
  %v1285 = vmul.f32 1.0, %v1284
  %v1286 = vrcp.pop %v1270
  %v1287 = vmul.f32 %v1270, %v1286
  %v1288 = vsub.f32 1.0, %v1287
  %v1289 = vmul.f32 %v1286, %v1288
  %v1290 = vadd.f32 %v1286, %v1289
  %vm1291 = vweird.f32 %v1270
  %vm1292 = vweird.f32 %v1286
  %vm1293 = vmor %vm1291, %vm1292
  %v1294 = vsel %vm1293, %v1286, %v1290
  %v1295 = vand.u32 2147483647, %v1270
  %vm1296 = vcmp.eq.f32.partialorder %v1295, 8.507059e+37
  %v1297 = vand.u32 %v1270, 2147483648
  %v1298 = vor.u32 1.1754944e-38, %v1297
  %v1299 = vsel %vm1296, %v1298, %v1294
  %v1300 = vmul.f32 1.0, %v1299
  %v1301 = vtanh.pop %v1187
  %v1302 = vtanh.pop %v1188
  %v1303 = vmul.f32 %v1285, %v1107
  %v1304 = vmul.f32 %v1300, %v1108
  %1307 = vrot.lane.b32.xlu0 %v1301, 32
  %v1308 = vpop.permute.xlu0 %1307
  %1309 = vrot.lane.b32.xlu0 %v1302, 32
  %v1310 = vpop.permute.xlu0 %1309
  %v1313 = vmul.f32 %v1285, %v1308
  %v1314 = vmul.f32 %v1300, %v1310
  %1317 = vrot.lane.b32.xlu0 %v1313, 32
  %v1318 = vpop.permute.xlu0 %1317
  %1319 = vrot.lane.b32.xlu0 %v1314, 32
  %v1320 = vpop.permute.xlu0 %1319
  %v1323 = vadd.f32 %v1303, %v1318
  %v1324 = vadd.f32 %v1304, %v1320
  %v1325 = vtanh.pop %v1323
  %v1326 = vtanh.pop %v1324
  %1329 = vrot.lane.b32.xlu0 %v1325, 32
  %v1330 = vpop.permute.xlu0 %1329
  %1331 = vrot.lane.b32.xlu0 %v1326, 32
  %v1332 = vpop.permute.xlu0 %1331
  %v1335 = vmul.f32 %v1285, %v1330
  %v1336 = vmul.f32 %v1300, %v1332
  %1339 = vrot.lane.b32.xlu0 %v1261, 64
  %v1340 = vpop.permute.xlu0 %1339
  %1341 = vrot.lane.b32.xlu0 %v1262, 64
  %v1342 = vpop.permute.xlu0 %1341
  %1345 = vst.msk [vmem:[%s1140] sm:$0xff] %vm474, %v1340
  %1346 = vst.msk [vmem:[%s1140 + $0x8] sm:$0xff] %vm474, %v1342
  %1349 = vrot.lane.b32.xlu0 %v1335, 96
  %v1350 = vpop.permute.xlu0 %1349
  %1351 = vrot.lane.b32.xlu0 %v1336, 96
  %v1352 = vpop.permute.xlu0 %1351
  %1355 = vst.msk [vmem:[%s1129] sm:$0xff] %vm486, %v1350
  %1356 = vst.msk [vmem:[%s1129 + $0x8] sm:$0xff] %vm486, %v1352
  %v1357 = vsel %vm474, %v1340, %v1350
  %v1358 = vsel %vm474, %v1342, %v1352
  %v1359 = vpack.c.bf16 %v1358, %v1357
  %v1361 = vsel %vm273, %v1359, 0
  %1363 = vmatpush.bf16.msra.mxu0 0
  %1364 = vmatpush.bf16.msra.mxu0 0
  %1365 = vmatpush.bf16.msra.mxu0 0
  %1366 = vmatpush.bf16.msra.mxu0 0
  %1367 = vmatpush.bf16.msra.mxu0 %v263
  %1368 = vmatpush.bf16.msra.mxu0 %v261
  %1369 = vmatpush.bf16.msra.mxu0 %v259
  %1370 = vmatpush.bf16.msra.mxu0 %v257
  %1371 = vmatmul.bf16.gmra.mxu0 %v1361
  %v1372 = vpop.f32.mrf.mxu0
  %v1373 = vadd.f32 0.0, %v1372
  %v1374 = vpop.f32.mrf.mxu0
  %v1375 = vadd.f32 0.0, %v1374
  %1376 = vdwg.mxu0
  %1377 = vmatpush.bf16.msra.mxu0 0
  %1378 = vmatpush.bf16.msra.mxu0 0
  %1379 = vmatpush.bf16.msra.mxu0 0
  %1380 = vmatpush.bf16.msra.mxu0 0
  %1381 = vmatpush.bf16.msra.mxu0 %v264
  %1382 = vmatpush.bf16.msra.mxu0 %v262
  %1383 = vmatpush.bf16.msra.mxu0 %v260
  %1384 = vmatpush.bf16.msra.mxu0 %v258
  %1385 = vmatmul.bf16.gmra.mxu0 %v1361
  %v1386 = vpop.f32.mrf.mxu0
  %v1387 = vadd.f32 0.0, %v1386
  %v1388 = vpop.f32.mrf.mxu0
  %v1389 = vadd.f32 0.0, %v1388
  %1390 = vdwg.mxu0
  %v1391 = vld [vmem:[%s748] sm:$0xf]
  %v1392 = vld [vmem:[%s748 + $0x8] sm:$0xf]
  %v1393 = vunpack.c.l.bf16 %v1391
  %v1394 = vunpack.c.l.bf16 %v1392
  %v1395 = vadd.f32 %v1393, %v1373
  %v1396 = vadd.f32 %v1394, %v1375
  %v1397 = vld [vmem:[%s741 + $0x4] sm:$0xf]
  %v1398 = vld [vmem:[%s741 + $0xc] sm:$0xf]
  %v1399 = vunpack.c.l.bf16 %v1397
  %v1400 = vunpack.c.l.bf16 %v1398
  %v1401 = vadd.f32 %v1399, %v1387
  %v1402 = vadd.f32 %v1400, %v1389
  %v1403 = vxor.u32 %v1395, 2147483648
  %v1404 = vxor.u32 %v1396, 2147483648
  %v1405 = vmul.f32 %v1403, 1.442695
  %v1406 = vpow.pop %v1405
  %v1407 = vmul.f32 %v1404, 1.442695
  %v1408 = vpow.pop %v1407
  %v1409 = vadd.f32 %v1406, 1.0
  %v1410 = vadd.f32 %v1408, 1.0
  %v1411 = vrcp.pop %v1409
  %v1412 = vmul.f32 %v1409, %v1411
  %v1413 = vsub.f32 1.0, %v1412
  %v1414 = vmul.f32 %v1411, %v1413
  %v1415 = vadd.f32 %v1411, %v1414
  %vm1416 = vweird.f32 %v1409
  %vm1417 = vweird.f32 %v1411
  %vm1418 = vmor %vm1416, %vm1417
  %v1419 = vsel %vm1418, %v1411, %v1415
  %v1420 = vand.u32 2147483647, %v1409
  %vm1421 = vcmp.eq.f32.partialorder %v1420, 8.507059e+37
  %v1422 = vand.u32 %v1409, 2147483648
  %v1423 = vor.u32 1.1754944e-38, %v1422
  %v1424 = vsel %vm1421, %v1423, %v1419
  %v1425 = vmul.f32 1.0, %v1424
  %v1426 = vrcp.pop %v1410
  %v1427 = vmul.f32 %v1410, %v1426
  %v1428 = vsub.f32 1.0, %v1427
  %v1429 = vmul.f32 %v1426, %v1428
  %v1430 = vadd.f32 %v1426, %v1429
  %vm1431 = vweird.f32 %v1410
  %vm1432 = vweird.f32 %v1426
  %vm1433 = vmor %vm1431, %vm1432
  %v1434 = vsel %vm1433, %v1426, %v1430
  %v1435 = vand.u32 2147483647, %v1410
  %vm1436 = vcmp.eq.f32.partialorder %v1435, 8.507059e+37
  %v1437 = vand.u32 %v1410, 2147483648
  %v1438 = vor.u32 1.1754944e-38, %v1437
  %v1439 = vsel %vm1436, %v1438, %v1434
  %v1440 = vmul.f32 1.0, %v1439
  %v1441 = vtanh.pop %v1395
  %v1442 = vtanh.pop %v1396
  %v1443 = vmul.f32 %v1425, %v1249
  %v1444 = vmul.f32 %v1440, %v1250
  %1447 = vrot.lane.b32.xlu0 %v1441, 32
  %v1448 = vpop.permute.xlu0 %1447
  %1449 = vrot.lane.b32.xlu0 %v1442, 32
  %v1450 = vpop.permute.xlu0 %1449
  %v1453 = vmul.f32 %v1425, %v1448
  %v1454 = vmul.f32 %v1440, %v1450
  %1457 = vrot.lane.b32.xlu0 %v1453, 32
  %v1458 = vpop.permute.xlu0 %1457
  %1459 = vrot.lane.b32.xlu0 %v1454, 32
  %v1460 = vpop.permute.xlu0 %1459
  %v1463 = vadd.f32 %v1443, %v1458
  %v1464 = vadd.f32 %v1444, %v1460
  %v1465 = vtanh.pop %v1463
  %v1466 = vtanh.pop %v1464
  %1469 = vrot.lane.b32.xlu0 %v1465, 32
  %v1470 = vpop.permute.xlu0 %1469
  %1471 = vrot.lane.b32.xlu0 %v1466, 32
  %v1472 = vpop.permute.xlu0 %1471
  %v1475 = vmul.f32 %v1425, %v1470
  %v1476 = vmul.f32 %v1440, %v1472
  %v1477 = vxor.u32 %v1401, 2147483648
  %v1478 = vxor.u32 %v1402, 2147483648
  %v1479 = vmul.f32 %v1477, 1.442695
  %v1480 = vpow.pop %v1479
  %v1481 = vmul.f32 %v1478, 1.442695
  %v1482 = vpow.pop %v1481
  %v1483 = vadd.f32 %v1480, 1.0
  %v1484 = vadd.f32 %v1482, 1.0
  %v1485 = vrcp.pop %v1483
  %v1486 = vmul.f32 %v1483, %v1485
  %v1487 = vsub.f32 1.0, %v1486
  %v1488 = vmul.f32 %v1485, %v1487
  %v1489 = vadd.f32 %v1485, %v1488
  %vm1490 = vweird.f32 %v1483
  %vm1491 = vweird.f32 %v1485
  %vm1492 = vmor %vm1490, %vm1491
  %v1493 = vsel %vm1492, %v1485, %v1489
  %v1494 = vand.u32 2147483647, %v1483
  %vm1495 = vcmp.eq.f32.partialorder %v1494, 8.507059e+37
  %v1496 = vand.u32 %v1483, 2147483648
  %v1497 = vor.u32 1.1754944e-38, %v1496
  %v1498 = vsel %vm1495, %v1497, %v1493
  %v1499 = vmul.f32 1.0, %v1498
  %v1500 = vrcp.pop %v1484
  %v1501 = vmul.f32 %v1484, %v1500
  %v1502 = vsub.f32 1.0, %v1501
  %v1503 = vmul.f32 %v1500, %v1502
  %v1504 = vadd.f32 %v1500, %v1503
  %vm1505 = vweird.f32 %v1484
  %vm1506 = vweird.f32 %v1500
  %vm1507 = vmor %vm1505, %vm1506
  %v1508 = vsel %vm1507, %v1500, %v1504
  %v1509 = vand.u32 2147483647, %v1484
  %vm1510 = vcmp.eq.f32.partialorder %v1509, 8.507059e+37
  %v1511 = vand.u32 %v1484, 2147483648
  %v1512 = vor.u32 1.1754944e-38, %v1511
  %v1513 = vsel %vm1510, %v1512, %v1508
  %v1514 = vmul.f32 1.0, %v1513
  %v1515 = vtanh.pop %v1401
  %v1516 = vtanh.pop %v1402
  %v1517 = vmul.f32 %v1499, %v1323
  %v1518 = vmul.f32 %v1514, %v1324
  %1521 = vrot.lane.b32.xlu0 %v1515, 32
  %v1522 = vpop.permute.xlu0 %1521
  %1523 = vrot.lane.b32.xlu0 %v1516, 32
  %v1524 = vpop.permute.xlu0 %1523
  %v1527 = vmul.f32 %v1499, %v1522
  %v1528 = vmul.f32 %v1514, %v1524
  %1531 = vrot.lane.b32.xlu0 %v1527, 32
  %v1532 = vpop.permute.xlu0 %1531
  %1533 = vrot.lane.b32.xlu0 %v1528, 32
  %v1534 = vpop.permute.xlu0 %1533
  %v1537 = vadd.f32 %v1517, %v1532
  %v1538 = vadd.f32 %v1518, %v1534
  %v1539 = vtanh.pop %v1537
  %v1540 = vtanh.pop %v1538
  %1543 = vrot.lane.b32.xlu0 %v1539, 32
  %v1544 = vpop.permute.xlu0 %1543
  %1545 = vrot.lane.b32.xlu0 %v1540, 32
  %v1546 = vpop.permute.xlu0 %1545
  %v1549 = vmul.f32 %v1499, %v1544
  %v1550 = vmul.f32 %v1514, %v1546
  %1553 = vrot.lane.b32.xlu0 %v1475, 64
  %v1554 = vpop.permute.xlu0 %1553
  %1555 = vrot.lane.b32.xlu0 %v1476, 64
  %v1556 = vpop.permute.xlu0 %1555
  %1559 = vst.msk [vmem:[%s922] sm:$0xff] %vm474, %v1554
  %1560 = vst.msk [vmem:[%s922 + $0x8] sm:$0xff] %vm474, %v1556
  %1563 = vrot.lane.b32.xlu0 %v1549, 96
  %v1564 = vpop.permute.xlu0 %1563
  %1565 = vrot.lane.b32.xlu0 %v1550, 96
  %v1566 = vpop.permute.xlu0 %1565
  %1569 = vst.msk [vmem:[%s911] sm:$0xff] %vm486, %v1564
  %1570 = vst.msk [vmem:[%s911 + $0x8] sm:$0xff] %vm486, %v1566
  %v1571 = vsel %vm474, %v1554, %v1564
  %v1572 = vsel %vm474, %v1556, %v1566
  %v1573 = vpack.c.bf16 %v1572, %v1571
  %v1575 = vsel %vm273, %v1573, 0
  %1577 = vmatpush.bf16.msra.mxu0 0
  %1578 = vmatpush.bf16.msra.mxu0 0
  %1579 = vmatpush.bf16.msra.mxu0 0
  %1580 = vmatpush.bf16.msra.mxu0 0
  %1581 = vmatpush.bf16.msra.mxu0 %v263
  %1582 = vmatpush.bf16.msra.mxu0 %v261
  %1583 = vmatpush.bf16.msra.mxu0 %v259
  %1584 = vmatpush.bf16.msra.mxu0 %v257
  %1585 = vmatmul.bf16.gmra.mxu0 %v1575
  %v1586 = vpop.f32.mrf.mxu0
  %v1587 = vadd.f32 0.0, %v1586
  %v1588 = vpop.f32.mrf.mxu0
  %v1589 = vadd.f32 0.0, %v1588
  %1590 = vdwg.mxu0
  %1591 = vmatpush.bf16.msra.mxu0 0
  %1592 = vmatpush.bf16.msra.mxu0 0
  %1593 = vmatpush.bf16.msra.mxu0 0
  %1594 = vmatpush.bf16.msra.mxu0 0
  %1595 = vmatpush.bf16.msra.mxu0 %v264
  %1596 = vmatpush.bf16.msra.mxu0 %v262
  %1597 = vmatpush.bf16.msra.mxu0 %v260
  %1598 = vmatpush.bf16.msra.mxu0 %v258
  %1599 = vmatmul.bf16.gmra.mxu0 %v1575
  %v1600 = vpop.f32.mrf.mxu0
  %v1601 = vadd.f32 0.0, %v1600
  %v1602 = vpop.f32.mrf.mxu0
  %v1603 = vadd.f32 0.0, %v1602
  %1604 = vdwg.mxu0
  %v1605 = vld [vmem:[%s530] sm:$0xf]
  %v1606 = vld [vmem:[%s530 + $0x8] sm:$0xf]
  %v1607 = vunpack.c.l.bf16 %v1605
  %v1608 = vunpack.c.l.bf16 %v1606
  %v1609 = vadd.f32 %v1607, %v1587
  %v1610 = vadd.f32 %v1608, %v1589
  %v1611 = vld [vmem:[%s523 + $0x4] sm:$0xf]
  %v1612 = vld [vmem:[%s523 + $0xc] sm:$0xf]
  %v1613 = vunpack.c.l.bf16 %v1611
  %v1614 = vunpack.c.l.bf16 %v1612
  %v1615 = vadd.f32 %v1613, %v1601
  %v1616 = vadd.f32 %v1614, %v1603
  %v1617 = vxor.u32 %v1609, 2147483648
  %v1618 = vxor.u32 %v1610, 2147483648
  %v1619 = vmul.f32 %v1617, 1.442695
  %v1620 = vpow.pop %v1619
  %v1621 = vmul.f32 %v1618, 1.442695
  %v1622 = vpow.pop %v1621
  %v1623 = vadd.f32 %v1620, 1.0
  %v1624 = vadd.f32 %v1622, 1.0
  %v1625 = vrcp.pop %v1623
  %v1626 = vmul.f32 %v1623, %v1625
  %v1627 = vsub.f32 1.0, %v1626
  %v1628 = vmul.f32 %v1625, %v1627
  %v1629 = vadd.f32 %v1625, %v1628
  %vm1630 = vweird.f32 %v1623
  %vm1631 = vweird.f32 %v1625
  %vm1632 = vmor %vm1630, %vm1631
  %v1633 = vsel %vm1632, %v1625, %v1629
  %v1634 = vand.u32 2147483647, %v1623
  %vm1635 = vcmp.eq.f32.partialorder %v1634, 8.507059e+37
  %v1636 = vand.u32 %v1623, 2147483648
  %v1637 = vor.u32 1.1754944e-38, %v1636
  %v1638 = vsel %vm1635, %v1637, %v1633
  %v1639 = vmul.f32 1.0, %v1638
  %v1640 = vrcp.pop %v1624
  %v1641 = vmul.f32 %v1624, %v1640
  %v1642 = vsub.f32 1.0, %v1641
  %v1643 = vmul.f32 %v1640, %v1642
  %v1644 = vadd.f32 %v1640, %v1643
  %vm1645 = vweird.f32 %v1624
  %vm1646 = vweird.f32 %v1640
  %vm1647 = vmor %vm1645, %vm1646
  %v1648 = vsel %vm1647, %v1640, %v1644
  %v1649 = vand.u32 2147483647, %v1624
  %vm1650 = vcmp.eq.f32.partialorder %v1649, 8.507059e+37
  %v1651 = vand.u32 %v1624, 2147483648
  %v1652 = vor.u32 1.1754944e-38, %v1651
  %v1653 = vsel %vm1650, %v1652, %v1648
  %v1654 = vmul.f32 1.0, %v1653
  %v1655 = vtanh.pop %v1609
  %v1656 = vtanh.pop %v1610
  %v1657 = vmul.f32 %v1639, %v1463
  %v1658 = vmul.f32 %v1654, %v1464
  %1661 = vrot.lane.b32.xlu0 %v1655, 32
  %v1662 = vpop.permute.xlu0 %1661
  %1663 = vrot.lane.b32.xlu0 %v1656, 32
  %v1664 = vpop.permute.xlu0 %1663
  %v1667 = vmul.f32 %v1639, %v1662
  %v1668 = vmul.f32 %v1654, %v1664
  %1671 = vrot.lane.b32.xlu0 %v1667, 32
  %v1672 = vpop.permute.xlu0 %1671
  %1673 = vrot.lane.b32.xlu0 %v1668, 32
  %v1674 = vpop.permute.xlu0 %1673
  %v1677 = vadd.f32 %v1657, %v1672
  %v1678 = vadd.f32 %v1658, %v1674
  %v1679 = vtanh.pop %v1677
  %v1680 = vtanh.pop %v1678
  %1683 = vrot.lane.b32.xlu0 %v1679, 32
  %v1684 = vpop.permute.xlu0 %1683
  %1685 = vrot.lane.b32.xlu0 %v1680, 32
  %v1686 = vpop.permute.xlu0 %1685
  %v1689 = vmul.f32 %v1639, %v1684
  %v1690 = vmul.f32 %v1654, %v1686
  %v1691 = vxor.u32 %v1615, 2147483648
  %v1692 = vxor.u32 %v1616, 2147483648
  %v1693 = vmul.f32 %v1691, 1.442695
  %v1694 = vpow.pop %v1693
  %v1695 = vmul.f32 %v1692, 1.442695
  %v1696 = vpow.pop %v1695
  %v1697 = vadd.f32 %v1694, 1.0
  %v1698 = vadd.f32 %v1696, 1.0
  %v1699 = vrcp.pop %v1697
  %v1700 = vmul.f32 %v1697, %v1699
  %v1701 = vsub.f32 1.0, %v1700
  %v1702 = vmul.f32 %v1699, %v1701
  %v1703 = vadd.f32 %v1699, %v1702
  %vm1704 = vweird.f32 %v1697
  %vm1705 = vweird.f32 %v1699
  %vm1706 = vmor %vm1704, %vm1705
  %v1707 = vsel %vm1706, %v1699, %v1703
  %v1708 = vand.u32 2147483647, %v1697
  %vm1709 = vcmp.eq.f32.partialorder %v1708, 8.507059e+37
  %v1710 = vand.u32 %v1697, 2147483648
  %v1711 = vor.u32 1.1754944e-38, %v1710
  %v1712 = vsel %vm1709, %v1711, %v1707
  %v1713 = vmul.f32 1.0, %v1712
  %v1714 = vrcp.pop %v1698
  %v1715 = vmul.f32 %v1698, %v1714
  %v1716 = vsub.f32 1.0, %v1715
  %v1717 = vmul.f32 %v1714, %v1716
  %v1718 = vadd.f32 %v1714, %v1717
  %vm1719 = vweird.f32 %v1698
  %vm1720 = vweird.f32 %v1714
  %vm1721 = vmor %vm1719, %vm1720
  %v1722 = vsel %vm1721, %v1714, %v1718
  %v1723 = vand.u32 2147483647, %v1698
  %vm1724 = vcmp.eq.f32.partialorder %v1723, 8.507059e+37
  %v1725 = vand.u32 %v1698, 2147483648
  %v1726 = vor.u32 1.1754944e-38, %v1725
  %v1727 = vsel %vm1724, %v1726, %v1722
  %v1728 = vmul.f32 1.0, %v1727
  %v1729 = vtanh.pop %v1615
  %v1730 = vtanh.pop %v1616
  %v1731 = vmul.f32 %v1713, %v1537
  %v1732 = vmul.f32 %v1728, %v1538
  %1735 = vrot.lane.b32.xlu0 %v1729, 32
  %v1736 = vpop.permute.xlu0 %1735
  %1737 = vrot.lane.b32.xlu0 %v1730, 32
  %v1738 = vpop.permute.xlu0 %1737
  %v1741 = vmul.f32 %v1713, %v1736
  %v1742 = vmul.f32 %v1728, %v1738
  %1745 = vrot.lane.b32.xlu0 %v1741, 32
  %v1746 = vpop.permute.xlu0 %1745
  %1747 = vrot.lane.b32.xlu0 %v1742, 32
  %v1748 = vpop.permute.xlu0 %1747
  %v1751 = vadd.f32 %v1731, %v1746
  %v1752 = vadd.f32 %v1732, %v1748
  %v1753 = vtanh.pop %v1751
  %v1754 = vtanh.pop %v1752
  %1757 = vrot.lane.b32.xlu0 %v1753, 32
  %v1758 = vpop.permute.xlu0 %1757
  %1759 = vrot.lane.b32.xlu0 %v1754, 32
  %v1760 = vpop.permute.xlu0 %1759
  %v1763 = vmul.f32 %v1713, %v1758
  %v1764 = vmul.f32 %v1728, %v1760
  %1767 = vrot.lane.b32.xlu0 %v1689, 64
  %v1768 = vpop.permute.xlu0 %1767
  %1769 = vrot.lane.b32.xlu0 %v1690, 64
  %v1770 = vpop.permute.xlu0 %1769
  %1773 = vst.msk [vmem:[%s704] sm:$0xff] %vm474, %v1768
  %1774 = vst.msk [vmem:[%s704 + $0x8] sm:$0xff] %vm474, %v1770
  %1777 = vrot.lane.b32.xlu0 %v1763, 96
  %v1778 = vpop.permute.xlu0 %1777
  %1779 = vrot.lane.b32.xlu0 %v1764, 96
  %v1780 = vpop.permute.xlu0 %1779
  %1783 = vst.msk [vmem:[%s693] sm:$0xff] %vm486, %v1778
  %1784 = vst.msk [vmem:[%s693 + $0x8] sm:$0xff] %vm486, %v1780
  %v1785 = vsel %vm474, %v1768, %v1778
  %v1786 = vsel %vm474, %v1770, %v1780
  %v1787 = vpack.c.bf16 %v1786, %v1785
  %v1789 = vsel %vm273, %v1787, 0
  %1791 = vmatpush.bf16.msra.mxu0 0
  %1792 = vmatpush.bf16.msra.mxu0 0
  %1793 = vmatpush.bf16.msra.mxu0 0
  %1794 = vmatpush.bf16.msra.mxu0 0
  %1795 = vmatpush.bf16.msra.mxu0 %v263
  %1796 = vmatpush.bf16.msra.mxu0 %v261
  %1797 = vmatpush.bf16.msra.mxu0 %v259
  %1798 = vmatpush.bf16.msra.mxu0 %v257
  %1799 = vmatmul.bf16.gmra.mxu0 %v1789
  %v1800 = vpop.f32.mrf.mxu0
  %v1801 = vadd.f32 0.0, %v1800
  %v1802 = vpop.f32.mrf.mxu0
  %v1803 = vadd.f32 0.0, %v1802
  %1804 = vdwg.mxu0
  %1805 = vmatpush.bf16.msra.mxu0 0
  %1806 = vmatpush.bf16.msra.mxu0 0
  %1807 = vmatpush.bf16.msra.mxu0 0
  %1808 = vmatpush.bf16.msra.mxu0 0
  %1809 = vmatpush.bf16.msra.mxu0 %v264
  %1810 = vmatpush.bf16.msra.mxu0 %v262
  %1811 = vmatpush.bf16.msra.mxu0 %v260
  %1812 = vmatpush.bf16.msra.mxu0 %v258
  %1813 = vmatmul.bf16.gmra.mxu0 %v1789
  %v1814 = vpop.f32.mrf.mxu0
  %v1815 = vadd.f32 0.0, %v1814
  %v1816 = vpop.f32.mrf.mxu0
  %v1817 = vadd.f32 0.0, %v1816
  %1818 = vdwg.mxu0
  %v1819 = vld [vmem:[%s311] sm:$0xf]
  %v1820 = vld [vmem:[%s311 + $0x8] sm:$0xf]
  %v1821 = vunpack.c.l.bf16 %v1819
  %v1822 = vunpack.c.l.bf16 %v1820
  %v1823 = vadd.f32 %v1821, %v1801
  %v1824 = vadd.f32 %v1822, %v1803
  %v1825 = vld [vmem:[#allocation2 + $0x4] sm:$0xf]
  %v1826 = vld [vmem:[#allocation2 + $0xc] sm:$0xf]
  %v1827 = vunpack.c.l.bf16 %v1825
  %v1828 = vunpack.c.l.bf16 %v1826
  %v1829 = vadd.f32 %v1827, %v1815
  %v1830 = vadd.f32 %v1828, %v1817
  %v1831 = vxor.u32 %v1823, 2147483648
  %v1832 = vxor.u32 %v1824, 2147483648
  %v1833 = vmul.f32 %v1831, 1.442695
  %v1834 = vpow.pop %v1833
  %v1835 = vmul.f32 %v1832, 1.442695
  %v1836 = vpow.pop %v1835
  %v1837 = vadd.f32 %v1834, 1.0
  %v1838 = vadd.f32 %v1836, 1.0
  %v1839 = vrcp.pop %v1837
  %v1840 = vmul.f32 %v1837, %v1839
  %v1841 = vsub.f32 1.0, %v1840
  %v1842 = vmul.f32 %v1839, %v1841
  %v1843 = vadd.f32 %v1839, %v1842
  %vm1844 = vweird.f32 %v1837
  %vm1845 = vweird.f32 %v1839
  %vm1846 = vmor %vm1844, %vm1845
  %v1847 = vsel %vm1846, %v1839, %v1843
  %v1848 = vand.u32 2147483647, %v1837
  %vm1849 = vcmp.eq.f32.partialorder %v1848, 8.507059e+37
  %v1850 = vand.u32 %v1837, 2147483648
  %v1851 = vor.u32 1.1754944e-38, %v1850
  %v1852 = vsel %vm1849, %v1851, %v1847
  %v1853 = vmul.f32 1.0, %v1852
  %v1854 = vrcp.pop %v1838
  %v1855 = vmul.f32 %v1838, %v1854
  %v1856 = vsub.f32 1.0, %v1855
  %v1857 = vmul.f32 %v1854, %v1856
  %v1858 = vadd.f32 %v1854, %v1857
  %vm1859 = vweird.f32 %v1838
  %vm1860 = vweird.f32 %v1854
  %vm1861 = vmor %vm1859, %vm1860
  %v1862 = vsel %vm1861, %v1854, %v1858
  %v1863 = vand.u32 2147483647, %v1838
  %vm1864 = vcmp.eq.f32.partialorder %v1863, 8.507059e+37
  %v1865 = vand.u32 %v1838, 2147483648
  %v1866 = vor.u32 1.1754944e-38, %v1865
  %v1867 = vsel %vm1864, %v1866, %v1862
  %v1868 = vmul.f32 1.0, %v1867
  %v1869 = vtanh.pop %v1823
  %v1870 = vtanh.pop %v1824
  %v1871 = vmul.f32 %v1853, %v1677
  %v1872 = vmul.f32 %v1868, %v1678
  %1875 = vrot.lane.b32.xlu0 %v1869, 32
  %v1876 = vpop.permute.xlu0 %1875
  %1877 = vrot.lane.b32.xlu0 %v1870, 32
  %v1878 = vpop.permute.xlu0 %1877
  %v1881 = vmul.f32 %v1853, %v1876
  %v1882 = vmul.f32 %v1868, %v1878
  %1885 = vrot.lane.b32.xlu0 %v1881, 32
  %v1886 = vpop.permute.xlu0 %1885
  %1887 = vrot.lane.b32.xlu0 %v1882, 32
  %v1888 = vpop.permute.xlu0 %1887
  %v1891 = vadd.f32 %v1871, %v1886
  %v1892 = vadd.f32 %v1872, %v1888
  %v1893 = vtanh.pop %v1891
  %v1894 = vtanh.pop %v1892
  %1897 = vrot.lane.b32.xlu0 %v1893, 32
  %v1898 = vpop.permute.xlu0 %1897
  %1899 = vrot.lane.b32.xlu0 %v1894, 32
  %v1900 = vpop.permute.xlu0 %1899
  %v1903 = vmul.f32 %v1853, %v1898
  %v1904 = vmul.f32 %v1868, %v1900
  %v1905 = vxor.u32 %v1829, 2147483648
  %v1906 = vxor.u32 %v1830, 2147483648
  %v1907 = vmul.f32 %v1905, 1.442695
  %v1908 = vpow.pop %v1907
  %v1909 = vmul.f32 %v1906, 1.442695
  %v1910 = vpow.pop %v1909
  %v1911 = vadd.f32 %v1908, 1.0
  %v1912 = vadd.f32 %v1910, 1.0
  %v1913 = vrcp.pop %v1911
  %v1914 = vmul.f32 %v1911, %v1913
  %v1915 = vsub.f32 1.0, %v1914
  %v1916 = vmul.f32 %v1913, %v1915
  %v1917 = vadd.f32 %v1913, %v1916
  %vm1918 = vweird.f32 %v1911
  %vm1919 = vweird.f32 %v1913
  %vm1920 = vmor %vm1918, %vm1919
  %v1921 = vsel %vm1920, %v1913, %v1917
  %v1922 = vand.u32 2147483647, %v1911
  %vm1923 = vcmp.eq.f32.partialorder %v1922, 8.507059e+37
  %v1924 = vand.u32 %v1911, 2147483648
  %v1925 = vor.u32 1.1754944e-38, %v1924
  %v1926 = vsel %vm1923, %v1925, %v1921
  %v1927 = vmul.f32 1.0, %v1926
  %v1928 = vrcp.pop %v1912
  %v1929 = vmul.f32 %v1912, %v1928
  %v1930 = vsub.f32 1.0, %v1929
  %v1931 = vmul.f32 %v1928, %v1930
  %v1932 = vadd.f32 %v1928, %v1931
  %vm1933 = vweird.f32 %v1912
  %vm1934 = vweird.f32 %v1928
  %vm1935 = vmor %vm1933, %vm1934
  %v1936 = vsel %vm1935, %v1928, %v1932
  %v1937 = vand.u32 2147483647, %v1912
  %vm1938 = vcmp.eq.f32.partialorder %v1937, 8.507059e+37
  %v1939 = vand.u32 %v1912, 2147483648
  %v1940 = vor.u32 1.1754944e-38, %v1939
  %v1941 = vsel %vm1938, %v1940, %v1936
  %v1942 = vmul.f32 1.0, %v1941
  %v1943 = vtanh.pop %v1829
  %v1944 = vtanh.pop %v1830
  %v1945 = vmul.f32 %v1927, %v1751
  %v1946 = vmul.f32 %v1942, %v1752
  %1949 = vrot.lane.b32.xlu0 %v1943, 32
  %v1950 = vpop.permute.xlu0 %1949
  %1951 = vrot.lane.b32.xlu0 %v1944, 32
  %v1952 = vpop.permute.xlu0 %1951
  %v1955 = vmul.f32 %v1927, %v1950
  %v1956 = vmul.f32 %v1942, %v1952
  %1959 = vrot.lane.b32.xlu0 %v1955, 32
  %v1960 = vpop.permute.xlu0 %1959
  %1961 = vrot.lane.b32.xlu0 %v1956, 32
  %v1962 = vpop.permute.xlu0 %1961
  %v1965 = vadd.f32 %v1945, %v1960
  %v1966 = vadd.f32 %v1946, %v1962
  %v1967 = vtanh.pop %v1965
  %v1968 = vtanh.pop %v1966
  %1971 = vrot.lane.b32.xlu0 %v1967, 32
  %v1972 = vpop.permute.xlu0 %1971
  %1973 = vrot.lane.b32.xlu0 %v1968, 32
  %v1974 = vpop.permute.xlu0 %1973
  %v1977 = vmul.f32 %v1927, %v1972
  %v1978 = vmul.f32 %v1942, %v1974
  %1981 = vrot.lane.b32.xlu0 %v1903, 64
  %v1982 = vpop.permute.xlu0 %1981
  %1983 = vrot.lane.b32.xlu0 %v1904, 64
  %v1984 = vpop.permute.xlu0 %1983
  %1987 = vst.msk [vmem:[%s485] sm:$0xff] %vm474, %v1982
  %1988 = vst.msk [vmem:[%s485 + $0x8] sm:$0xff] %vm474, %v1984
  %1991 = vrot.lane.b32.xlu0 %v1977, 96
  %v1992 = vpop.permute.xlu0 %1991
  %1993 = vrot.lane.b32.xlu0 %v1978, 96
  %v1994 = vpop.permute.xlu0 %1993
  %1997 = vst.msk [vmem:[#allocation3] sm:$0xff] %vm486, %v1992
  %1998 = vst.msk [vmem:[#allocation3 + $0x8] sm:$0xff] %vm486, %v1994
  %v1999 = vld [vmem:[#allocation3] sm:$0xff]
  %v2000 = vld [vmem:[#allocation3 + $0x8] sm:$0xff]
  %v2001 = vld [vmem:[#allocation3 + $0x10] sm:$0xff]
  %v2002 = vld [vmem:[#allocation3 + $0x18] sm:$0xff]
  %v2003 = vld [vmem:[#allocation3 + $0x20] sm:$0xff]
  %v2004 = vld [vmem:[#allocation3 + $0x28] sm:$0xff]
  %v2005 = vld [vmem:[#allocation3 + $0x30] sm:$0xff]
  %v2006 = vld [vmem:[#allocation3 + $0x38] sm:$0xff]
  %v2007 = vld [vmem:[#allocation3 + $0x40] sm:$0xff]
  %v2008 = vld [vmem:[#allocation3 + $0x48] sm:$0xff]
  %v2009 = vld [vmem:[#allocation3 + $0x50] sm:$0xff]
  %v2010 = vld [vmem:[#allocation3 + $0x58] sm:$0xff]
  %v2011 = vld [vmem:[#allocation3 + $0x60] sm:$0xff]
  %v2012 = vld [vmem:[#allocation3 + $0x68] sm:$0xff]
  %v2013 = vld [vmem:[#allocation3 + $0x70] sm:$0xff]
  %v2014 = vld [vmem:[#allocation3 + $0x78] sm:$0xff]
  %v2015 = vpack.c.bf16 %v2000, %v1999
  %v2016 = vpack.c.bf16 %v2002, %v2001
  %v2017 = vpack.c.bf16 %v2004, %v2003
  %v2018 = vpack.c.bf16 %v2006, %v2005
  %v2019 = vpack.c.bf16 %v2008, %v2007
  %v2020 = vpack.c.bf16 %v2010, %v2009
  %v2021 = vpack.c.bf16 %v2012, %v2011
  %v2022 = vpack.c.bf16 %v2014, %v2013
  %v2023 = vld [vmem:[%s4] sm:$0xf]
  %v2024 = vld [vmem:[%s4 + $0x4] sm:$0xf]
  %v2025 = vld [vmem:[%s4 + $0x8] sm:$0xf]
  %v2026 = vld [vmem:[%s4 + $0xc] sm:$0xf]
  %v2027 = vld [vmem:[%s4 + $0x10] sm:$0xf]
  %v2028 = vld [vmem:[%s4 + $0x14] sm:$0xf]
  %v2029 = vld [vmem:[%s4 + $0x18] sm:$0xf]
  %v2030 = vld [vmem:[%s4 + $0x1c] sm:$0xf]
  %v2031 = vld [vmem:[%s5] sm:$0x1]
  %v2033 = vperm.slane %v2031, 0
  %v2043 = vunpack.c.l.b16 %v2023
  %v2044 = vunpack.c.l.b16 %v2024
  %v2045 = vunpack.c.l.b16 %v2025
  %v2046 = vunpack.c.l.b16 %v2026
  %v2047 = vunpack.c.l.b16 %v2027
  %v2048 = vunpack.c.l.b16 %v2028
  %v2049 = vunpack.c.l.b16 %v2029
  %v2050 = vunpack.c.l.b16 %v2030
  %v2051 = vpack.c.b16 %v2044, %v2043
  %v2052 = vpack.c.b16 %v2046, %v2045
  %v2053 = vpack.c.b16 %v2048, %v2047
  %v2054 = vpack.c.b16 %v2050, %v2049
  %v2060 = vsel %vm273, %v2015, 0
  %v2063 = vsel %vm273, %v2016, 0
  %v2066 = vsel %vm273, %v2017, 0
  %v2069 = vsel %vm273, %v2018, 0
  %v2072 = vsel %vm273, %v2019, 0
  %v2075 = vsel %vm273, %v2020, 0
  %v2078 = vsel %vm273, %v2021, 0
  %v2081 = vsel %vm273, %v2022, 0
  %2083 = vmatpush.bf16.msra.mxu0 0
  %2084 = vmatpush.bf16.msra.mxu0 0
  %2085 = vmatpush.bf16.msra.mxu0 0
  %2086 = vmatpush.bf16.msra.mxu0 0
  %2087 = vmatpush.bf16.msra.mxu0 %v2054
  %2088 = vmatpush.bf16.msra.mxu0 %v2053
  %2089 = vmatpush.bf16.msra.mxu0 %v2052
  %2090 = vmatpush.bf16.msra.mxu0 %v2051
  %2091 = vmatmul.bf16.gmra.mxu0 %v2060
  %v2092 = vpop.f32.mrf.mxu0
  %v2093 = vadd.f32 %v2033, %v2092
  %v2094 = vpop.f32.mrf.mxu0
  %v2095 = vadd.f32 %v2033, %v2094
  %2096 = vmatmul.bf16.gmra.mxu0 %v2063
  %v2097 = vpop.f32.mrf.mxu0
  %v2098 = vadd.f32 %v2033, %v2097
  %v2099 = vpop.f32.mrf.mxu0
  %v2100 = vadd.f32 %v2033, %v2099
  %2101 = vmatmul.bf16.gmra.mxu0 %v2066
  %v2102 = vpop.f32.mrf.mxu0
  %v2103 = vadd.f32 %v2033, %v2102
  %v2104 = vpop.f32.mrf.mxu0
  %v2105 = vadd.f32 %v2033, %v2104
  %2106 = vmatmul.bf16.gmra.mxu0 %v2069
  %v2107 = vpop.f32.mrf.mxu0
  %v2108 = vadd.f32 %v2033, %v2107
  %v2109 = vpop.f32.mrf.mxu0
  %v2110 = vadd.f32 %v2033, %v2109
  %2111 = vmatmul.bf16.gmra.mxu0 %v2072
  %v2112 = vpop.f32.mrf.mxu0
  %v2113 = vadd.f32 %v2033, %v2112
  %v2114 = vpop.f32.mrf.mxu0
  %v2115 = vadd.f32 %v2033, %v2114
  %2116 = vmatmul.bf16.gmra.mxu0 %v2075
  %v2117 = vpop.f32.mrf.mxu0
  %v2118 = vadd.f32 %v2033, %v2117
  %v2119 = vpop.f32.mrf.mxu0
  %v2120 = vadd.f32 %v2033, %v2119
  %2121 = vmatmul.bf16.gmra.mxu0 %v2078
  %v2122 = vpop.f32.mrf.mxu0
  %v2123 = vadd.f32 %v2033, %v2122
  %v2124 = vpop.f32.mrf.mxu0
  %v2125 = vadd.f32 %v2033, %v2124
  %2126 = vmatmul.bf16.gmra.mxu0 %v2081
  %v2127 = vpop.f32.mrf.mxu0
  %v2128 = vadd.f32 %v2033, %v2127
  %v2129 = vpop.f32.mrf.mxu0
  %v2130 = vadd.f32 %v2033, %v2129
  %2131 = vdwg.mxu0
  %2132 = vst.msk [vmem:[%s6] sm:$0xff] %vm69, %v2093
  %2133 = vst.msk [vmem:[%s6 + $0x8] sm:$0xff] %vm69, %v2095
  %2134 = vst.msk [vmem:[%s6 + $0x10] sm:$0xff] %vm69, %v2098
  %2135 = vst.msk [vmem:[%s6 + $0x18] sm:$0xff] %vm69, %v2100
  %2136 = vst.msk [vmem:[%s6 + $0x20] sm:$0xff] %vm69, %v2103
  %2137 = vst.msk [vmem:[%s6 + $0x28] sm:$0xff] %vm69, %v2105
  %2138 = vst.msk [vmem:[%s6 + $0x30] sm:$0xff] %vm69, %v2108
  %2139 = vst.msk [vmem:[%s6 + $0x38] sm:$0xff] %vm69, %v2110
  %2140 = vst.msk [vmem:[%s6 + $0x40] sm:$0xff] %vm69, %v2113
  %2141 = vst.msk [vmem:[%s6 + $0x48] sm:$0xff] %vm69, %v2115
  %2142 = vst.msk [vmem:[%s6 + $0x50] sm:$0xff] %vm69, %v2118
  %2143 = vst.msk [vmem:[%s6 + $0x58] sm:$0xff] %vm69, %v2120
  %2144 = vst.msk [vmem:[%s6 + $0x60] sm:$0xff] %vm69, %v2123
  %2145 = vst.msk [vmem:[%s6 + $0x68] sm:$0xff] %vm69, %v2125
  %2146 = vst.msk [vmem:[%s6 + $0x70] sm:$0xff] %vm69, %v2128
  %2147 = vst.msk [vmem:[%s6 + $0x78] sm:$0xff] %vm69, %v2130
  %v2148 = vsel %vm69, %v2093, 0.0
  %v2149 = vsel %vm69, %v2098, 0.0
  %v2150 = vadd.f32 %v2148, %v2149
  %v2151 = vsel %vm69, %v2103, 0.0
  %v2152 = vadd.f32 %v2150, %v2151
  %v2153 = vsel %vm69, %v2108, 0.0
  %v2154 = vadd.f32 %v2152, %v2153
  %v2155 = vsel %vm69, %v2113, 0.0
  %v2156 = vadd.f32 %v2154, %v2155
  %v2157 = vsel %vm69, %v2118, 0.0
  %v2158 = vadd.f32 %v2156, %v2157
  %v2159 = vsel %vm69, %v2123, 0.0
  %v2160 = vadd.f32 %v2158, %v2159
  %v2161 = vsel %vm69, %v2128, 0.0
  %v2162 = vadd.f32 %v2160, %v2161
  %v2163 = vsel %vm69, %v2095, 0.0
  %v2164 = vsel %vm69, %v2100, 0.0
  %v2165 = vadd.f32 %v2163, %v2164
  %v2166 = vsel %vm69, %v2105, 0.0
  %v2167 = vadd.f32 %v2165, %v2166
  %v2168 = vsel %vm69, %v2110, 0.0
  %v2169 = vadd.f32 %v2167, %v2168
  %v2170 = vsel %vm69, %v2115, 0.0
  %v2171 = vadd.f32 %v2169, %v2170
  %v2172 = vsel %vm69, %v2120, 0.0
  %v2173 = vadd.f32 %v2171, %v2172
  %v2174 = vsel %vm69, %v2125, 0.0
  %v2175 = vadd.f32 %v2173, %v2174
  %v2176 = vsel %vm69, %v2130, 0.0
  %v2177 = vadd.f32 %v2175, %v2176
  %v2178 = vsel %vm69, %v2162, 0.0
  %2179 = vadd.xlane.f32.xlu0 %v2178
  %v2180 = vpop.xlane.xlu0 %2179
  %v2181 = vsel %vm69, %v2177, 0.0
  %2182 = vadd.xlane.f32.xlu0 %v2181
  %v2183 = vpop.xlane.xlu0 %2182
  %vm2184 = vcmask 7168
  %2185 = vst.msk [vmem:[%s7] sm:$0xff] %vm2184, %v2180
  %2186 = vst.msk [vmem:[%s7 + $0x8] sm:$0xff] %vm2184, %v2183
  %v2187 = vmul.f32 %v2093, %v2093
  %v2188 = vmul.f32 %v2095, %v2095
  %v2189 = vmul.f32 %v2098, %v2098
  %v2190 = vmul.f32 %v2100, %v2100
  %v2191 = vmul.f32 %v2103, %v2103
  %v2192 = vmul.f32 %v2105, %v2105
  %v2193 = vmul.f32 %v2108, %v2108
  %v2194 = vmul.f32 %v2110, %v2110
  %v2195 = vmul.f32 %v2113, %v2113
  %v2196 = vmul.f32 %v2115, %v2115
  %v2197 = vmul.f32 %v2118, %v2118
  %v2198 = vmul.f32 %v2120, %v2120
  %v2199 = vmul.f32 %v2123, %v2123
  %v2200 = vmul.f32 %v2125, %v2125
  %v2201 = vmul.f32 %v2128, %v2128
  %v2202 = vmul.f32 %v2130, %v2130
  %v2203 = vsel %vm69, %v2187, 0.0
  %v2204 = vsel %vm69, %v2189, 0.0
  %v2205 = vadd.f32 %v2203, %v2204
  %v2206 = vsel %vm69, %v2191, 0.0
  %v2207 = vadd.f32 %v2205, %v2206
  %v2208 = vsel %vm69, %v2193, 0.0
  %v2209 = vadd.f32 %v2207, %v2208
  %v2210 = vsel %vm69, %v2195, 0.0
  %v2211 = vadd.f32 %v2209, %v2210
  %v2212 = vsel %vm69, %v2197, 0.0
  %v2213 = vadd.f32 %v2211, %v2212
  %v2214 = vsel %vm69, %v2199, 0.0
  %v2215 = vadd.f32 %v2213, %v2214
  %v2216 = vsel %vm69, %v2201, 0.0
  %v2217 = vadd.f32 %v2215, %v2216
  %v2218 = vsel %vm69, %v2188, 0.0
  %v2219 = vsel %vm69, %v2190, 0.0
  %v2220 = vadd.f32 %v2218, %v2219
  %v2221 = vsel %vm69, %v2192, 0.0
  %v2222 = vadd.f32 %v2220, %v2221
  %v2223 = vsel %vm69, %v2194, 0.0
  %v2224 = vadd.f32 %v2222, %v2223
  %v2225 = vsel %vm69, %v2196, 0.0
  %v2226 = vadd.f32 %v2224, %v2225
  %v2227 = vsel %vm69, %v2198, 0.0
  %v2228 = vadd.f32 %v2226, %v2227
  %v2229 = vsel %vm69, %v2200, 0.0
  %v2230 = vadd.f32 %v2228, %v2229
  %v2231 = vsel %vm69, %v2202, 0.0
  %v2232 = vadd.f32 %v2230, %v2231
  %v2233 = vsel %vm69, %v2217, 0.0
  %2234 = vadd.xlane.f32.xlu0 %v2233
  %v2235 = vpop.xlane.xlu0 %2234
  %v2236 = vsel %vm69, %v2232, 0.0
  %2237 = vadd.xlane.f32.xlu0 %v2236
  %v2238 = vpop.xlane.xlu0 %2237
  %2239 = vst.msk [vmem:[%s8] sm:$0xff] %vm2184, %v2235
  %2240 = vst.msk [vmem:[%s8 + $0x8] sm:$0xff] %vm2184, %v2238
  // Predicated region
  $region26: #{dprnn_block.4} parent=0 // pred_check
    _
  $region27: #{dprnn_block.4} parent=0 // pred_check_branch
    %2242 = sbr.rel (0) target = $region29
  $region28: #{dprnn_block.4} parent=0 // pred_region
    _
  $region29: #{dprnn_block.4} parent=0 // pred_fallthru
    _
  // Predicated region
  $region30: #{dprnn_block.4} parent=0 // pred_check
    _
  $region31: #{dprnn_block.4} parent=0 // pred_check_branch
    %2244 = sbr.rel (0) target = $region33
  $region32: #{dprnn_block.4} parent=0 // pred_region
    _
  $region33: #{dprnn_block.4} parent=0 // pred_fallthru
    _
  // Predicated region
  $region34: #{dprnn_block.4} parent=0 // pred_check
    _
  $region35: #{dprnn_block.4} parent=0 // pred_check_branch
    %2246 = sbr.rel (0) target = $region37
  $region36: #{dprnn_block.4} parent=0 // pred_region
    _
  $region37: #{dprnn_block.4} parent=0 // pred_fallthru
    _
  // Predicated region
  $region38: #{dprnn_block.4} parent=0 // pred_check
    _
  $region39: #{dprnn_block.4} parent=0 // pred_check_branch
    %2248 = sbr.rel (0) target = $region41
  $region40: #{dprnn_block.4} parent=0 // pred_region
    _
  $region41: #{dprnn_block.4} parent=0 // pred_fallthru
    _
  // Predicated region
  $region42: #{dprnn_block.4} parent=0 // pred_check
    _
  $region43: #{dprnn_block.4} parent=0 // pred_check_branch
    %2250 = sbr.rel (0) target = $region45
  $region44: #{dprnn_block.4} parent=0 // pred_region
    _
  $region45: #{dprnn_block.4} parent=0 // pred_fallthru
    _
  // Predicated region
  $region46: #{dprnn_block.4} parent=0 // pred_check
    _
  $region47: #{dprnn_block.4} parent=0 // pred_check_branch
    %2252 = sbr.rel (0) target = $region49
  $region48: #{dprnn_block.4} parent=0 // pred_region
    _
  $region49: #{dprnn_block.4} parent=0 // pred_fallthru
    _

</llo_original>
